<compile_context>
chip_gen: v7x
topology: tpu7x:2x2x1
jax: 0.10.0
libtpu: 0.0.40
codegen_flags: <defaults>
</compile_context>

<pallas_src>
import functools
import numpy as np
import jax
import jax.numpy as jnp
from jax.experimental import pallas as pl
from jax.experimental.pallas import tpu as pltpu

ATTN = 48                 # attention_size
LIN = 256                 # linear_size
NOISE_CH = 48             # noise_channle
NUM_STAGE = 2
N_TOKENS = 37
BLR_TANHLIMIT = 0.2
LRELU_SLOPE = 0.01        # nn.LeakyReLU default
BN_EPS = 1e-5             # nn.BatchNorm1d default eps

IN_DIM = N_TOKENS * 3     # 111  (x(48) + bone_lengths(15) + noise(48))
IN_PAD = 128
FLAT_DIM = N_TOKENS * ATTN  # 1776
FLAT_PAD = 1792             # 14 * 128
OUT_DIM = 9
OUT_PAD = 128


def _round_up(x, m):
    return ((x + m - 1) // m) * m


def _device_kind():
    try:
        return jax.devices()[0].device_kind.lower()
    except Exception:
        return ""


# --------------------------------------------------------------------------
# Fused kernel: encoder (folded block-diagonal matmul) + ReLU
#               + w1_BL (pos folded into shift) + 2 Linear stages
#               + w2_BL (+mask) + tanh*limit.
# Weights are VMEM-resident full blocks (~2 MiB bf16), block-invariant across
# the row grid.  `elem_dtype` controls the post-dot elementwise precision
# (bf16 on v6e/v7x VPUs, f32 on v5e and older).
# --------------------------------------------------------------------------
def _fused_kernel(x_ref, we_ref, encb_ref, w1_ref, sh_ref, ws_ref,
                  w2_ref, b2_ref, o_ref, *, elem_dtype):
    # encoder: ReLU(x @ W_enc_blockdiag + bias)   (x already bf16)
    z = jnp.dot(x_ref[...], we_ref[...],
                preferred_element_type=jnp.float32)              # (TM, 1792)
    z = jnp.maximum(z.astype(elem_dtype) + encb_ref[...], 0)

    # w1_BL + BN(folded) + (pos_emb @ w1 folded into shift) + LeakyReLU
    h = jnp.dot(z.astype(jnp.bfloat16), w1_ref[...],
                preferred_element_type=jnp.float32)              # (TM, 256)
    h = h.astype(elem_dtype) + sh_ref[0:1, :]
    h = jnp.where(h > 0, h, LRELU_SLOPE * h)

    # 2 Linear stages == 4 x (Linear + BN + LeakyReLU), statically unrolled
    for i in range(2 * NUM_STAGE):
        h = jnp.dot(h.astype(jnp.bfloat16), ws_ref[i],
                    preferred_element_type=jnp.float32)
        h = h.astype(elem_dtype) + sh_ref[i + 1:i + 2, :]
        h = jnp.where(h > 0, h, LRELU_SLOPE * h)

    # w2_BL (tmp_mask folded into weights/bias) + tanh * blr_tanhlimit (f32 EUP)
    z2 = jnp.dot(h.astype(jnp.bfloat16), w2_ref[...],
                 preferred_element_type=jnp.float32) + b2_ref[...]
    o_ref[...] = (jnp.tanh(z2) * BLR_TANHLIMIT).astype(o_ref.dtype)


def bl_trunk_call(blr_cat, p):
    """blr_cat: (N, 111) f32  ->  blr: (N, 9) f32 via one fused pallas_call."""
    n = blr_cat.shape[0]
    if n == 0:
        return jnp.zeros((0, OUT_DIM), jnp.float32)

    kind = _device_kind()
    old_gen = any(t in kind for t in ("v2", "v3", "v4", "v5"))
    elem_dtype = jnp.float32 if old_gen else jnp.bfloat16   # bf16 VPU on v6e/v7x
    dual_core = "v7" in kind                                 # 2 TCs per chip

    # Row tile: multiple of 16 sublanes (bf16 in/out).  Single-core chips use
    # big tiles to amortize per-grid-step overhead; on v7x keep grid_r >= 2.
    if dual_core and n > 128:
        tm = min(512, _round_up(pl.cdiv(n, 2), 16))
    else:
        tm = min(512 if dual_core else 1024, _round_up(n, 16))
    grid_r = pl.cdiv(n, tm)
    npad = grid_r * tm

    x = jnp.pad(blr_cat.astype(jnp.float32),
                ((0, npad - n), (0, IN_PAD - IN_DIM))).astype(jnp.bfloat16)

    encb = p['enc_bias'].astype(elem_dtype)
    shifts = p['shifts'].astype(elem_dtype)

    mm = IN_PAD * FLAT_PAD + FLAT_PAD * LIN + 4 * LIN * LIN + LIN * OUT_PAD
    weight_bytes = 2 * mm + 4 * (FLAT_PAD + 5 * LIN + OUT_PAD)
    cost = pl.CostEstimate(
        flops=2 * npad * mm,
        transcendentals=npad * OUT_DIM,
        bytes_accessed=weight_bytes + 2 * npad * (IN_PAD + OUT_PAD))

    out = pl.pallas_call(
        functools.partial(_fused_kernel, elem_dtype=elem_dtype),
        grid=(grid_r,),
        in_specs=[
            pl.BlockSpec((tm, IN_PAD), lambda r: (r, 0)),            # x rows
            pl.BlockSpec((IN_PAD, FLAT_PAD), lambda r: (0, 0)),      # enc W
            pl.BlockSpec((1, FLAT_PAD), lambda r: (0, 0)),           # enc bias
            pl.BlockSpec((FLAT_PAD, LIN), lambda r: (0, 0)),         # w1_BL
            pl.BlockSpec((2 * NUM_STAGE + 1, LIN), lambda r: (0, 0)),  # shifts
            pl.BlockSpec((2 * NUM_STAGE, LIN, LIN), lambda r: (0, 0, 0)),  # stages
            pl.BlockSpec((LIN, OUT_PAD), lambda r: (0, 0)),          # w2_BL
            pl.BlockSpec((1, OUT_PAD), lambda r: (0, 0)),            # b2 (masked)
        ],
        out_specs=pl.BlockSpec((tm, OUT_PAD), lambda r: (r, 0)),
        out_shape=jax.ShapeDtypeStruct((npad, OUT_PAD), jnp.bfloat16),
        compiler_params=pltpu.CompilerParams(
            dimension_semantics=("parallel",)),
        cost_estimate=cost,
    )(x, p['w_enc'], encb, p['w1'], shifts, p['ws'], p['w2'], p['b2'])

    return out[:n, :OUT_DIM].astype(jnp.float32)


# --------------------------------------------------------------------------
# External SGPose/PoseAug helpers (plain JAX glue).
# TODO(synk): get_bone_lengthbypose3d / blaugment9to15 are external helpers not
# included in the provided module source; implemented here per the PoseAug
# H36M-16-joint skeleton convention.
# --------------------------------------------------------------------------
_PARENTS = [-1, 0, 1, 2, 0, 4, 5, 0, 7, 8, 8, 10, 11, 8, 13, 14]
_BONE_GROUP = [0, 1, 2, 0, 1, 2, 3, 4, 5, 6, 7, 8, 6, 7, 8]  # 15 bones -> 9 groups


def _joint_to_bone_mat():
    C = np.zeros((16, 15), np.float32)
    for j in range(1, 16):
        C[j, j - 1] = 1.0
        C[_PARENTS[j], j - 1] = -1.0
    return C


def _bone_to_joint_mat():
    Ci = np.zeros((15, 16), np.float32)
    for j in range(1, 16):
        k = j
        while k != 0:
            Ci[k - 1, j] = 1.0
            k = _PARENTS[k]
    return Ci


def _blr9to15_mat():
    M = np.zeros((15, 9), np.float32)
    for b, g in enumerate(_BONE_GROUP):
        M[b, g] = 1.0
    return M


def get_bone_vec(x):                      # x: (..., 16, 3) -> (..., 15, 3)
    C = jnp.asarray(_joint_to_bone_mat())
    return jnp.einsum('...jc,jb->...bc', x, C)


def get_bone_length(x):                   # -> (..., 15, 1)
    return jnp.linalg.norm(get_bone_vec(x), axis=-1, keepdims=True)


def blaugment9to15(x, bl, blr):
    M = jnp.asarray(_blr9to15_mat())
    blr15 = jnp.einsum('bg,...go->...bo', M, blr)          # (..., 15, 1)
    bv = get_bone_vec(x)
    unit = bv / jnp.linalg.norm(bv, axis=-1, keepdims=True)
    mod = unit * (bl * (1.0 + blr15))
    Ci = jnp.asarray(_bone_to_joint_mat())
    return jnp.einsum('...bc,bj->...jc', mod, Ci)


# --------------------------------------------------------------------------
# Parameter init (deterministic, PyTorch-default-style uniform init),
# pre-folded/packed into the kernel layout.
# --------------------------------------------------------------------------
def _linear_init(key, fan_in, fan_out):
    kw, kb = jax.random.split(key)
    bound = 1.0 / np.sqrt(fan_in)
    w = jax.random.uniform(kw, (fan_out, fan_in), jnp.float32, -bound, bound)
    b = jax.random.uniform(kb, (fan_out,), jnp.float32, -bound, bound)
    return w, b


def init_params(key, weight_dtype=jnp.bfloat16):
    ks = jax.random.split(key, 8)
    # eval-mode BatchNorm1d with default params/stats (gamma=1, beta=0,
    # running_mean=0, running_var=1): pure affine, scale folded into weights.
    # NOTE: with trained checkpoints, fold the actual running stats instead.
    bn_scale = 1.0 / np.sqrt(1.0 + BN_EPS)

    # encoder: Conv1d(3, 48, k=1) weight (48,3), bias (48,); BN scale folded.
    w_enc, b_enc = _linear_init(ks[0], 3, ATTN)
    pos_emb = jax.random.normal(ks[1], (1, N_TOKENS, ATTN), jnp.float32)
    wt = (w_enc * bn_scale).T                                  # (3, 48)
    # Block-diagonal map (111 -> 1776): flat[l*48+c] = sum_j tok[l*3+j]*wt[j,c]
    w_big = jnp.kron(jnp.eye(N_TOKENS, dtype=jnp.float32), wt)  # (111, 1776)
    w_big = jnp.pad(w_big, ((0, IN_PAD - IN_DIM), (0, FLAT_PAD - FLAT_DIM)))
    bias_big = jnp.tile(b_enc * bn_scale, N_TOKENS)             # (1776,)
    enc_bias = jnp.pad(bias_big, (0, FLAT_PAD - FLAT_DIM)).reshape(1, FLAT_PAD)

    # w1_BL (1776 -> 256) + BN folded; rows padded 1776 -> 1792 with zeros.
    w1, b1 = _linear_init(ks[2], N_TOKENS * ATTN, LIN)
    w1t = w1.T * bn_scale                                       # (1776, 256)
    w1f = jnp.pad(w1t, ((0, FLAT_PAD - FLAT_DIM), (0, 0)))
    # pos_embedding is added after the encoder ReLU and before w1_BL, so it
    # folds exactly into the first shift: BN(w1(r+pos)+b1) = w1f r + shift0.
    pos_big = pos_emb.reshape(-1)                               # (1776,) = l*48+c
    shifts = [b1 * bn_scale + pos_big @ w1t]

    # 2 Linear stages == 4 x (256 -> 256) + BN folded.
    ws = []
    for i in range(2 * NUM_STAGE):
        w, b = _linear_init(ks[3 + i], LIN, LIN)
        ws.append(w.T * bn_scale)
        shifts.append(b * bn_scale)
    ws = jnp.stack(ws)                                          # (4, 256, 256)
    shifts = jnp.stack(shifts)                                  # (5, 256)

    # w2_BL (256 -> 9) with tmp_mask folded in; cols padded 9 -> 128 with zeros.
    w2, b2 = _linear_init(ks[7], LIN, OUT_DIM)
    mask = jnp.array([1, 1, 1, 1, 0, 1, 1, 1, 1], jnp.float32)
    w2m = jnp.pad(w2.T * mask[None, :], ((0, 0), (0, OUT_PAD - OUT_DIM)))
    b2m = jnp.pad(b2 * mask, (0, OUT_PAD - OUT_DIM)).reshape(1, OUT_PAD)

    return {
        'w_enc': w_big.astype(weight_dtype),
        'enc_bias': enc_bias.astype(jnp.float32),
        'w1': w1f.astype(weight_dtype),
        'shifts': shifts.astype(jnp.float32),
        'ws': ws.astype(weight_dtype),
        'w2': w2m.astype(weight_dtype),
        'b2': b2m.astype(jnp.float32),
    }


# --------------------------------------------------------------------------
# Forward (glue + the single fused Pallas kernel).
# --------------------------------------------------------------------------
def bl_generator_attention_forward(params, inputs_3d, augx, noise):
    x5 = inputs_3d[:, 0]                      # (N, T, 16, 3)
    root = x5[:, :, :1, :]
    xr = x5 - root                            # root-relative pose
    N, T = xr.shape[0], xr.shape[1]
    x_flat = xr.reshape(N, T, -1)             # (N, T, 48)
    bl_x = get_bone_length(xr)[..., 0]        # (N, T, 15)
    mid = (T - 1) // 2
    pad = T
    x_m = x_flat[:, mid]                      # (N, 48)
    bl_m = bl_x[:, mid]                       # (N, 15)

    # (N, 111); torch then views this as (N, 37, 3) tokens (flat idx = l*3 + c),
    # which the folded block-diagonal encoder matrix reproduces exactly.
    blr_cat = jnp.concatenate([x_m, bl_m, noise], axis=-1)

    blr9 = bl_trunk_call(blr_cat, params)                     # (N, 9)
    blr = jnp.tile(blr9[:, None, :], (1, pad, 1))             # (N, T, 9)

    bones_length = get_bone_length(augx)                      # (N, T, 15, 1)
    augx_bl = blaugment9to15(augx, bones_length, blr[..., None])
    return augx_bl, blr


if __name__ == "__main__":
    key = jax.random.PRNGKey(0)
    pkey, k_in, k_aug, k_noise = jax.random.split(key, 4)
    params = init_params(pkey)

    N, T = 2, 3
    inputs_3d = jax.random.normal(k_in, (N, 1, T, 16, 3), jnp.float32)
    augx = jax.random.normal(k_aug, (N, T, 16, 3), jnp.float32)
    noise = jax.random.normal(k_noise, (N, NOISE_CH), jnp.float32)

    fwd = jax.jit(functools.partial(bl_generator_attention_forward, params))
    augx_bl, blr = fwd(inputs_3d, augx, noise)
    jax.block_until_ready((augx_bl, blr))
    assert augx_bl.shape == (N, T, 16, 3)
    assert blr.shape == (N, T, 9)
    assert bool(jnp.all(jnp.isfinite(blr)))
    assert bool(jnp.all(jnp.abs(blr) <= BLR_TANHLIMIT + 1e-2))
    print("KERNEL_OK")
</pallas_src>

<mosaic_0001>
module attributes {stable_mosaic.version = 11 : i64} {
  func.func @_fused_kernel(%arg0: i32, %arg1: memref<16x128xbf16, #tpu.memory_space<vmem>>, %arg2: memref<128x1792xbf16, #tpu.memory_space<vmem>>, %arg3: memref<1x1792xbf16, #tpu.memory_space<vmem>>, %arg4: memref<1792x256xbf16, #tpu.memory_space<vmem>>, %arg5: memref<5x256xbf16, #tpu.memory_space<vmem>>, %arg6: memref<4x256x256xbf16, #tpu.memory_space<vmem>>, %arg7: memref<256x128xbf16, #tpu.memory_space<vmem>>, %arg8: memref<1x128xf32, #tpu.memory_space<vmem>>, %arg9: memref<16x128xbf16, #tpu.memory_space<vmem>>) attributes {dimension_semantics = [#tpu.dimension_semantics<parallel>], iteration_bounds = array<i64: 1>, scalar_prefetch = 0 : i64, scratch_operands = 0 : i64, tpu.core_type = #tpu.core_type<tc>, window_params = [{transform_indices = @transform_0, window_bounds = array<i64: 16, 128>}, {pipeline_mode = #tpu.pipeline_mode<synchronous>, transform_indices = @transform_1, window_bounds = array<i64: 128, 1792>}, {pipeline_mode = #tpu.pipeline_mode<synchronous>, transform_indices = @transform_2, window_bounds = array<i64: 1, 1792>}, {pipeline_mode = #tpu.pipeline_mode<synchronous>, transform_indices = @transform_3, window_bounds = array<i64: 1792, 256>}, {pipeline_mode = #tpu.pipeline_mode<synchronous>, transform_indices = @transform_4, window_bounds = array<i64: 5, 256>}, {pipeline_mode = #tpu.pipeline_mode<synchronous>, transform_indices = @transform_5, window_bounds = array<i64: 4, 256, 256>}, {pipeline_mode = #tpu.pipeline_mode<synchronous>, transform_indices = @transform_6, window_bounds = array<i64: 256, 128>}, {pipeline_mode = #tpu.pipeline_mode<synchronous>, transform_indices = @transform_7, window_bounds = array<i64: 1, 128>}, {transform_indices = @transform_8, window_bounds = array<i64: 16, 128>}]} {
    %c0 = arith.constant 0 : index
    %c0_0 = arith.constant 0 : index
    %0 = vector.load %arg1[%c0, %c0_0] : memref<16x128xbf16, #tpu.memory_space<vmem>>, vector<16x128xbf16>
    %c0_1 = arith.constant 0 : index
    %c0_2 = arith.constant 0 : index
    %1 = vector.load %arg2[%c0_1, %c0_2] : memref<128x1792xbf16, #tpu.memory_space<vmem>>, vector<128x1792xbf16>
    %cst = arith.constant dense<0.000000e+00> : vector<16x1792xf32>
    %2 = tpu.matmul %0, %1, %cst {dimension_numbers = #tpu.dot_dimension_numbers<[1], [0], [0], [1], [0, 0, 1, 1], [], []>} : vector<16x128xbf16>, vector<128x1792xbf16>, vector<16x1792xf32> -> vector<16x1792xf32>
    %3 = arith.truncf %2 : vector<16x1792xf32> to vector<16x1792xbf16>
    %c0_3 = arith.constant 0 : index
    %c0_4 = arith.constant 0 : index
    %4 = vector.load %arg3[%c0_3, %c0_4] : memref<1x1792xbf16, #tpu.memory_space<vmem>>, vector<1x1792xbf16>
    %5 = vector.broadcast %4 : vector<1x1792xbf16> to vector<16x1792xbf16>
    %6 = arith.addf %3, %5 : vector<16x1792xbf16>
    %cst_5 = arith.constant 0.000000e+00 : bf16
    %7 = vector.broadcast %cst_5 : bf16 to vector<16x1792xbf16>
    %8 = arith.maximumf %6, %7 : vector<16x1792xbf16>
    %c0_6 = arith.constant 0 : index
    %c0_7 = arith.constant 0 : index
    %9 = vector.load %arg4[%c0_6, %c0_7] : memref<1792x256xbf16, #tpu.memory_space<vmem>>, vector<1792x256xbf16>
    %cst_8 = arith.constant dense<0.000000e+00> : vector<16x256xf32>
    %10 = tpu.matmul %8, %9, %cst_8 {dimension_numbers = #tpu.dot_dimension_numbers<[1], [0], [0], [1], [0, 0, 1, 1], [], []>} : vector<16x1792xbf16>, vector<1792x256xbf16>, vector<16x256xf32> -> vector<16x256xf32>
    %11 = arith.truncf %10 : vector<16x256xf32> to vector<16x256xbf16>
    %c0_9 = arith.constant 0 : index
    %c0_10 = arith.constant 0 : index
    %12 = vector.load %arg5[%c0_9, %c0_10] : memref<5x256xbf16, #tpu.memory_space<vmem>>, vector<1x256xbf16>
    %13 = vector.broadcast %12 : vector<1x256xbf16> to vector<16x256xbf16>
    %14 = arith.addf %11, %13 : vector<16x256xbf16>
    %cst_11 = arith.constant 0.000000e+00 : bf16
    %15 = vector.broadcast %cst_11 : bf16 to vector<16x256xbf16>
    %16 = arith.cmpf ogt, %14, %15 : vector<16x256xbf16>
    %cst_12 = arith.constant 1.000980e-02 : bf16
    %17 = vector.broadcast %cst_12 : bf16 to vector<16x256xbf16>
    %18 = arith.mulf %17, %14 : vector<16x256xbf16>
    %19 = arith.select %16, %14, %18 : vector<16x256xi1>, vector<16x256xbf16>
    %c0_13 = arith.constant 0 : index
    %c0_14 = arith.constant 0 : index
    %c0_15 = arith.constant 0 : index
    %20 = vector.load %arg6[%c0_13, %c0_14, %c0_15] : memref<4x256x256xbf16, #tpu.memory_space<vmem>>, vector<1x256x256xbf16>
    %21 = vector.shape_cast %20 : vector<1x256x256xbf16> to vector<256x256xbf16>
    %cst_16 = arith.constant dense<0.000000e+00> : vector<16x256xf32>
    %22 = tpu.matmul %19, %21, %cst_16 {dimension_numbers = #tpu.dot_dimension_numbers<[1], [0], [0], [1], [0, 0, 1, 1], [], []>} : vector<16x256xbf16>, vector<256x256xbf16>, vector<16x256xf32> -> vector<16x256xf32>
    %23 = arith.truncf %22 : vector<16x256xf32> to vector<16x256xbf16>
    %c1 = arith.constant 1 : index
    %c0_17 = arith.constant 0 : index
    %24 = vector.load %arg5[%c1, %c0_17] : memref<5x256xbf16, #tpu.memory_space<vmem>>, vector<1x256xbf16>
    %25 = vector.broadcast %24 : vector<1x256xbf16> to vector<16x256xbf16>
    %26 = arith.addf %23, %25 : vector<16x256xbf16>
    %cst_18 = arith.constant 0.000000e+00 : bf16
    %27 = vector.broadcast %cst_18 : bf16 to vector<16x256xbf16>
    %28 = arith.cmpf ogt, %26, %27 : vector<16x256xbf16>
    %cst_19 = arith.constant 1.000980e-02 : bf16
    %29 = vector.broadcast %cst_19 : bf16 to vector<16x256xbf16>
    %30 = arith.mulf %29, %26 : vector<16x256xbf16>
    %31 = arith.select %28, %26, %30 : vector<16x256xi1>, vector<16x256xbf16>
    %c1_20 = arith.constant 1 : index
    %c0_21 = arith.constant 0 : index
    %c0_22 = arith.constant 0 : index
    %32 = vector.load %arg6[%c1_20, %c0_21, %c0_22] : memref<4x256x256xbf16, #tpu.memory_space<vmem>>, vector<1x256x256xbf16>
    %33 = vector.shape_cast %32 : vector<1x256x256xbf16> to vector<256x256xbf16>
    %cst_23 = arith.constant dense<0.000000e+00> : vector<16x256xf32>
    %34 = tpu.matmul %31, %33, %cst_23 {dimension_numbers = #tpu.dot_dimension_numbers<[1], [0], [0], [1], [0, 0, 1, 1], [], []>} : vector<16x256xbf16>, vector<256x256xbf16>, vector<16x256xf32> -> vector<16x256xf32>
    %35 = arith.truncf %34 : vector<16x256xf32> to vector<16x256xbf16>
    %c2 = arith.constant 2 : index
    %c0_24 = arith.constant 0 : index
    %36 = vector.load %arg5[%c2, %c0_24] : memref<5x256xbf16, #tpu.memory_space<vmem>>, vector<1x256xbf16>
    %37 = vector.broadcast %36 : vector<1x256xbf16> to vector<16x256xbf16>
    %38 = arith.addf %35, %37 : vector<16x256xbf16>
    %cst_25 = arith.constant 0.000000e+00 : bf16
    %39 = vector.broadcast %cst_25 : bf16 to vector<16x256xbf16>
    %40 = arith.cmpf ogt, %38, %39 : vector<16x256xbf16>
    %cst_26 = arith.constant 1.000980e-02 : bf16
    %41 = vector.broadcast %cst_26 : bf16 to vector<16x256xbf16>
    %42 = arith.mulf %41, %38 : vector<16x256xbf16>
    %43 = arith.select %40, %38, %42 : vector<16x256xi1>, vector<16x256xbf16>
    %c2_27 = arith.constant 2 : index
    %c0_28 = arith.constant 0 : index
    %c0_29 = arith.constant 0 : index
    %44 = vector.load %arg6[%c2_27, %c0_28, %c0_29] : memref<4x256x256xbf16, #tpu.memory_space<vmem>>, vector<1x256x256xbf16>
    %45 = vector.shape_cast %44 : vector<1x256x256xbf16> to vector<256x256xbf16>
    %cst_30 = arith.constant dense<0.000000e+00> : vector<16x256xf32>
    %46 = tpu.matmul %43, %45, %cst_30 {dimension_numbers = #tpu.dot_dimension_numbers<[1], [0], [0], [1], [0, 0, 1, 1], [], []>} : vector<16x256xbf16>, vector<256x256xbf16>, vector<16x256xf32> -> vector<16x256xf32>
    %47 = arith.truncf %46 : vector<16x256xf32> to vector<16x256xbf16>
    %c3 = arith.constant 3 : index
    %c0_31 = arith.constant 0 : index
    %48 = vector.load %arg5[%c3, %c0_31] : memref<5x256xbf16, #tpu.memory_space<vmem>>, vector<1x256xbf16>
    %49 = vector.broadcast %48 : vector<1x256xbf16> to vector<16x256xbf16>
    %50 = arith.addf %47, %49 : vector<16x256xbf16>
    %cst_32 = arith.constant 0.000000e+00 : bf16
    %51 = vector.broadcast %cst_32 : bf16 to vector<16x256xbf16>
    %52 = arith.cmpf ogt, %50, %51 : vector<16x256xbf16>
    %cst_33 = arith.constant 1.000980e-02 : bf16
    %53 = vector.broadcast %cst_33 : bf16 to vector<16x256xbf16>
    %54 = arith.mulf %53, %50 : vector<16x256xbf16>
    %55 = arith.select %52, %50, %54 : vector<16x256xi1>, vector<16x256xbf16>
    %c3_34 = arith.constant 3 : index
    %c0_35 = arith.constant 0 : index
    %c0_36 = arith.constant 0 : index
    %56 = vector.load %arg6[%c3_34, %c0_35, %c0_36] : memref<4x256x256xbf16, #tpu.memory_space<vmem>>, vector<1x256x256xbf16>
    %57 = vector.shape_cast %56 : vector<1x256x256xbf16> to vector<256x256xbf16>
    %cst_37 = arith.constant dense<0.000000e+00> : vector<16x256xf32>
    %58 = tpu.matmul %55, %57, %cst_37 {dimension_numbers = #tpu.dot_dimension_numbers<[1], [0], [0], [1], [0, 0, 1, 1], [], []>} : vector<16x256xbf16>, vector<256x256xbf16>, vector<16x256xf32> -> vector<16x256xf32>
    %59 = arith.truncf %58 : vector<16x256xf32> to vector<16x256xbf16>
    %c4 = arith.constant 4 : index
    %c0_38 = arith.constant 0 : index
    %60 = vector.load %arg5[%c4, %c0_38] : memref<5x256xbf16, #tpu.memory_space<vmem>>, vector<1x256xbf16>
    %61 = vector.broadcast %60 : vector<1x256xbf16> to vector<16x256xbf16>
    %62 = arith.addf %59, %61 : vector<16x256xbf16>
    %cst_39 = arith.constant 0.000000e+00 : bf16
    %63 = vector.broadcast %cst_39 : bf16 to vector<16x256xbf16>
    %64 = arith.cmpf ogt, %62, %63 : vector<16x256xbf16>
    %cst_40 = arith.constant 1.000980e-02 : bf16
    %65 = vector.broadcast %cst_40 : bf16 to vector<16x256xbf16>
    %66 = arith.mulf %65, %62 : vector<16x256xbf16>
    %67 = arith.select %64, %62, %66 : vector<16x256xi1>, vector<16x256xbf16>
    %c0_41 = arith.constant 0 : index
    %c0_42 = arith.constant 0 : index
    %68 = vector.load %arg7[%c0_41, %c0_42] : memref<256x128xbf16, #tpu.memory_space<vmem>>, vector<256x128xbf16>
    %cst_43 = arith.constant dense<0.000000e+00> : vector<16x128xf32>
    %69 = tpu.matmul %67, %68, %cst_43 {dimension_numbers = #tpu.dot_dimension_numbers<[1], [0], [0], [1], [0, 0, 1, 1], [], []>} : vector<16x256xbf16>, vector<256x128xbf16>, vector<16x128xf32> -> vector<16x128xf32>
    %c0_44 = arith.constant 0 : index
    %c0_45 = arith.constant 0 : index
    %70 = vector.load %arg8[%c0_44, %c0_45] : memref<1x128xf32, #tpu.memory_space<vmem>>, vector<1x128xf32>
    %71 = vector.broadcast %70 : vector<1x128xf32> to vector<16x128xf32>
    %72 = arith.addf %69, %71 : vector<16x128xf32>
    %73 = math.tanh %72 : vector<16x128xf32>
    %cst_46 = arith.constant 2.000000e-01 : f32
    %74 = vector.broadcast %cst_46 : f32 to vector<16x128xf32>
    %75 = arith.mulf %73, %74 : vector<16x128xf32>
    %76 = arith.truncf %75 : vector<16x128xf32> to vector<16x128xbf16>
    %c0_47 = arith.constant 0 : index
    %c0_48 = arith.constant 0 : index
    %77 = vector.load %arg9[%c0_47, %c0_48] : memref<16x128xbf16, #tpu.memory_space<vmem>>, vector<16x128xbf16>
    tpu.vector_store %arg9[%c0_47, %c0_48], %76 {strides = array<i32>} : memref<16x128xbf16, #tpu.memory_space<vmem>>, vector<16x128xbf16>,
    return
  }
  func.func @transform_0(%arg0: i32) -> (i32, i32) {
    %c0_i32 = arith.constant 0 : i32
    %c0_i32_0 = arith.constant 0 : i32
    return %arg0, %c0_i32 : i32, i32
  }
  func.func @transform_1(%arg0: i32) -> (i32, i32) {
    %c0_i32 = arith.constant 0 : i32
    %c0_i32_0 = arith.constant 0 : i32
    %c0_i32_1 = arith.constant 0 : i32
    return %c0_i32, %c0_i32_0 : i32, i32
  }
  func.func @transform_2(%arg0: i32) -> (i32, i32) {
    %c0_i32 = arith.constant 0 : i32
    %c0_i32_0 = arith.constant 0 : i32
    %c0_i32_1 = arith.constant 0 : i32
    return %c0_i32, %c0_i32_0 : i32, i32
  }
  func.func @transform_3(%arg0: i32) -> (i32, i32) {
    %c0_i32 = arith.constant 0 : i32
    %c0_i32_0 = arith.constant 0 : i32
    %c0_i32_1 = arith.constant 0 : i32
    return %c0_i32, %c0_i32_0 : i32, i32
  }
  func.func @transform_4(%arg0: i32) -> (i32, i32) {
    %c0_i32 = arith.constant 0 : i32
    %c0_i32_0 = arith.constant 0 : i32
    %c0_i32_1 = arith.constant 0 : i32
    return %c0_i32, %c0_i32_0 : i32, i32
  }
  func.func @transform_5(%arg0: i32) -> (i32, i32, i32) {
    %c0_i32 = arith.constant 0 : i32
    %c0_i32_0 = arith.constant 0 : i32
    %c0_i32_1 = arith.constant 0 : i32
    %c0_i32_2 = arith.constant 0 : i32
    return %c0_i32, %c0_i32_0, %c0_i32_1 : i32, i32, i32
  }
  func.func @transform_6(%arg0: i32) -> (i32, i32) {
    %c0_i32 = arith.constant 0 : i32
    %c0_i32_0 = arith.constant 0 : i32
    %c0_i32_1 = arith.constant 0 : i32
    return %c0_i32, %c0_i32_0 : i32, i32
  }
  func.func @transform_7(%arg0: i32) -> (i32, i32) {
    %c0_i32 = arith.constant 0 : i32
    %c0_i32_0 = arith.constant 0 : i32
    %c0_i32_1 = arith.constant 0 : i32
    return %c0_i32, %c0_i32_0 : i32, i32
  }
  func.func @transform_8(%arg0: i32) -> (i32, i32) {
    %c0_i32 = arith.constant 0 : i32
    %c0_i32_0 = arith.constant 0 : i32
    return %arg0, %c0_i32 : i32, i32
  }
}

</mosaic_0001>

<llo_original>
// kernel: bl_generator_attention_forward.1
$region0: #{bl_generator_attention_forward.1}
  #allocation0 [shape = 'u32[]', space=smem, size = 0x4, offset = 0x4, fixed_abs, tag = 'smem constant byte address 0x4 - core index']
  #allocation1 [shape = 'u32[144,128]{1,0:T(1,128)}', space=vmem, size = 0x12000, scoped, tag = 'internal scratch']
  %s0 = inlined_call_operand.vmem [shape: bf16[16,128], index: 0, kind: input, shape index: {}]
  %s1 = inlined_call_operand.vmem [shape: bf16[128,1792], index: 1, kind: input, shape index: {}]
  %s2 = inlined_call_operand.vmem [shape: bf16[1,1792], index: 2, kind: input, shape index: {}]
  %s3 = inlined_call_operand.vmem [shape: bf16[1792,256], index: 3, kind: input, shape index: {}]
  %s4 = inlined_call_operand.vmem [shape: bf16[5,256], index: 4, kind: input, shape index: {}]
  %s5 = inlined_call_operand.vmem [shape: bf16[4,256,256], index: 5, kind: input, shape index: {}]
  %s6 = inlined_call_operand.vmem [shape: bf16[256,128], index: 6, kind: input, shape index: {}]
  %s7 = inlined_call_operand.vmem [shape: f32[1,128], index: 7, kind: input, shape index: {}]
  %s8 = inlined_call_operand.vmem [shape: bf16[16,128], index: 8, kind: output, shape index: {}]
  %s9 = sld [smem:[#allocation0]]
  $region42: #{bl_generator_attention_forward.1} parent=0
    _
  %s11 = ssub.s32 1, %s9
  %s12 = scalar_select 0, %s11, %s9
  // Predicated region
  $region2: #{bl_generator_attention_forward.1} parent=0 // pred_check
    _
  $region3: #{bl_generator_attention_forward.1} parent=0 // pred_check_branch
    %14 = sbr.rel (0) target = $region5
  $region4: #{bl_generator_attention_forward.1} parent=0 // pred_region
    _
  $region5: #{bl_generator_attention_forward.1} parent=0 // pred_fallthru
    _
  // Predicated region
  $region6: #{bl_generator_attention_forward.1} parent=0 // pred_check
    _
  $region7: #{bl_generator_attention_forward.1} parent=0 // pred_check_branch
    %16 = sbr.rel (0) target = $region9
  $region8: #{bl_generator_attention_forward.1} parent=0 // pred_region
    _
  $region9: #{bl_generator_attention_forward.1} parent=0 // pred_fallthru
    _
  // Predicated region
  $region10: #{bl_generator_attention_forward.1} parent=0 // pred_check
    _
  $region11: #{bl_generator_attention_forward.1} parent=0 // pred_check_branch
    %18 = sbr.rel (0) target = $region13
  $region12: #{bl_generator_attention_forward.1} parent=0 // pred_region
    _
  $region13: #{bl_generator_attention_forward.1} parent=0 // pred_fallthru
    _
  // Predicated region
  $region14: #{bl_generator_attention_forward.1} parent=0 // pred_check
    _
  $region15: #{bl_generator_attention_forward.1} parent=0 // pred_check_branch
    %20 = sbr.rel (0) target = $region17
  $region16: #{bl_generator_attention_forward.1} parent=0 // pred_region
    _
  $region17: #{bl_generator_attention_forward.1} parent=0 // pred_fallthru
    _
  // Predicated region
  $region18: #{bl_generator_attention_forward.1} parent=0 // pred_check
    _
  $region19: #{bl_generator_attention_forward.1} parent=0 // pred_check_branch
    %22 = sbr.rel (0) target = $region21
  $region20: #{bl_generator_attention_forward.1} parent=0 // pred_region
    _
  $region21: #{bl_generator_attention_forward.1} parent=0 // pred_fallthru
    _
  // Predicated region
  $region22: #{bl_generator_attention_forward.1} parent=0 // pred_check
    _
  $region23: #{bl_generator_attention_forward.1} parent=0 // pred_check_branch
    %24 = sbr.rel (0) target = $region25
  $region24: #{bl_generator_attention_forward.1} parent=0 // pred_region
    _
  $region25: #{bl_generator_attention_forward.1} parent=0 // pred_fallthru
    _
  // Predicated region
  $region26: #{bl_generator_attention_forward.1} parent=0 // pred_check
    _
  $region27: #{bl_generator_attention_forward.1} parent=0 // pred_check_branch
    %26 = sbr.rel (0) target = $region29
  $region28: #{bl_generator_attention_forward.1} parent=0 // pred_region
    _
  $region29: #{bl_generator_attention_forward.1} parent=0 // pred_fallthru
    _
  // Predicated region
  $region30: #{bl_generator_attention_forward.1} parent=0 // pred_check
    _
  $region31: #{bl_generator_attention_forward.1} parent=0 // pred_check_branch
    %28 = sbr.rel (0) target = $region33
  $region32: #{bl_generator_attention_forward.1} parent=0 // pred_region
    _
  $region33: #{bl_generator_attention_forward.1} parent=0 // pred_fallthru
    _
  %v31 = vld [vmem:[%s0] sm:$0xf]
  %v32 = vld [vmem:[%s0 + $0x4] sm:$0xf]
  %v33 = vld [vmem:[%s1] sm:$0xff]
  %v34 = vld [vmem:[%s1 + $0x8] sm:$0xff]
  %v35 = vld [vmem:[%s1 + $0x10] sm:$0xff]
  %v36 = vld [vmem:[%s1 + $0x18] sm:$0xff]
  %v37 = vld [vmem:[%s1 + $0x20] sm:$0xff]
  %v38 = vld [vmem:[%s1 + $0x28] sm:$0xff]
  %v39 = vld [vmem:[%s1 + $0x30] sm:$0xff]
  %v40 = vld [vmem:[%s1 + $0x38] sm:$0xff]
  %v41 = vld [vmem:[%s1 + $0x40] sm:$0xff]
  %v42 = vld [vmem:[%s1 + $0x48] sm:$0xff]
  %v43 = vld [vmem:[%s1 + $0x50] sm:$0xff]
  %v44 = vld [vmem:[%s1 + $0x58] sm:$0xff]
  %v45 = vld [vmem:[%s1 + $0x60] sm:$0xff]
  %v46 = vld [vmem:[%s1 + $0x68] sm:$0xff]
  %v47 = vld [vmem:[%s1 + $0x70] sm:$0xff]
  %v48 = vld [vmem:[%s1 + $0x78] sm:$0xff]
  %v49 = vld [vmem:[%s1 + $0x80] sm:$0xff]
  %v50 = vld [vmem:[%s1 + $0x88] sm:$0xff]
  %v51 = vld [vmem:[%s1 + $0x90] sm:$0xff]
  %v52 = vld [vmem:[%s1 + $0x98] sm:$0xff]
  %v53 = vld [vmem:[%s1 + $0xa0] sm:$0xff]
  %v54 = vld [vmem:[%s1 + $0xa8] sm:$0xff]
  %v55 = vld [vmem:[%s1 + $0xb0] sm:$0xff]
  %v56 = vld [vmem:[%s1 + $0xb8] sm:$0xff]
  %v57 = vld [vmem:[%s1 + $0xc0] sm:$0xff]
  %v58 = vld [vmem:[%s1 + $0xc8] sm:$0xff]
  %v59 = vld [vmem:[%s1 + $0xd0] sm:$0xff]
  %v60 = vld [vmem:[%s1 + $0xd8] sm:$0xff]
  %v61 = vld [vmem:[%s1 + $0xe0] sm:$0xff]
  %v62 = vld [vmem:[%s1 + $0xe8] sm:$0xff]
  %v63 = vld [vmem:[%s1 + $0xf0] sm:$0xff]
  %v64 = vld [vmem:[%s1 + $0xf8] sm:$0xff]
  %v65 = vld [vmem:[%s1 + $0x100] sm:$0xff]
  %v66 = vld [vmem:[%s1 + $0x108] sm:$0xff]
  %v67 = vld [vmem:[%s1 + $0x110] sm:$0xff]
  %v68 = vld [vmem:[%s1 + $0x118] sm:$0xff]
  %v69 = vld [vmem:[%s1 + $0x120] sm:$0xff]
  %v70 = vld [vmem:[%s1 + $0x128] sm:$0xff]
  %v71 = vld [vmem:[%s1 + $0x130] sm:$0xff]
  %v72 = vld [vmem:[%s1 + $0x138] sm:$0xff]
  %v73 = vld [vmem:[%s1 + $0x140] sm:$0xff]
  %v74 = vld [vmem:[%s1 + $0x148] sm:$0xff]
  %v75 = vld [vmem:[%s1 + $0x150] sm:$0xff]
  %v76 = vld [vmem:[%s1 + $0x158] sm:$0xff]
  %v77 = vld [vmem:[%s1 + $0x160] sm:$0xff]
  %v78 = vld [vmem:[%s1 + $0x168] sm:$0xff]
  %v79 = vld [vmem:[%s1 + $0x170] sm:$0xff]
  %v80 = vld [vmem:[%s1 + $0x178] sm:$0xff]
  %v81 = vld [vmem:[%s1 + $0x180] sm:$0xff]
  %v82 = vld [vmem:[%s1 + $0x188] sm:$0xff]
  %v83 = vld [vmem:[%s1 + $0x190] sm:$0xff]
  %v84 = vld [vmem:[%s1 + $0x198] sm:$0xff]
  %v85 = vld [vmem:[%s1 + $0x1a0] sm:$0xff]
  %v86 = vld [vmem:[%s1 + $0x1a8] sm:$0xff]
  %v87 = vld [vmem:[%s1 + $0x1b0] sm:$0xff]
  %v88 = vld [vmem:[%s1 + $0x1b8] sm:$0xff]
  %v89 = vld [vmem:[%s1 + $0x1c0] sm:$0xff]
  %v90 = vld [vmem:[%s1 + $0x1c8] sm:$0xff]
  %v91 = vld [vmem:[%s1 + $0x1d0] sm:$0xff]
  %v92 = vld [vmem:[%s1 + $0x1d8] sm:$0xff]
  %v93 = vld [vmem:[%s1 + $0x1e0] sm:$0xff]
  %v94 = vld [vmem:[%s1 + $0x1e8] sm:$0xff]
  %v95 = vld [vmem:[%s1 + $0x1f0] sm:$0xff]
  %v96 = vld [vmem:[%s1 + $0x1f8] sm:$0xff]
  %v97 = vld [vmem:[%s1 + $0x200] sm:$0xff]
  %v98 = vld [vmem:[%s1 + $0x208] sm:$0xff]
  %v99 = vld [vmem:[%s1 + $0x210] sm:$0xff]
  %v100 = vld [vmem:[%s1 + $0x218] sm:$0xff]
  %v101 = vld [vmem:[%s1 + $0x220] sm:$0xff]
  %v102 = vld [vmem:[%s1 + $0x228] sm:$0xff]
  %v103 = vld [vmem:[%s1 + $0x230] sm:$0xff]
  %v104 = vld [vmem:[%s1 + $0x238] sm:$0xff]
  %v105 = vld [vmem:[%s1 + $0x240] sm:$0xff]
  %v106 = vld [vmem:[%s1 + $0x248] sm:$0xff]
  %v107 = vld [vmem:[%s1 + $0x250] sm:$0xff]
  %v108 = vld [vmem:[%s1 + $0x258] sm:$0xff]
  %v109 = vld [vmem:[%s1 + $0x260] sm:$0xff]
  %v110 = vld [vmem:[%s1 + $0x268] sm:$0xff]
  %v111 = vld [vmem:[%s1 + $0x270] sm:$0xff]
  %v112 = vld [vmem:[%s1 + $0x278] sm:$0xff]
  %v113 = vld [vmem:[%s1 + $0x280] sm:$0xff]
  %v114 = vld [vmem:[%s1 + $0x288] sm:$0xff]
  %v115 = vld [vmem:[%s1 + $0x290] sm:$0xff]
  %v116 = vld [vmem:[%s1 + $0x298] sm:$0xff]
  %v117 = vld [vmem:[%s1 + $0x2a0] sm:$0xff]
  %v118 = vld [vmem:[%s1 + $0x2a8] sm:$0xff]
  %v119 = vld [vmem:[%s1 + $0x2b0] sm:$0xff]
  %v120 = vld [vmem:[%s1 + $0x2b8] sm:$0xff]
  %v121 = vld [vmem:[%s1 + $0x2c0] sm:$0xff]
  %v122 = vld [vmem:[%s1 + $0x2c8] sm:$0xff]
  %v123 = vld [vmem:[%s1 + $0x2d0] sm:$0xff]
  %v124 = vld [vmem:[%s1 + $0x2d8] sm:$0xff]
  %v125 = vld [vmem:[%s1 + $0x2e0] sm:$0xff]
  %v126 = vld [vmem:[%s1 + $0x2e8] sm:$0xff]
  %v127 = vld [vmem:[%s1 + $0x2f0] sm:$0xff]
  %v128 = vld [vmem:[%s1 + $0x2f8] sm:$0xff]
  %v129 = vld [vmem:[%s1 + $0x300] sm:$0xff]
  %v130 = vld [vmem:[%s1 + $0x308] sm:$0xff]
  %v131 = vld [vmem:[%s1 + $0x310] sm:$0xff]
  %v132 = vld [vmem:[%s1 + $0x318] sm:$0xff]
  %v133 = vld [vmem:[%s1 + $0x320] sm:$0xff]
  %v134 = vld [vmem:[%s1 + $0x328] sm:$0xff]
  %v135 = vld [vmem:[%s1 + $0x330] sm:$0xff]
  %v136 = vld [vmem:[%s1 + $0x338] sm:$0xff]
  %v137 = vld [vmem:[%s1 + $0x340] sm:$0xff]
  %v138 = vld [vmem:[%s1 + $0x348] sm:$0xff]
  %v139 = vld [vmem:[%s1 + $0x350] sm:$0xff]
  %v140 = vld [vmem:[%s1 + $0x358] sm:$0xff]
  %v141 = vld [vmem:[%s1 + $0x360] sm:$0xff]
  %v142 = vld [vmem:[%s1 + $0x368] sm:$0xff]
  %v143 = vld [vmem:[%s1 + $0x370] sm:$0xff]
  %v144 = vld [vmem:[%s1 + $0x378] sm:$0xff]
  %v147 = vunpack.c.l.b16 %v31
  %v148 = vunpack.c.l.b16 %v32
  %v149 = vpack.c.b16 %v148, %v147
  %v263 = vunpack.c.l.b16 %v33
  %v264 = vunpack.c.h.b16 %v33
  %v265 = vunpack.c.l.b16 %v34
  %v266 = vunpack.c.h.b16 %v34
  %v267 = vunpack.c.l.b16 %v35
  %v268 = vunpack.c.h.b16 %v35
  %v269 = vunpack.c.l.b16 %v36
  %v270 = vunpack.c.h.b16 %v36
  %v271 = vunpack.c.l.b16 %v37
  %v272 = vunpack.c.h.b16 %v37
  %v273 = vunpack.c.l.b16 %v38
  %v274 = vunpack.c.h.b16 %v38
  %v275 = vunpack.c.l.b16 %v39
  %v276 = vunpack.c.h.b16 %v39
  %v277 = vunpack.c.l.b16 %v40
  %v278 = vunpack.c.h.b16 %v40
  %v279 = vunpack.c.l.b16 %v41
  %v280 = vunpack.c.h.b16 %v41
  %v281 = vunpack.c.l.b16 %v42
  %v282 = vunpack.c.h.b16 %v42
  %v283 = vunpack.c.l.b16 %v43
  %v284 = vunpack.c.h.b16 %v43
  %v285 = vunpack.c.l.b16 %v44
  %v286 = vunpack.c.h.b16 %v44
  %v287 = vunpack.c.l.b16 %v45
  %v288 = vunpack.c.h.b16 %v45
  %v289 = vunpack.c.l.b16 %v46
  %v290 = vunpack.c.h.b16 %v46
  %v291 = vunpack.c.l.b16 %v47
  %v292 = vunpack.c.h.b16 %v47
  %v293 = vunpack.c.l.b16 %v48
  %v294 = vunpack.c.h.b16 %v48
  %v295 = vunpack.c.l.b16 %v49
  %v296 = vunpack.c.h.b16 %v49
  %v297 = vunpack.c.l.b16 %v50
  %v298 = vunpack.c.h.b16 %v50
  %v299 = vunpack.c.l.b16 %v51
  %v300 = vunpack.c.h.b16 %v51
  %v301 = vunpack.c.l.b16 %v52
  %v302 = vunpack.c.h.b16 %v52
  %v303 = vunpack.c.l.b16 %v53
  %v304 = vunpack.c.h.b16 %v53
  %v305 = vunpack.c.l.b16 %v54
  %v306 = vunpack.c.h.b16 %v54
  %v307 = vunpack.c.l.b16 %v55
  %v308 = vunpack.c.h.b16 %v55
  %v309 = vunpack.c.l.b16 %v56
  %v310 = vunpack.c.h.b16 %v56
  %v311 = vunpack.c.l.b16 %v57
  %v312 = vunpack.c.h.b16 %v57
  %v313 = vunpack.c.l.b16 %v58
  %v314 = vunpack.c.h.b16 %v58
  %v315 = vunpack.c.l.b16 %v59
  %v316 = vunpack.c.h.b16 %v59
  %v317 = vunpack.c.l.b16 %v60
  %v318 = vunpack.c.h.b16 %v60
  %v319 = vunpack.c.l.b16 %v61
  %v320 = vunpack.c.h.b16 %v61
  %v321 = vunpack.c.l.b16 %v62
  %v322 = vunpack.c.h.b16 %v62
  %v323 = vunpack.c.l.b16 %v63
  %v324 = vunpack.c.h.b16 %v63
  %v325 = vunpack.c.l.b16 %v64
  %v326 = vunpack.c.h.b16 %v64
  %v327 = vunpack.c.l.b16 %v65
  %v328 = vunpack.c.h.b16 %v65
  %v329 = vunpack.c.l.b16 %v66
  %v330 = vunpack.c.h.b16 %v66
  %v331 = vunpack.c.l.b16 %v67
  %v332 = vunpack.c.h.b16 %v67
  %v333 = vunpack.c.l.b16 %v68
  %v334 = vunpack.c.h.b16 %v68
  %v335 = vunpack.c.l.b16 %v69
  %v336 = vunpack.c.h.b16 %v69
  %v337 = vunpack.c.l.b16 %v70
  %v338 = vunpack.c.h.b16 %v70
  %v339 = vunpack.c.l.b16 %v71
  %v340 = vunpack.c.h.b16 %v71
  %v341 = vunpack.c.l.b16 %v72
  %v342 = vunpack.c.h.b16 %v72
  %v343 = vunpack.c.l.b16 %v73
  %v344 = vunpack.c.h.b16 %v73
  %v345 = vunpack.c.l.b16 %v74
  %v346 = vunpack.c.h.b16 %v74
  %v347 = vunpack.c.l.b16 %v75
  %v348 = vunpack.c.h.b16 %v75
  %v349 = vunpack.c.l.b16 %v76
  %v350 = vunpack.c.h.b16 %v76
  %v351 = vunpack.c.l.b16 %v77
  %v352 = vunpack.c.h.b16 %v77
  %v353 = vunpack.c.l.b16 %v78
  %v354 = vunpack.c.h.b16 %v78
  %v355 = vunpack.c.l.b16 %v79
  %v356 = vunpack.c.h.b16 %v79
  %v357 = vunpack.c.l.b16 %v80
  %v358 = vunpack.c.h.b16 %v80
  %v359 = vunpack.c.l.b16 %v81
  %v360 = vunpack.c.h.b16 %v81
  %v361 = vunpack.c.l.b16 %v82
  %v362 = vunpack.c.h.b16 %v82
  %v363 = vunpack.c.l.b16 %v83
  %v364 = vunpack.c.h.b16 %v83
  %v365 = vunpack.c.l.b16 %v84
  %v366 = vunpack.c.h.b16 %v84
  %v367 = vunpack.c.l.b16 %v85
  %v368 = vunpack.c.h.b16 %v85
  %v369 = vunpack.c.l.b16 %v86
  %v370 = vunpack.c.h.b16 %v86
  %v371 = vunpack.c.l.b16 %v87
  %v372 = vunpack.c.h.b16 %v87
  %v373 = vunpack.c.l.b16 %v88
  %v374 = vunpack.c.h.b16 %v88
  %v375 = vunpack.c.l.b16 %v89
  %v376 = vunpack.c.h.b16 %v89
  %v377 = vunpack.c.l.b16 %v90
  %v378 = vunpack.c.h.b16 %v90
  %v379 = vunpack.c.l.b16 %v91
  %v380 = vunpack.c.h.b16 %v91
  %v381 = vunpack.c.l.b16 %v92
  %v382 = vunpack.c.h.b16 %v92
  %v383 = vunpack.c.l.b16 %v93
  %v384 = vunpack.c.h.b16 %v93
  %v385 = vunpack.c.l.b16 %v94
  %v386 = vunpack.c.h.b16 %v94
  %v387 = vunpack.c.l.b16 %v95
  %v388 = vunpack.c.h.b16 %v95
  %v389 = vunpack.c.l.b16 %v96
  %v390 = vunpack.c.h.b16 %v96
  %v391 = vunpack.c.l.b16 %v97
  %v392 = vunpack.c.h.b16 %v97
  %v393 = vunpack.c.l.b16 %v98
  %v394 = vunpack.c.h.b16 %v98
  %v395 = vunpack.c.l.b16 %v99
  %v396 = vunpack.c.h.b16 %v99
  %v397 = vunpack.c.l.b16 %v100
  %v398 = vunpack.c.h.b16 %v100
  %v399 = vunpack.c.l.b16 %v101
  %v400 = vunpack.c.h.b16 %v101
  %v401 = vunpack.c.l.b16 %v102
  %v402 = vunpack.c.h.b16 %v102
  %v403 = vunpack.c.l.b16 %v103
  %v404 = vunpack.c.h.b16 %v103
  %v405 = vunpack.c.l.b16 %v104
  %v406 = vunpack.c.h.b16 %v104
  %v407 = vunpack.c.l.b16 %v105
  %v408 = vunpack.c.h.b16 %v105
  %v409 = vunpack.c.l.b16 %v106
  %v410 = vunpack.c.h.b16 %v106
  %v411 = vunpack.c.l.b16 %v107
  %v412 = vunpack.c.h.b16 %v107
  %v413 = vunpack.c.l.b16 %v108
  %v414 = vunpack.c.h.b16 %v108
  %v415 = vunpack.c.l.b16 %v109
  %v416 = vunpack.c.h.b16 %v109
  %v417 = vunpack.c.l.b16 %v110
  %v418 = vunpack.c.h.b16 %v110
  %v419 = vunpack.c.l.b16 %v111
  %v420 = vunpack.c.h.b16 %v111
  %v421 = vunpack.c.l.b16 %v112
  %v422 = vunpack.c.h.b16 %v112
  %v423 = vunpack.c.l.b16 %v113
  %v424 = vunpack.c.h.b16 %v113
  %v425 = vunpack.c.l.b16 %v114
  %v426 = vunpack.c.h.b16 %v114
  %v427 = vunpack.c.l.b16 %v115
  %v428 = vunpack.c.h.b16 %v115
  %v429 = vunpack.c.l.b16 %v116
  %v430 = vunpack.c.h.b16 %v116
  %v431 = vunpack.c.l.b16 %v117
  %v432 = vunpack.c.h.b16 %v117
  %v433 = vunpack.c.l.b16 %v118
  %v434 = vunpack.c.h.b16 %v118
  %v435 = vunpack.c.l.b16 %v119
  %v436 = vunpack.c.h.b16 %v119
  %v437 = vunpack.c.l.b16 %v120
  %v438 = vunpack.c.h.b16 %v120
  %v439 = vunpack.c.l.b16 %v121
  %v440 = vunpack.c.h.b16 %v121
  %v441 = vunpack.c.l.b16 %v122
  %v442 = vunpack.c.h.b16 %v122
  %v443 = vunpack.c.l.b16 %v123
  %v444 = vunpack.c.h.b16 %v123
  %v445 = vunpack.c.l.b16 %v124
  %v446 = vunpack.c.h.b16 %v124
  %v447 = vunpack.c.l.b16 %v125
  %v448 = vunpack.c.h.b16 %v125
  %v449 = vunpack.c.l.b16 %v126
  %v450 = vunpack.c.h.b16 %v126
  %v451 = vunpack.c.l.b16 %v127
  %v452 = vunpack.c.h.b16 %v127
  %v453 = vunpack.c.l.b16 %v128
  %v454 = vunpack.c.h.b16 %v128
  %v455 = vunpack.c.l.b16 %v129
  %v456 = vunpack.c.h.b16 %v129
  %v457 = vunpack.c.l.b16 %v130
  %v458 = vunpack.c.h.b16 %v130
  %v459 = vunpack.c.l.b16 %v131
  %v460 = vunpack.c.h.b16 %v131
  %v461 = vunpack.c.l.b16 %v132
  %v462 = vunpack.c.h.b16 %v132
  %v463 = vunpack.c.l.b16 %v133
  %v464 = vunpack.c.h.b16 %v133
  %v465 = vunpack.c.l.b16 %v134
  %v466 = vunpack.c.h.b16 %v134
  %v467 = vunpack.c.l.b16 %v135
  %v468 = vunpack.c.h.b16 %v135
  %v469 = vunpack.c.l.b16 %v136
  %v470 = vunpack.c.h.b16 %v136
  %v471 = vunpack.c.l.b16 %v137
  %v472 = vunpack.c.h.b16 %v137
  %v473 = vunpack.c.l.b16 %v138
  %v474 = vunpack.c.h.b16 %v138
  %v475 = vunpack.c.l.b16 %v139
  %v476 = vunpack.c.h.b16 %v139
  %v477 = vunpack.c.l.b16 %v140
  %v478 = vunpack.c.h.b16 %v140
  %v479 = vunpack.c.l.b16 %v141
  %v480 = vunpack.c.h.b16 %v141
  %v481 = vunpack.c.l.b16 %v142
  %v482 = vunpack.c.h.b16 %v142
  %v483 = vunpack.c.l.b16 %v143
  %v484 = vunpack.c.h.b16 %v143
  %v485 = vunpack.c.l.b16 %v144
  %v486 = vunpack.c.h.b16 %v144
  %v487 = vpack.c.b16 %v277, %v263
  %v488 = vpack.c.b16 %v278, %v264
  %v489 = vpack.c.b16 %v279, %v265
  %v490 = vpack.c.b16 %v280, %v266
  %v491 = vpack.c.b16 %v281, %v267
  %v492 = vpack.c.b16 %v282, %v268
  %v493 = vpack.c.b16 %v283, %v269
  %v494 = vpack.c.b16 %v284, %v270
  %v495 = vpack.c.b16 %v285, %v271
  %v496 = vpack.c.b16 %v286, %v272
  %v497 = vpack.c.b16 %v287, %v273
  %v498 = vpack.c.b16 %v288, %v274
  %v499 = vpack.c.b16 %v289, %v275
  %v500 = vpack.c.b16 %v290, %v276
  %v501 = vpack.c.b16 %v305, %v291
  %v502 = vpack.c.b16 %v306, %v292
  %v503 = vpack.c.b16 %v307, %v293
  %v504 = vpack.c.b16 %v308, %v294
  %v505 = vpack.c.b16 %v309, %v295
  %v506 = vpack.c.b16 %v310, %v296
  %v507 = vpack.c.b16 %v311, %v297
  %v508 = vpack.c.b16 %v312, %v298
  %v509 = vpack.c.b16 %v313, %v299
  %v510 = vpack.c.b16 %v314, %v300
  %v511 = vpack.c.b16 %v315, %v301
  %v512 = vpack.c.b16 %v316, %v302
  %v513 = vpack.c.b16 %v317, %v303
  %v514 = vpack.c.b16 %v318, %v304
  %v515 = vpack.c.b16 %v333, %v319
  %v516 = vpack.c.b16 %v334, %v320
  %v517 = vpack.c.b16 %v335, %v321
  %v518 = vpack.c.b16 %v336, %v322
  %v519 = vpack.c.b16 %v337, %v323
  %v520 = vpack.c.b16 %v338, %v324
  %v521 = vpack.c.b16 %v339, %v325
  %v522 = vpack.c.b16 %v340, %v326
  %v523 = vpack.c.b16 %v341, %v327
  %v524 = vpack.c.b16 %v342, %v328
  %v525 = vpack.c.b16 %v343, %v329
  %v526 = vpack.c.b16 %v344, %v330
  %v527 = vpack.c.b16 %v345, %v331
  %v528 = vpack.c.b16 %v346, %v332
  %v529 = vpack.c.b16 %v361, %v347
  %v530 = vpack.c.b16 %v362, %v348
  %v531 = vpack.c.b16 %v363, %v349
  %v532 = vpack.c.b16 %v364, %v350
  %v533 = vpack.c.b16 %v365, %v351
  %v534 = vpack.c.b16 %v366, %v352
  %v535 = vpack.c.b16 %v367, %v353
  %v536 = vpack.c.b16 %v368, %v354
  %v537 = vpack.c.b16 %v369, %v355
  %v538 = vpack.c.b16 %v370, %v356
  %v539 = vpack.c.b16 %v371, %v357
  %v540 = vpack.c.b16 %v372, %v358
  %v541 = vpack.c.b16 %v373, %v359
  %v542 = vpack.c.b16 %v374, %v360
  %v543 = vpack.c.b16 %v389, %v375
  %v544 = vpack.c.b16 %v390, %v376
  %v545 = vpack.c.b16 %v391, %v377
  %v546 = vpack.c.b16 %v392, %v378
  %v547 = vpack.c.b16 %v393, %v379
  %v548 = vpack.c.b16 %v394, %v380
  %v549 = vpack.c.b16 %v395, %v381
  %v550 = vpack.c.b16 %v396, %v382
  %v551 = vpack.c.b16 %v397, %v383
  %v552 = vpack.c.b16 %v398, %v384
  %v553 = vpack.c.b16 %v399, %v385
  %v554 = vpack.c.b16 %v400, %v386
  %v555 = vpack.c.b16 %v401, %v387
  %v556 = vpack.c.b16 %v402, %v388
  %v557 = vpack.c.b16 %v417, %v403
  %v558 = vpack.c.b16 %v418, %v404
  %v559 = vpack.c.b16 %v419, %v405
  %v560 = vpack.c.b16 %v420, %v406
  %v561 = vpack.c.b16 %v421, %v407
  %v562 = vpack.c.b16 %v422, %v408
  %v563 = vpack.c.b16 %v423, %v409
  %v564 = vpack.c.b16 %v424, %v410
  %v565 = vpack.c.b16 %v425, %v411
  %v566 = vpack.c.b16 %v426, %v412
  %v567 = vpack.c.b16 %v427, %v413
  %v568 = vpack.c.b16 %v428, %v414
  %v569 = vpack.c.b16 %v429, %v415
  %v570 = vpack.c.b16 %v430, %v416
  %v571 = vpack.c.b16 %v445, %v431
  %v572 = vpack.c.b16 %v446, %v432
  %v573 = vpack.c.b16 %v447, %v433
  %v574 = vpack.c.b16 %v448, %v434
  %v575 = vpack.c.b16 %v449, %v435
  %v576 = vpack.c.b16 %v450, %v436
  %v577 = vpack.c.b16 %v451, %v437
  %v578 = vpack.c.b16 %v452, %v438
  %v579 = vpack.c.b16 %v453, %v439
  %v580 = vpack.c.b16 %v454, %v440
  %v581 = vpack.c.b16 %v455, %v441
  %v582 = vpack.c.b16 %v456, %v442
  %v583 = vpack.c.b16 %v457, %v443
  %v584 = vpack.c.b16 %v458, %v444
  %v585 = vpack.c.b16 %v473, %v459
  %v586 = vpack.c.b16 %v474, %v460
  %v587 = vpack.c.b16 %v475, %v461
  %v588 = vpack.c.b16 %v476, %v462
  %v589 = vpack.c.b16 %v477, %v463
  %v590 = vpack.c.b16 %v478, %v464
  %v591 = vpack.c.b16 %v479, %v465
  %v592 = vpack.c.b16 %v480, %v466
  %v593 = vpack.c.b16 %v481, %v467
  %v594 = vpack.c.b16 %v482, %v468
  %v595 = vpack.c.b16 %v483, %v469
  %v596 = vpack.c.b16 %v484, %v470
  %v597 = vpack.c.b16 %v485, %v471
  %v598 = vpack.c.b16 %v486, %v472
  %711 = vmatprep.subr.bf16.mxu0 %v488
  %712 = vmatpush1.bf16.msra.mxu0 %v487
  %713 = vmatprep.subr.bf16.mxu0 %v502
  %714 = vmatpush1.bf16.msra.mxu0 %v501
  %715 = vmatprep.subr.bf16.mxu0 %v516
  %716 = vmatpush1.bf16.msra.mxu0 %v515
  %717 = vmatprep.subr.bf16.mxu0 %v530
  %718 = vmatpush1.bf16.msra.mxu0 %v529
  %719 = vmatprep.subr.bf16.mxu0 %v544
  %720 = vmatpush1.bf16.msra.mxu0 %v543
  %721 = vmatprep.subr.bf16.mxu0 %v558
  %722 = vmatpush1.bf16.msra.mxu0 %v557
  %723 = vmatprep.subr.bf16.mxu0 %v572
  %724 = vmatpush1.bf16.msra.mxu0 %v571
  %725 = vmatprep.subr.bf16.mxu0 %v586
  %726 = vmatpush1.bf16.msra.mxu0 %v585
  %727 = vmatprep.subr.bf16.mxu0 0
  %728 = vmatpush1.bf16.msra.mxu0 0
  %729 = vmatprep.subr.bf16.mxu0 0
  %730 = vmatpush1.bf16.msra.mxu0 0
  %731 = vmatprep.subr.bf16.mxu0 0
  %732 = vmatpush1.bf16.msra.mxu0 0
  %733 = vmatprep.subr.bf16.mxu0 0
  %734 = vmatpush1.bf16.msra.mxu0 0
  %735 = vmatprep.subr.bf16.mxu0 0
  %736 = vmatpush1.bf16.msra.mxu0 0
  %737 = vmatprep.subr.bf16.mxu0 0
  %738 = vmatpush1.bf16.msra.mxu0 0
  %739 = vmatprep.subr.bf16.mxu0 0
  %740 = vmatpush1.bf16.msra.mxu0 0
  %741 = vmatprep.subr.bf16.mxu0 0
  %742 = vmatpush1.bf16.msra.mxu0 0
  %743 = vmatprep.mubr.bf16.mxu0 0
  %744 = vmatmul.mubr.bf16.gmra.mrb[0].mxu0 %v149
  %v745 = vpop.f32.mrb[0].mxu0
  %v746 = vadd.f32 0.0, %v745
  %v747 = vpop.f32.mrb[0].mxu0
  %v748 = vadd.f32 0.0, %v747
  %v749 = vpop.f32.mrb[0].mxu0
  %v750 = vadd.f32 0.0, %v749
  %v751 = vpop.f32.mrb[0].mxu0
  %v752 = vadd.f32 0.0, %v751
  %753 = vdwg.mxu0
  %754 = vmatprep.subr.bf16.mxu0 %v490
  %755 = vmatpush1.bf16.msra.mxu0 %v489
  %756 = vmatprep.subr.bf16.mxu0 %v504
  %757 = vmatpush1.bf16.msra.mxu0 %v503
  %758 = vmatprep.subr.bf16.mxu0 %v518
  %759 = vmatpush1.bf16.msra.mxu0 %v517
  %760 = vmatprep.subr.bf16.mxu0 %v532
  %761 = vmatpush1.bf16.msra.mxu0 %v531
  %762 = vmatprep.subr.bf16.mxu0 %v546
  %763 = vmatpush1.bf16.msra.mxu0 %v545
  %764 = vmatprep.subr.bf16.mxu0 %v560
  %765 = vmatpush1.bf16.msra.mxu0 %v559
  %766 = vmatprep.subr.bf16.mxu0 %v574
  %767 = vmatpush1.bf16.msra.mxu0 %v573
  %768 = vmatprep.subr.bf16.mxu0 %v588
  %769 = vmatpush1.bf16.msra.mxu0 %v587
  %770 = vmatprep.subr.bf16.mxu0 0
  %771 = vmatpush1.bf16.msra.mxu0 0
  %772 = vmatprep.subr.bf16.mxu0 0
  %773 = vmatpush1.bf16.msra.mxu0 0
  %774 = vmatprep.subr.bf16.mxu0 0
  %775 = vmatpush1.bf16.msra.mxu0 0
  %776 = vmatprep.subr.bf16.mxu0 0
  %777 = vmatpush1.bf16.msra.mxu0 0
  %778 = vmatprep.subr.bf16.mxu0 0
  %779 = vmatpush1.bf16.msra.mxu0 0
  %780 = vmatprep.subr.bf16.mxu0 0
  %781 = vmatpush1.bf16.msra.mxu0 0
  %782 = vmatprep.subr.bf16.mxu0 0
  %783 = vmatpush1.bf16.msra.mxu0 0
  %784 = vmatprep.subr.bf16.mxu0 0
  %785 = vmatpush1.bf16.msra.mxu0 0
  %786 = vmatprep.mubr.bf16.mxu0 0
  %787 = vmatmul.mubr.bf16.gmra.mrb[0].mxu0 %v149
  %v788 = vpop.f32.mrb[0].mxu0
  %v789 = vadd.f32 0.0, %v788
  %v790 = vpop.f32.mrb[0].mxu0
  %v791 = vadd.f32 0.0, %v790
  %v792 = vpop.f32.mrb[0].mxu0
  %v793 = vadd.f32 0.0, %v792
  %v794 = vpop.f32.mrb[0].mxu0
  %v795 = vadd.f32 0.0, %v794
  %796 = vdwg.mxu0
  %797 = vmatprep.subr.bf16.mxu0 %v492
  %798 = vmatpush1.bf16.msra.mxu0 %v491
  %799 = vmatprep.subr.bf16.mxu0 %v506
  %800 = vmatpush1.bf16.msra.mxu0 %v505
  %801 = vmatprep.subr.bf16.mxu0 %v520
  %802 = vmatpush1.bf16.msra.mxu0 %v519
  %803 = vmatprep.subr.bf16.mxu0 %v534
  %804 = vmatpush1.bf16.msra.mxu0 %v533
  %805 = vmatprep.subr.bf16.mxu0 %v548
  %806 = vmatpush1.bf16.msra.mxu0 %v547
  %807 = vmatprep.subr.bf16.mxu0 %v562
  %808 = vmatpush1.bf16.msra.mxu0 %v561
  %809 = vmatprep.subr.bf16.mxu0 %v576
  %810 = vmatpush1.bf16.msra.mxu0 %v575
  %811 = vmatprep.subr.bf16.mxu0 %v590
  %812 = vmatpush1.bf16.msra.mxu0 %v589
  %813 = vmatprep.subr.bf16.mxu0 0
  %814 = vmatpush1.bf16.msra.mxu0 0
  %815 = vmatprep.subr.bf16.mxu0 0
  %816 = vmatpush1.bf16.msra.mxu0 0
  %817 = vmatprep.subr.bf16.mxu0 0
  %818 = vmatpush1.bf16.msra.mxu0 0
  %819 = vmatprep.subr.bf16.mxu0 0
  %820 = vmatpush1.bf16.msra.mxu0 0
  %821 = vmatprep.subr.bf16.mxu0 0
  %822 = vmatpush1.bf16.msra.mxu0 0
  %823 = vmatprep.subr.bf16.mxu0 0
  %824 = vmatpush1.bf16.msra.mxu0 0
  %825 = vmatprep.subr.bf16.mxu0 0
  %826 = vmatpush1.bf16.msra.mxu0 0
  %827 = vmatprep.subr.bf16.mxu0 0
  %828 = vmatpush1.bf16.msra.mxu0 0
  %829 = vmatprep.mubr.bf16.mxu0 0
  %830 = vmatmul.mubr.bf16.gmra.mrb[0].mxu0 %v149
  %v831 = vpop.f32.mrb[0].mxu0
  %v832 = vadd.f32 0.0, %v831
  %v833 = vpop.f32.mrb[0].mxu0
  %v834 = vadd.f32 0.0, %v833
  %v835 = vpop.f32.mrb[0].mxu0
  %v836 = vadd.f32 0.0, %v835
  %v837 = vpop.f32.mrb[0].mxu0
  %v838 = vadd.f32 0.0, %v837
  %839 = vdwg.mxu0
  %840 = vmatprep.subr.bf16.mxu0 %v494
  %841 = vmatpush1.bf16.msra.mxu0 %v493
  %842 = vmatprep.subr.bf16.mxu0 %v508
  %843 = vmatpush1.bf16.msra.mxu0 %v507
  %844 = vmatprep.subr.bf16.mxu0 %v522
  %845 = vmatpush1.bf16.msra.mxu0 %v521
  %846 = vmatprep.subr.bf16.mxu0 %v536
  %847 = vmatpush1.bf16.msra.mxu0 %v535
  %848 = vmatprep.subr.bf16.mxu0 %v550
  %849 = vmatpush1.bf16.msra.mxu0 %v549
  %850 = vmatprep.subr.bf16.mxu0 %v564
  %851 = vmatpush1.bf16.msra.mxu0 %v563
  %852 = vmatprep.subr.bf16.mxu0 %v578
  %853 = vmatpush1.bf16.msra.mxu0 %v577
  %854 = vmatprep.subr.bf16.mxu0 %v592
  %855 = vmatpush1.bf16.msra.mxu0 %v591
  %856 = vmatprep.subr.bf16.mxu0 0
  %857 = vmatpush1.bf16.msra.mxu0 0
  %858 = vmatprep.subr.bf16.mxu0 0
  %859 = vmatpush1.bf16.msra.mxu0 0
  %860 = vmatprep.subr.bf16.mxu0 0
  %861 = vmatpush1.bf16.msra.mxu0 0
  %862 = vmatprep.subr.bf16.mxu0 0
  %863 = vmatpush1.bf16.msra.mxu0 0
  %864 = vmatprep.subr.bf16.mxu0 0
  %865 = vmatpush1.bf16.msra.mxu0 0
  %866 = vmatprep.subr.bf16.mxu0 0
  %867 = vmatpush1.bf16.msra.mxu0 0
  %868 = vmatprep.subr.bf16.mxu0 0
  %869 = vmatpush1.bf16.msra.mxu0 0
  %870 = vmatprep.subr.bf16.mxu0 0
  %871 = vmatpush1.bf16.msra.mxu0 0
  %872 = vmatprep.mubr.bf16.mxu0 0
  %873 = vmatmul.mubr.bf16.gmra.mrb[0].mxu0 %v149
  %v874 = vpop.f32.mrb[0].mxu0
  %v875 = vadd.f32 0.0, %v874
  %v876 = vpop.f32.mrb[0].mxu0
  %v877 = vadd.f32 0.0, %v876
  %v878 = vpop.f32.mrb[0].mxu0
  %v879 = vadd.f32 0.0, %v878
  %v880 = vpop.f32.mrb[0].mxu0
  %v881 = vadd.f32 0.0, %v880
  %882 = vdwg.mxu0
  %883 = vmatprep.subr.bf16.mxu0 %v496
  %884 = vmatpush1.bf16.msra.mxu0 %v495
  %885 = vmatprep.subr.bf16.mxu0 %v510
  %886 = vmatpush1.bf16.msra.mxu0 %v509
  %887 = vmatprep.subr.bf16.mxu0 %v524
  %888 = vmatpush1.bf16.msra.mxu0 %v523
  %889 = vmatprep.subr.bf16.mxu0 %v538
  %890 = vmatpush1.bf16.msra.mxu0 %v537
  %891 = vmatprep.subr.bf16.mxu0 %v552
  %892 = vmatpush1.bf16.msra.mxu0 %v551
  %893 = vmatprep.subr.bf16.mxu0 %v566
  %894 = vmatpush1.bf16.msra.mxu0 %v565
  %895 = vmatprep.subr.bf16.mxu0 %v580
  %896 = vmatpush1.bf16.msra.mxu0 %v579
  %897 = vmatprep.subr.bf16.mxu0 %v594
  %898 = vmatpush1.bf16.msra.mxu0 %v593
  %899 = vmatprep.subr.bf16.mxu0 0
  %900 = vmatpush1.bf16.msra.mxu0 0
  %901 = vmatprep.subr.bf16.mxu0 0
  %902 = vmatpush1.bf16.msra.mxu0 0
  %903 = vmatprep.subr.bf16.mxu0 0
  %904 = vmatpush1.bf16.msra.mxu0 0
  %905 = vmatprep.subr.bf16.mxu0 0
  %906 = vmatpush1.bf16.msra.mxu0 0
  %907 = vmatprep.subr.bf16.mxu0 0
  %908 = vmatpush1.bf16.msra.mxu0 0
  %909 = vmatprep.subr.bf16.mxu0 0
  %910 = vmatpush1.bf16.msra.mxu0 0
  %911 = vmatprep.subr.bf16.mxu0 0
  %912 = vmatpush1.bf16.msra.mxu0 0
  %913 = vmatprep.subr.bf16.mxu0 0
  %914 = vmatpush1.bf16.msra.mxu0 0
  %915 = vmatprep.mubr.bf16.mxu0 0
  %916 = vmatmul.mubr.bf16.gmra.mrb[0].mxu0 %v149
  %v917 = vpop.f32.mrb[0].mxu0
  %v918 = vadd.f32 0.0, %v917
  %v919 = vpop.f32.mrb[0].mxu0
  %v920 = vadd.f32 0.0, %v919
  %v921 = vpop.f32.mrb[0].mxu0
  %v922 = vadd.f32 0.0, %v921
  %v923 = vpop.f32.mrb[0].mxu0
  %v924 = vadd.f32 0.0, %v923
  %925 = vdwg.mxu0
  %926 = vmatprep.subr.bf16.mxu0 %v498
  %927 = vmatpush1.bf16.msra.mxu0 %v497
  %928 = vmatprep.subr.bf16.mxu0 %v512
  %929 = vmatpush1.bf16.msra.mxu0 %v511
  %930 = vmatprep.subr.bf16.mxu0 %v526
  %931 = vmatpush1.bf16.msra.mxu0 %v525
  %932 = vmatprep.subr.bf16.mxu0 %v540
  %933 = vmatpush1.bf16.msra.mxu0 %v539
  %934 = vmatprep.subr.bf16.mxu0 %v554
  %935 = vmatpush1.bf16.msra.mxu0 %v553
  %936 = vmatprep.subr.bf16.mxu0 %v568
  %937 = vmatpush1.bf16.msra.mxu0 %v567
  %938 = vmatprep.subr.bf16.mxu0 %v582
  %939 = vmatpush1.bf16.msra.mxu0 %v581
  %940 = vmatprep.subr.bf16.mxu0 %v596
  %941 = vmatpush1.bf16.msra.mxu0 %v595
  %942 = vmatprep.subr.bf16.mxu0 0
  %943 = vmatpush1.bf16.msra.mxu0 0
  %944 = vmatprep.subr.bf16.mxu0 0
  %945 = vmatpush1.bf16.msra.mxu0 0
  %946 = vmatprep.subr.bf16.mxu0 0
  %947 = vmatpush1.bf16.msra.mxu0 0
  %948 = vmatprep.subr.bf16.mxu0 0
  %949 = vmatpush1.bf16.msra.mxu0 0
  %950 = vmatprep.subr.bf16.mxu0 0
  %951 = vmatpush1.bf16.msra.mxu0 0
  %952 = vmatprep.subr.bf16.mxu0 0
  %953 = vmatpush1.bf16.msra.mxu0 0
  %954 = vmatprep.subr.bf16.mxu0 0
  %955 = vmatpush1.bf16.msra.mxu0 0
  %956 = vmatprep.subr.bf16.mxu0 0
  %957 = vmatpush1.bf16.msra.mxu0 0
  %958 = vmatprep.mubr.bf16.mxu0 0
  %959 = vmatmul.mubr.bf16.gmra.mrb[0].mxu0 %v149
  %v960 = vpop.f32.mrb[0].mxu0
  %v961 = vadd.f32 0.0, %v960
  %v962 = vpop.f32.mrb[0].mxu0
  %v963 = vadd.f32 0.0, %v962
  %v964 = vpop.f32.mrb[0].mxu0
  %v965 = vadd.f32 0.0, %v964
  %v966 = vpop.f32.mrb[0].mxu0
  %v967 = vadd.f32 0.0, %v966
  %968 = vdwg.mxu0
  %969 = vmatprep.subr.bf16.mxu0 %v500
  %970 = vmatpush1.bf16.msra.mxu0 %v499
  %971 = vmatprep.subr.bf16.mxu0 %v514
  %972 = vmatpush1.bf16.msra.mxu0 %v513
  %973 = vmatprep.subr.bf16.mxu0 %v528
  %974 = vmatpush1.bf16.msra.mxu0 %v527
  %975 = vmatprep.subr.bf16.mxu0 %v542
  %976 = vmatpush1.bf16.msra.mxu0 %v541
  %977 = vmatprep.subr.bf16.mxu0 %v556
  %978 = vmatpush1.bf16.msra.mxu0 %v555
  %979 = vmatprep.subr.bf16.mxu0 %v570
  %980 = vmatpush1.bf16.msra.mxu0 %v569
  %981 = vmatprep.subr.bf16.mxu0 %v584
  %982 = vmatpush1.bf16.msra.mxu0 %v583
  %983 = vmatprep.subr.bf16.mxu0 %v598
  %984 = vmatpush1.bf16.msra.mxu0 %v597
  %985 = vmatprep.subr.bf16.mxu0 0
  %986 = vmatpush1.bf16.msra.mxu0 0
  %987 = vmatprep.subr.bf16.mxu0 0
  %988 = vmatpush1.bf16.msra.mxu0 0
  %989 = vmatprep.subr.bf16.mxu0 0
  %990 = vmatpush1.bf16.msra.mxu0 0
  %991 = vmatprep.subr.bf16.mxu0 0
  %992 = vmatpush1.bf16.msra.mxu0 0
  %993 = vmatprep.subr.bf16.mxu0 0
  %994 = vmatpush1.bf16.msra.mxu0 0
  %995 = vmatprep.subr.bf16.mxu0 0
  %996 = vmatpush1.bf16.msra.mxu0 0
  %997 = vmatprep.subr.bf16.mxu0 0
  %998 = vmatpush1.bf16.msra.mxu0 0
  %999 = vmatprep.subr.bf16.mxu0 0
  %1000 = vmatpush1.bf16.msra.mxu0 0
  %1001 = vmatprep.mubr.bf16.mxu0 0
  %1002 = vmatmul.mubr.bf16.gmra.mrb[0].mxu0 %v149
  %v1003 = vpop.f32.mrb[0].mxu0
  %v1004 = vadd.f32 0.0, %v1003
  %v1005 = vpop.f32.mrb[0].mxu0
  %v1006 = vadd.f32 0.0, %v1005
  %v1007 = vpop.f32.mrb[0].mxu0
  %v1008 = vadd.f32 0.0, %v1007
  %v1009 = vpop.f32.mrb[0].mxu0
  %v1010 = vadd.f32 0.0, %v1009
  %1011 = vdwg.mxu0
  %v1012 = vpack.c.bf16 %v750, %v746
  %v1013 = vpack.c.bf16 %v752, %v748
  %v1014 = vpack.c.bf16 %v793, %v789
  %v1015 = vpack.c.bf16 %v795, %v791
  %v1016 = vpack.c.bf16 %v836, %v832
  %v1017 = vpack.c.bf16 %v838, %v834
  %v1018 = vpack.c.bf16 %v879, %v875
  %v1019 = vpack.c.bf16 %v881, %v877
  %v1020 = vpack.c.bf16 %v922, %v918
  %v1021 = vpack.c.bf16 %v924, %v920
  %v1022 = vpack.c.bf16 %v965, %v961
  %v1023 = vpack.c.bf16 %v967, %v963
  %v1024 = vpack.c.bf16 %v1008, %v1004
  %v1025 = vpack.c.bf16 %v1010, %v1006
  %v1026 = vld [vmem:[%s2] sm:$0xff]
  %v1027 = vld [vmem:[%s2 + $0x8] sm:$0x3f]
  %v1030 = vcombine.high %v1026, %v1026
  %v1032 = vunpack.c.l.s4 1966171168
  %v1033 = vunpack.c.0.s8 %v1032
  %v1034 = vlaneseq
  %v1035 = vshrl.u32 %v1034, 7
  %v1036 = vsub.s32 %v1033, %v1035
  %v1037 = vrot.slane %v1026, %v1036
  %v1039 = vunpack.c.l.s4 1966171168
  %v1040 = vunpack.c.0.s8 %v1039
  %v1041 = vlaneseq
  %v1042 = vshrl.u32 %v1041, 7
  %v1043 = vsub.s32 %v1040, %v1042
  %v1044 = vrot.slane %v1030, %v1043
  %v1045 = vcombine.high %v1037, %v1037
  %v1046 = vcombine.high %v1044, %v1044
  %v1048 = vunpack.c.l.s4 1966171168
  %v1049 = vunpack.c.0.s8 %v1048
  %v1050 = vlaneseq
  %v1051 = vshrl.u32 %v1050, 7
  %v1052 = vsub.s32 %v1049, %v1051
  %v1053 = vrot.slane %v1037, %v1052
  %v1055 = vunpack.c.l.s4 1966171168
  %v1056 = vunpack.c.0.s8 %v1055
  %v1057 = vlaneseq
  %v1058 = vshrl.u32 %v1057, 7
  %v1059 = vsub.s32 %v1056, %v1058
  %v1060 = vrot.slane %v1044, %v1059
  %v1062 = vunpack.c.l.s4 1966171168
  %v1063 = vunpack.c.0.s8 %v1062
  %v1064 = vlaneseq
  %v1065 = vshrl.u32 %v1064, 7
  %v1066 = vsub.s32 %v1063, %v1065
  %v1067 = vrot.slane %v1045, %v1066
  %v1069 = vunpack.c.l.s4 1966171168
  %v1070 = vunpack.c.0.s8 %v1069
  %v1071 = vlaneseq
  %v1072 = vshrl.u32 %v1071, 7
  %v1073 = vsub.s32 %v1070, %v1072
  %v1074 = vrot.slane %v1046, %v1073
  %v1075 = vcombine.high %v1053, %v1053
  %v1076 = vcombine.high %v1060, %v1060
  %v1077 = vcombine.high %v1067, %v1067
  %v1078 = vcombine.high %v1074, %v1074
  %v1079 = vcombine.high %v1027, %v1027
  %v1081 = vunpack.c.l.s4 1966171168
  %v1082 = vunpack.c.0.s8 %v1081
  %v1083 = vlaneseq
  %v1084 = vshrl.u32 %v1083, 7
  %v1085 = vsub.s32 %v1082, %v1084
  %v1086 = vrot.slane %v1027, %v1085
  %v1088 = vunpack.c.l.s4 1966171168
  %v1089 = vunpack.c.0.s8 %v1088
  %v1090 = vlaneseq
  %v1091 = vshrl.u32 %v1090, 7
  %v1092 = vsub.s32 %v1089, %v1091
  %v1093 = vrot.slane %v1079, %v1092
  %v1094 = vcombine.high %v1086, %v1086
  %v1095 = vcombine.high %v1093, %v1093
  %v1097 = vunpack.c.l.s4 1966171168
  %v1098 = vunpack.c.0.s8 %v1097
  %v1099 = vlaneseq
  %v1100 = vshrl.u32 %v1099, 7
  %v1101 = vsub.s32 %v1098, %v1100
  %v1102 = vrot.slane %v1086, %v1101
  %v1104 = vunpack.c.l.s4 1966171168
  %v1105 = vunpack.c.0.s8 %v1104
  %v1106 = vlaneseq
  %v1107 = vshrl.u32 %v1106, 7
  %v1108 = vsub.s32 %v1105, %v1107
  %v1109 = vrot.slane %v1093, %v1108
  %v1111 = vunpack.c.l.s4 1966171168
  %v1112 = vunpack.c.0.s8 %v1111
  %v1113 = vlaneseq
  %v1114 = vshrl.u32 %v1113, 7
  %v1115 = vsub.s32 %v1112, %v1114
  %v1116 = vrot.slane %v1094, %v1115
  %v1118 = vunpack.c.l.s4 1966171168
  %v1119 = vunpack.c.0.s8 %v1118
  %v1120 = vlaneseq
  %v1121 = vshrl.u32 %v1120, 7
  %v1122 = vsub.s32 %v1119, %v1121
  %v1123 = vrot.slane %v1095, %v1122
  %v1124 = vcombine.high %v1102, %v1102
  %v1125 = vcombine.high %v1116, %v1116
  %v1127 = vpack.i.b16 %v1053, %v1053
  %v1129 = vlaneseq
  %v1130 = vshrl.u32 %v1129, 7
  %v1131 = vsub.s32 0, %v1130
  %v1132 = vrot.slane %v1127, %v1131
  %v1134 = vpack.i.b16 %v1067, %v1067
  %v1136 = vlaneseq
  %v1137 = vshrl.u32 %v1136, 7
  %v1138 = vsub.s32 0, %v1137
  %v1139 = vrot.slane %v1134, %v1138
  %v1141 = vpack.i.b16 %v1075, %v1075
  %v1143 = vlaneseq
  %v1144 = vshrl.u32 %v1143, 7
  %v1145 = vsub.s32 0, %v1144
  %v1146 = vrot.slane %v1141, %v1145
  %v1148 = vpack.i.b16 %v1077, %v1077
  %v1150 = vlaneseq
  %v1151 = vshrl.u32 %v1150, 7
  %v1152 = vsub.s32 0, %v1151
  %v1153 = vrot.slane %v1148, %v1152
  %v1155 = vpack.i.b16 %v1060, %v1060
  %v1157 = vlaneseq
  %v1158 = vshrl.u32 %v1157, 7
  %v1159 = vsub.s32 0, %v1158
  %v1160 = vrot.slane %v1155, %v1159
  %v1162 = vpack.i.b16 %v1074, %v1074
  %v1164 = vlaneseq
  %v1165 = vshrl.u32 %v1164, 7
  %v1166 = vsub.s32 0, %v1165
  %v1167 = vrot.slane %v1162, %v1166
  %v1169 = vpack.i.b16 %v1076, %v1076
  %v1171 = vlaneseq
  %v1172 = vshrl.u32 %v1171, 7
  %v1173 = vsub.s32 0, %v1172
  %v1174 = vrot.slane %v1169, %v1173
  %v1176 = vpack.i.b16 %v1078, %v1078
  %v1178 = vlaneseq
  %v1179 = vshrl.u32 %v1178, 7
  %v1180 = vsub.s32 0, %v1179
  %v1181 = vrot.slane %v1176, %v1180
  %v1183 = vpack.i.b16 %v1102, %v1102
  %v1185 = vlaneseq
  %v1186 = vshrl.u32 %v1185, 7
  %v1187 = vsub.s32 0, %v1186
  %v1188 = vrot.slane %v1183, %v1187
  %v1190 = vpack.i.b16 %v1116, %v1116
  %v1192 = vlaneseq
  %v1193 = vshrl.u32 %v1192, 7
  %v1194 = vsub.s32 0, %v1193
  %v1195 = vrot.slane %v1190, %v1194
  %v1197 = vpack.i.b16 %v1124, %v1124
  %v1199 = vlaneseq
  %v1200 = vshrl.u32 %v1199, 7
  %v1201 = vsub.s32 0, %v1200
  %v1202 = vrot.slane %v1197, %v1201
  %v1204 = vpack.i.b16 %v1125, %v1125
  %v1206 = vlaneseq
  %v1207 = vshrl.u32 %v1206, 7
  %v1208 = vsub.s32 0, %v1207
  %v1209 = vrot.slane %v1204, %v1208
  %v1211 = vpack.i.b16 %v1109, %v1109
  %v1213 = vlaneseq
  %v1214 = vshrl.u32 %v1213, 7
  %v1215 = vsub.s32 0, %v1214
  %v1216 = vrot.slane %v1211, %v1215
  %v1218 = vpack.i.b16 %v1123, %v1123
  %v1220 = vlaneseq
  %v1221 = vshrl.u32 %v1220, 7
  %v1222 = vsub.s32 0, %v1221
  %v1223 = vrot.slane %v1218, %v1222
  %v1224 = vadd.bf16 %v1012, %v1132
  %v1225 = vadd.bf16 %v1013, %v1139
  %v1226 = vadd.bf16 %v1014, %v1146
  %v1227 = vadd.bf16 %v1015, %v1153
  %v1228 = vadd.bf16 %v1016, %v1160
  %v1229 = vadd.bf16 %v1017, %v1167
  %v1230 = vadd.bf16 %v1018, %v1174
  %v1231 = vadd.bf16 %v1019, %v1181
  %v1232 = vadd.bf16 %v1020, %v1188
  %v1233 = vadd.bf16 %v1021, %v1195
  %v1234 = vadd.bf16 %v1022, %v1202
  %v1235 = vadd.bf16 %v1023, %v1209
  %v1236 = vadd.bf16 %v1024, %v1216
  %v1237 = vadd.bf16 %v1025, %v1223
  %v1238 = vmax.bf16 %v1224, 0
  %v1239 = vmax.bf16 %v1225, 0
  %v1240 = vmax.bf16 %v1226, 0
  %v1241 = vmax.bf16 %v1227, 0
  %v1242 = vmax.bf16 %v1228, 0
  %v1243 = vmax.bf16 %v1229, 0
  %v1244 = vmax.bf16 %v1230, 0
  %v1245 = vmax.bf16 %v1231, 0
  %v1246 = vmax.bf16 %v1232, 0
  %v1247 = vmax.bf16 %v1233, 0
  %v1248 = vmax.bf16 %v1234, 0
  %v1249 = vmax.bf16 %v1235, 0
  %v1250 = vmax.bf16 %v1236, 0
  %v1251 = vmax.bf16 %v1237, 0
  %v1252 = vld [vmem:[%s3] sm:$0xff]
  %v1253 = vld [vmem:[%s3 + $0x8] sm:$0xff]
  %v1254 = vld [vmem:[%s3 + $0x10] sm:$0xff]
  %v1255 = vld [vmem:[%s3 + $0x18] sm:$0xff]
  %v1256 = vld [vmem:[%s3 + $0x20] sm:$0xff]
  %v1257 = vld [vmem:[%s3 + $0x28] sm:$0xff]
  %v1258 = vld [vmem:[%s3 + $0x30] sm:$0xff]
  %v1259 = vld [vmem:[%s3 + $0x38] sm:$0xff]
  %v1260 = vld [vmem:[%s3 + $0x40] sm:$0xff]
  %v1261 = vld [vmem:[%s3 + $0x48] sm:$0xff]
  %v1262 = vld [vmem:[%s3 + $0x50] sm:$0xff]
  %v1263 = vld [vmem:[%s3 + $0x58] sm:$0xff]
  %v1264 = vld [vmem:[%s3 + $0x60] sm:$0xff]
  %v1265 = vld [vmem:[%s3 + $0x68] sm:$0xff]
  %v1266 = vld [vmem:[%s3 + $0x70] sm:$0xff]
  %v1267 = vld [vmem:[%s3 + $0x78] sm:$0xff]
  %v1268 = vld [vmem:[%s3 + $0x80] sm:$0xff]
  %v1269 = vld [vmem:[%s3 + $0x88] sm:$0xff]
  %v1270 = vld [vmem:[%s3 + $0x90] sm:$0xff]
  %v1271 = vld [vmem:[%s3 + $0x98] sm:$0xff]
  %v1272 = vld [vmem:[%s3 + $0xa0] sm:$0xff]
  %v1273 = vld [vmem:[%s3 + $0xa8] sm:$0xff]
  %v1274 = vld [vmem:[%s3 + $0xb0] sm:$0xff]
  %v1275 = vld [vmem:[%s3 + $0xb8] sm:$0xff]
  %v1276 = vld [vmem:[%s3 + $0xc0] sm:$0xff]
  %v1277 = vld [vmem:[%s3 + $0xc8] sm:$0xff]
  %v1278 = vld [vmem:[%s3 + $0xd0] sm:$0xff]
  %v1279 = vld [vmem:[%s3 + $0xd8] sm:$0xff]
  %v1280 = vld [vmem:[%s3 + $0xe0] sm:$0xff]
  %v1281 = vld [vmem:[%s3 + $0xe8] sm:$0xff]
  %v1282 = vld [vmem:[%s3 + $0xf0] sm:$0xff]
  %v1283 = vld [vmem:[%s3 + $0xf8] sm:$0xff]
  %v1284 = vld [vmem:[%s3 + $0x100] sm:$0xff]
  %v1285 = vld [vmem:[%s3 + $0x108] sm:$0xff]
  %v1286 = vld [vmem:[%s3 + $0x110] sm:$0xff]
  %v1287 = vld [vmem:[%s3 + $0x118] sm:$0xff]
  %v1288 = vld [vmem:[%s3 + $0x120] sm:$0xff]
  %v1289 = vld [vmem:[%s3 + $0x128] sm:$0xff]
  %v1290 = vld [vmem:[%s3 + $0x130] sm:$0xff]
  %v1291 = vld [vmem:[%s3 + $0x138] sm:$0xff]
  %v1292 = vld [vmem:[%s3 + $0x140] sm:$0xff]
  %v1293 = vld [vmem:[%s3 + $0x148] sm:$0xff]
  %v1294 = vld [vmem:[%s3 + $0x150] sm:$0xff]
  %v1295 = vld [vmem:[%s3 + $0x158] sm:$0xff]
  %v1296 = vld [vmem:[%s3 + $0x160] sm:$0xff]
  %v1297 = vld [vmem:[%s3 + $0x168] sm:$0xff]
  %v1298 = vld [vmem:[%s3 + $0x170] sm:$0xff]
  %v1299 = vld [vmem:[%s3 + $0x178] sm:$0xff]
  %v1300 = vld [vmem:[%s3 + $0x180] sm:$0xff]
  %v1301 = vld [vmem:[%s3 + $0x188] sm:$0xff]
  %v1302 = vld [vmem:[%s3 + $0x190] sm:$0xff]
  %v1303 = vld [vmem:[%s3 + $0x198] sm:$0xff]
  %v1304 = vld [vmem:[%s3 + $0x1a0] sm:$0xff]
  %v1305 = vld [vmem:[%s3 + $0x1a8] sm:$0xff]
  %v1306 = vld [vmem:[%s3 + $0x1b0] sm:$0xff]
  %v1307 = vld [vmem:[%s3 + $0x1b8] sm:$0xff]
  %v1308 = vld [vmem:[%s3 + $0x1c0] sm:$0xff]
  %v1309 = vld [vmem:[%s3 + $0x1c8] sm:$0xff]
  %v1310 = vld [vmem:[%s3 + $0x1d0] sm:$0xff]
  %v1311 = vld [vmem:[%s3 + $0x1d8] sm:$0xff]
  %v1312 = vld [vmem:[%s3 + $0x1e0] sm:$0xff]
  %v1313 = vld [vmem:[%s3 + $0x1e8] sm:$0xff]
  %v1314 = vld [vmem:[%s3 + $0x1f0] sm:$0xff]
  %v1315 = vld [vmem:[%s3 + $0x1f8] sm:$0xff]
  %v1316 = vld [vmem:[%s3 + $0x200] sm:$0xff]
  %v1317 = vld [vmem:[%s3 + $0x208] sm:$0xff]
  %v1318 = vld [vmem:[%s3 + $0x210] sm:$0xff]
  %v1319 = vld [vmem:[%s3 + $0x218] sm:$0xff]
  %v1320 = vld [vmem:[%s3 + $0x220] sm:$0xff]
  %v1321 = vld [vmem:[%s3 + $0x228] sm:$0xff]
  %v1322 = vld [vmem:[%s3 + $0x230] sm:$0xff]
  %v1323 = vld [vmem:[%s3 + $0x238] sm:$0xff]
  %v1324 = vld [vmem:[%s3 + $0x240] sm:$0xff]
  %v1325 = vld [vmem:[%s3 + $0x248] sm:$0xff]
  %v1326 = vld [vmem:[%s3 + $0x250] sm:$0xff]
  %v1327 = vld [vmem:[%s3 + $0x258] sm:$0xff]
  %v1328 = vld [vmem:[%s3 + $0x260] sm:$0xff]
  %v1329 = vld [vmem:[%s3 + $0x268] sm:$0xff]
  %v1330 = vld [vmem:[%s3 + $0x270] sm:$0xff]
  %v1331 = vld [vmem:[%s3 + $0x278] sm:$0xff]
  %v1332 = vld [vmem:[%s3 + $0x280] sm:$0xff]
  %v1333 = vld [vmem:[%s3 + $0x288] sm:$0xff]
  %v1334 = vld [vmem:[%s3 + $0x290] sm:$0xff]
  %v1335 = vld [vmem:[%s3 + $0x298] sm:$0xff]
  %v1336 = vld [vmem:[%s3 + $0x2a0] sm:$0xff]
  %v1337 = vld [vmem:[%s3 + $0x2a8] sm:$0xff]
  %v1338 = vld [vmem:[%s3 + $0x2b0] sm:$0xff]
  %v1339 = vld [vmem:[%s3 + $0x2b8] sm:$0xff]
  %v1340 = vld [vmem:[%s3 + $0x2c0] sm:$0xff]
  %v1341 = vld [vmem:[%s3 + $0x2c8] sm:$0xff]
  %v1342 = vld [vmem:[%s3 + $0x2d0] sm:$0xff]
  %v1343 = vld [vmem:[%s3 + $0x2d8] sm:$0xff]
  %v1344 = vld [vmem:[%s3 + $0x2e0] sm:$0xff]
  %v1345 = vld [vmem:[%s3 + $0x2e8] sm:$0xff]
  %v1346 = vld [vmem:[%s3 + $0x2f0] sm:$0xff]
  %v1347 = vld [vmem:[%s3 + $0x2f8] sm:$0xff]
  %v1348 = vld [vmem:[%s3 + $0x300] sm:$0xff]
  %v1349 = vld [vmem:[%s3 + $0x308] sm:$0xff]
  %v1350 = vld [vmem:[%s3 + $0x310] sm:$0xff]
  %v1351 = vld [vmem:[%s3 + $0x318] sm:$0xff]
  %v1352 = vld [vmem:[%s3 + $0x320] sm:$0xff]
  %v1353 = vld [vmem:[%s3 + $0x328] sm:$0xff]
  %v1354 = vld [vmem:[%s3 + $0x330] sm:$0xff]
  %v1355 = vld [vmem:[%s3 + $0x338] sm:$0xff]
  %v1356 = vld [vmem:[%s3 + $0x340] sm:$0xff]
  %v1357 = vld [vmem:[%s3 + $0x348] sm:$0xff]
  %v1358 = vld [vmem:[%s3 + $0x350] sm:$0xff]
  %v1359 = vld [vmem:[%s3 + $0x358] sm:$0xff]
  %v1360 = vld [vmem:[%s3 + $0x360] sm:$0xff]
  %v1361 = vld [vmem:[%s3 + $0x368] sm:$0xff]
  %v1362 = vld [vmem:[%s3 + $0x370] sm:$0xff]
  %v1363 = vld [vmem:[%s3 + $0x378] sm:$0xff]
  %v1364 = vld [vmem:[%s3 + $0x380] sm:$0xff]
  %v1365 = vld [vmem:[%s3 + $0x388] sm:$0xff]
  %v1366 = vld [vmem:[%s3 + $0x390] sm:$0xff]
  %v1367 = vld [vmem:[%s3 + $0x398] sm:$0xff]
  %v1368 = vld [vmem:[%s3 + $0x3a0] sm:$0xff]
  %v1369 = vld [vmem:[%s3 + $0x3a8] sm:$0xff]
  %v1370 = vld [vmem:[%s3 + $0x3b0] sm:$0xff]
  %v1371 = vld [vmem:[%s3 + $0x3b8] sm:$0xff]
  %v1372 = vld [vmem:[%s3 + $0x3c0] sm:$0xff]
  %v1373 = vld [vmem:[%s3 + $0x3c8] sm:$0xff]
  %v1374 = vld [vmem:[%s3 + $0x3d0] sm:$0xff]
  %v1375 = vld [vmem:[%s3 + $0x3d8] sm:$0xff]
  %v1376 = vld [vmem:[%s3 + $0x3e0] sm:$0xff]
  %v1377 = vld [vmem:[%s3 + $0x3e8] sm:$0xff]
  %v1378 = vld [vmem:[%s3 + $0x3f0] sm:$0xff]
  %v1379 = vld [vmem:[%s3 + $0x3f8] sm:$0xff]
  %v1380 = vld [vmem:[%s3 + $0x400] sm:$0xff]
  %v1381 = vld [vmem:[%s3 + $0x408] sm:$0xff]
  %v1382 = vld [vmem:[%s3 + $0x410] sm:$0xff]
  %v1383 = vld [vmem:[%s3 + $0x418] sm:$0xff]
  %v1384 = vld [vmem:[%s3 + $0x420] sm:$0xff]
  %v1385 = vld [vmem:[%s3 + $0x428] sm:$0xff]
  %v1386 = vld [vmem:[%s3 + $0x430] sm:$0xff]
  %v1387 = vld [vmem:[%s3 + $0x438] sm:$0xff]
  %v1388 = vld [vmem:[%s3 + $0x440] sm:$0xff]
  %v1389 = vld [vmem:[%s3 + $0x448] sm:$0xff]
  %v1390 = vld [vmem:[%s3 + $0x450] sm:$0xff]
  %v1391 = vld [vmem:[%s3 + $0x458] sm:$0xff]
  %v1392 = vld [vmem:[%s3 + $0x460] sm:$0xff]
  %v1393 = vld [vmem:[%s3 + $0x468] sm:$0xff]
  %v1394 = vld [vmem:[%s3 + $0x470] sm:$0xff]
  %v1395 = vld [vmem:[%s3 + $0x478] sm:$0xff]
  %v1396 = vld [vmem:[%s3 + $0x480] sm:$0xff]
  %v1397 = vld [vmem:[%s3 + $0x488] sm:$0xff]
  %v1398 = vld [vmem:[%s3 + $0x490] sm:$0xff]
  %v1399 = vld [vmem:[%s3 + $0x498] sm:$0xff]
  %v1400 = vld [vmem:[%s3 + $0x4a0] sm:$0xff]
  %v1401 = vld [vmem:[%s3 + $0x4a8] sm:$0xff]
  %v1402 = vld [vmem:[%s3 + $0x4b0] sm:$0xff]
  %v1403 = vld [vmem:[%s3 + $0x4b8] sm:$0xff]
  %v1404 = vld [vmem:[%s3 + $0x4c0] sm:$0xff]
  %v1405 = vld [vmem:[%s3 + $0x4c8] sm:$0xff]
  %v1406 = vld [vmem:[%s3 + $0x4d0] sm:$0xff]
  %v1407 = vld [vmem:[%s3 + $0x4d8] sm:$0xff]
  %v1408 = vld [vmem:[%s3 + $0x4e0] sm:$0xff]
  %v1409 = vld [vmem:[%s3 + $0x4e8] sm:$0xff]
  %v1410 = vld [vmem:[%s3 + $0x4f0] sm:$0xff]
  %v1411 = vld [vmem:[%s3 + $0x4f8] sm:$0xff]
  %v1412 = vld [vmem:[%s3 + $0x500] sm:$0xff]
  %v1413 = vld [vmem:[%s3 + $0x508] sm:$0xff]
  %v1414 = vld [vmem:[%s3 + $0x510] sm:$0xff]
  %v1415 = vld [vmem:[%s3 + $0x518] sm:$0xff]
  %v1416 = vld [vmem:[%s3 + $0x520] sm:$0xff]
  %v1417 = vld [vmem:[%s3 + $0x528] sm:$0xff]
  %v1418 = vld [vmem:[%s3 + $0x530] sm:$0xff]
  %v1419 = vld [vmem:[%s3 + $0x538] sm:$0xff]
  %v1420 = vld [vmem:[%s3 + $0x540] sm:$0xff]
  %v1421 = vld [vmem:[%s3 + $0x548] sm:$0xff]
  %v1422 = vld [vmem:[%s3 + $0x550] sm:$0xff]
  %v1423 = vld [vmem:[%s3 + $0x558] sm:$0xff]
  %v1424 = vld [vmem:[%s3 + $0x560] sm:$0xff]
  %v1425 = vld [vmem:[%s3 + $0x568] sm:$0xff]
  %v1426 = vld [vmem:[%s3 + $0x570] sm:$0xff]
  %v1427 = vld [vmem:[%s3 + $0x578] sm:$0xff]
  %v1428 = vld [vmem:[%s3 + $0x580] sm:$0xff]
  %v1429 = vld [vmem:[%s3 + $0x588] sm:$0xff]
  %v1430 = vld [vmem:[%s3 + $0x590] sm:$0xff]
  %v1431 = vld [vmem:[%s3 + $0x598] sm:$0xff]
  %v1432 = vld [vmem:[%s3 + $0x5a0] sm:$0xff]
  %v1433 = vld [vmem:[%s3 + $0x5a8] sm:$0xff]
  %v1434 = vld [vmem:[%s3 + $0x5b0] sm:$0xff]
  %v1435 = vld [vmem:[%s3 + $0x5b8] sm:$0xff]
  %v1436 = vld [vmem:[%s3 + $0x5c0] sm:$0xff]
  %v1437 = vld [vmem:[%s3 + $0x5c8] sm:$0xff]
  %v1438 = vld [vmem:[%s3 + $0x5d0] sm:$0xff]
  %v1439 = vld [vmem:[%s3 + $0x5d8] sm:$0xff]
  %v1440 = vld [vmem:[%s3 + $0x5e0] sm:$0xff]
  %v1441 = vld [vmem:[%s3 + $0x5e8] sm:$0xff]
  %v1442 = vld [vmem:[%s3 + $0x5f0] sm:$0xff]
  %v1443 = vld [vmem:[%s3 + $0x5f8] sm:$0xff]
  %v1444 = vld [vmem:[%s3 + $0x600] sm:$0xff]
  %v1445 = vld [vmem:[%s3 + $0x608] sm:$0xff]
  %v1446 = vld [vmem:[%s3 + $0x610] sm:$0xff]
  %v1447 = vld [vmem:[%s3 + $0x618] sm:$0xff]
  %v1448 = vld [vmem:[%s3 + $0x620] sm:$0xff]
  %v1449 = vld [vmem:[%s3 + $0x628] sm:$0xff]
  %v1450 = vld [vmem:[%s3 + $0x630] sm:$0xff]
  %v1451 = vld [vmem:[%s3 + $0x638] sm:$0xff]
  %v1452 = vld [vmem:[%s3 + $0x640] sm:$0xff]
  %v1453 = vld [vmem:[%s3 + $0x648] sm:$0xff]
  %v1454 = vld [vmem:[%s3 + $0x650] sm:$0xff]
  %v1455 = vld [vmem:[%s3 + $0x658] sm:$0xff]
  %v1456 = vld [vmem:[%s3 + $0x660] sm:$0xff]
  %v1457 = vld [vmem:[%s3 + $0x668] sm:$0xff]
  %v1458 = vld [vmem:[%s3 + $0x670] sm:$0xff]
  %v1459 = vld [vmem:[%s3 + $0x678] sm:$0xff]
  %v1460 = vld [vmem:[%s3 + $0x680] sm:$0xff]
  %v1461 = vld [vmem:[%s3 + $0x688] sm:$0xff]
  %v1462 = vld [vmem:[%s3 + $0x690] sm:$0xff]
  %v1463 = vld [vmem:[%s3 + $0x698] sm:$0xff]
  %v1464 = vld [vmem:[%s3 + $0x6a0] sm:$0xff]
  %v1465 = vld [vmem:[%s3 + $0x6a8] sm:$0xff]
  %v1466 = vld [vmem:[%s3 + $0x6b0] sm:$0xff]
  %v1467 = vld [vmem:[%s3 + $0x6b8] sm:$0xff]
  %v1468 = vld [vmem:[%s3 + $0x6c0] sm:$0xff]
  %v1469 = vld [vmem:[%s3 + $0x6c8] sm:$0xff]
  %v1470 = vld [vmem:[%s3 + $0x6d0] sm:$0xff]
  %v1471 = vld [vmem:[%s3 + $0x6d8] sm:$0xff]
  %v1472 = vld [vmem:[%s3 + $0x6e0] sm:$0xff]
  %v1473 = vld [vmem:[%s3 + $0x6e8] sm:$0xff]
  %v1474 = vld [vmem:[%s3 + $0x6f0] sm:$0xff]
  %v1475 = vld [vmem:[%s3 + $0x6f8] sm:$0xff]
  %v1700 = vunpack.c.l.b16 %v1252
  %v1701 = vunpack.c.h.b16 %v1252
  %v1702 = vunpack.c.l.b16 %v1253
  %v1703 = vunpack.c.h.b16 %v1253
  %v1704 = vunpack.c.l.b16 %v1254
  %v1705 = vunpack.c.h.b16 %v1254
  %v1706 = vunpack.c.l.b16 %v1255
  %v1707 = vunpack.c.h.b16 %v1255
  %v1708 = vunpack.c.l.b16 %v1256
  %v1709 = vunpack.c.h.b16 %v1256
  %v1710 = vunpack.c.l.b16 %v1257
  %v1711 = vunpack.c.h.b16 %v1257
  %v1712 = vunpack.c.l.b16 %v1258
  %v1713 = vunpack.c.h.b16 %v1258
  %v1714 = vunpack.c.l.b16 %v1259
  %v1715 = vunpack.c.h.b16 %v1259
  %v1716 = vunpack.c.l.b16 %v1260
  %v1717 = vunpack.c.h.b16 %v1260
  %v1718 = vunpack.c.l.b16 %v1261
  %v1719 = vunpack.c.h.b16 %v1261
  %v1720 = vunpack.c.l.b16 %v1262
  %v1721 = vunpack.c.h.b16 %v1262
  %v1722 = vunpack.c.l.b16 %v1263
  %v1723 = vunpack.c.h.b16 %v1263
  %v1724 = vunpack.c.l.b16 %v1264
  %v1725 = vunpack.c.h.b16 %v1264
  %v1726 = vunpack.c.l.b16 %v1265
  %v1727 = vunpack.c.h.b16 %v1265
  %v1728 = vunpack.c.l.b16 %v1266
  %v1729 = vunpack.c.h.b16 %v1266
  %v1730 = vunpack.c.l.b16 %v1267
  %v1731 = vunpack.c.h.b16 %v1267
  %v1732 = vunpack.c.l.b16 %v1268
  %v1733 = vunpack.c.h.b16 %v1268
  %v1734 = vunpack.c.l.b16 %v1269
  %v1735 = vunpack.c.h.b16 %v1269
  %v1736 = vunpack.c.l.b16 %v1270
  %v1737 = vunpack.c.h.b16 %v1270
  %v1738 = vunpack.c.l.b16 %v1271
  %v1739 = vunpack.c.h.b16 %v1271
  %v1740 = vunpack.c.l.b16 %v1272
  %v1741 = vunpack.c.h.b16 %v1272
  %v1742 = vunpack.c.l.b16 %v1273
  %v1743 = vunpack.c.h.b16 %v1273
  %v1744 = vunpack.c.l.b16 %v1274
  %v1745 = vunpack.c.h.b16 %v1274
  %v1746 = vunpack.c.l.b16 %v1275
  %v1747 = vunpack.c.h.b16 %v1275
  %v1748 = vunpack.c.l.b16 %v1276
  %v1749 = vunpack.c.h.b16 %v1276
  %v1750 = vunpack.c.l.b16 %v1277
  %v1751 = vunpack.c.h.b16 %v1277
  %v1752 = vunpack.c.l.b16 %v1278
  %v1753 = vunpack.c.h.b16 %v1278
  %v1754 = vunpack.c.l.b16 %v1279
  %v1755 = vunpack.c.h.b16 %v1279
  %v1756 = vunpack.c.l.b16 %v1280
  %v1757 = vunpack.c.h.b16 %v1280
  %v1758 = vunpack.c.l.b16 %v1281
  %v1759 = vunpack.c.h.b16 %v1281
  %v1760 = vunpack.c.l.b16 %v1282
  %v1761 = vunpack.c.h.b16 %v1282
  %v1762 = vunpack.c.l.b16 %v1283
  %v1763 = vunpack.c.h.b16 %v1283
  %v1764 = vunpack.c.l.b16 %v1284
  %v1765 = vunpack.c.h.b16 %v1284
  %v1766 = vunpack.c.l.b16 %v1285
  %v1767 = vunpack.c.h.b16 %v1285
  %v1768 = vunpack.c.l.b16 %v1286
  %v1769 = vunpack.c.h.b16 %v1286
  %v1770 = vunpack.c.l.b16 %v1287
  %v1771 = vunpack.c.h.b16 %v1287
  %v1772 = vunpack.c.l.b16 %v1288
  %v1773 = vunpack.c.h.b16 %v1288
  %v1774 = vunpack.c.l.b16 %v1289
  %v1775 = vunpack.c.h.b16 %v1289
  %v1776 = vunpack.c.l.b16 %v1290
  %v1777 = vunpack.c.h.b16 %v1290
  %v1778 = vunpack.c.l.b16 %v1291
  %v1779 = vunpack.c.h.b16 %v1291
  %v1780 = vunpack.c.l.b16 %v1292
  %v1781 = vunpack.c.h.b16 %v1292
  %v1782 = vunpack.c.l.b16 %v1293
  %v1783 = vunpack.c.h.b16 %v1293
  %v1784 = vunpack.c.l.b16 %v1294
  %v1785 = vunpack.c.h.b16 %v1294
  %v1786 = vunpack.c.l.b16 %v1295
  %v1787 = vunpack.c.h.b16 %v1295
  %v1788 = vunpack.c.l.b16 %v1296
  %v1789 = vunpack.c.h.b16 %v1296
  %v1790 = vunpack.c.l.b16 %v1297
  %v1791 = vunpack.c.h.b16 %v1297
  %v1792 = vunpack.c.l.b16 %v1298
  %v1793 = vunpack.c.h.b16 %v1298
  %v1794 = vunpack.c.l.b16 %v1299
  %v1795 = vunpack.c.h.b16 %v1299
  %v1796 = vunpack.c.l.b16 %v1300
  %v1797 = vunpack.c.h.b16 %v1300
  %v1798 = vunpack.c.l.b16 %v1301
  %v1799 = vunpack.c.h.b16 %v1301
  %v1800 = vunpack.c.l.b16 %v1302
  %v1801 = vunpack.c.h.b16 %v1302
  %v1802 = vunpack.c.l.b16 %v1303
  %v1803 = vunpack.c.h.b16 %v1303
  %v1804 = vunpack.c.l.b16 %v1304
  %v1805 = vunpack.c.h.b16 %v1304
  %v1806 = vunpack.c.l.b16 %v1305
  %v1807 = vunpack.c.h.b16 %v1305
  %v1808 = vunpack.c.l.b16 %v1306
  %v1809 = vunpack.c.h.b16 %v1306
  %v1810 = vunpack.c.l.b16 %v1307
  %v1811 = vunpack.c.h.b16 %v1307
  %v1812 = vunpack.c.l.b16 %v1308
  %v1813 = vunpack.c.h.b16 %v1308
  %v1814 = vunpack.c.l.b16 %v1309
  %v1815 = vunpack.c.h.b16 %v1309
  %v1816 = vunpack.c.l.b16 %v1310
  %v1817 = vunpack.c.h.b16 %v1310
  %v1818 = vunpack.c.l.b16 %v1311
  %v1819 = vunpack.c.h.b16 %v1311
  %v1820 = vunpack.c.l.b16 %v1312
  %v1821 = vunpack.c.h.b16 %v1312
  %v1822 = vunpack.c.l.b16 %v1313
  %v1823 = vunpack.c.h.b16 %v1313
  %v1824 = vunpack.c.l.b16 %v1314
  %v1825 = vunpack.c.h.b16 %v1314
  %v1826 = vunpack.c.l.b16 %v1315
  %v1827 = vunpack.c.h.b16 %v1315
  %v1828 = vunpack.c.l.b16 %v1316
  %v1829 = vunpack.c.h.b16 %v1316
  %v1830 = vunpack.c.l.b16 %v1317
  %v1831 = vunpack.c.h.b16 %v1317
  %v1832 = vunpack.c.l.b16 %v1318
  %v1833 = vunpack.c.h.b16 %v1318
  %v1834 = vunpack.c.l.b16 %v1319
  %v1835 = vunpack.c.h.b16 %v1319
  %v1836 = vunpack.c.l.b16 %v1320
  %v1837 = vunpack.c.h.b16 %v1320
  %v1838 = vunpack.c.l.b16 %v1321
  %v1839 = vunpack.c.h.b16 %v1321
  %v1840 = vunpack.c.l.b16 %v1322
  %v1841 = vunpack.c.h.b16 %v1322
  %v1842 = vunpack.c.l.b16 %v1323
  %v1843 = vunpack.c.h.b16 %v1323
  %v1844 = vunpack.c.l.b16 %v1324
  %v1845 = vunpack.c.h.b16 %v1324
  %v1846 = vunpack.c.l.b16 %v1325
  %v1847 = vunpack.c.h.b16 %v1325
  %v1848 = vunpack.c.l.b16 %v1326
  %v1849 = vunpack.c.h.b16 %v1326
  %v1850 = vunpack.c.l.b16 %v1327
  %v1851 = vunpack.c.h.b16 %v1327
  %v1852 = vunpack.c.l.b16 %v1328
  %v1853 = vunpack.c.h.b16 %v1328
  %v1854 = vunpack.c.l.b16 %v1329
  %v1855 = vunpack.c.h.b16 %v1329
  %v1856 = vunpack.c.l.b16 %v1330
  %v1857 = vunpack.c.h.b16 %v1330
  %v1858 = vunpack.c.l.b16 %v1331
  %v1859 = vunpack.c.h.b16 %v1331
  %v1860 = vunpack.c.l.b16 %v1332
  %v1861 = vunpack.c.h.b16 %v1332
  %v1862 = vunpack.c.l.b16 %v1333
  %v1863 = vunpack.c.h.b16 %v1333
  %v1864 = vunpack.c.l.b16 %v1334
  %v1865 = vunpack.c.h.b16 %v1334
  %v1866 = vunpack.c.l.b16 %v1335
  %v1867 = vunpack.c.h.b16 %v1335
  %v1868 = vunpack.c.l.b16 %v1336
  %v1869 = vunpack.c.h.b16 %v1336
  %v1870 = vunpack.c.l.b16 %v1337
  %v1871 = vunpack.c.h.b16 %v1337
  %v1872 = vunpack.c.l.b16 %v1338
  %v1873 = vunpack.c.h.b16 %v1338
  %v1874 = vunpack.c.l.b16 %v1339
  %v1875 = vunpack.c.h.b16 %v1339
  %v1876 = vunpack.c.l.b16 %v1340
  %v1877 = vunpack.c.h.b16 %v1340
  %v1878 = vunpack.c.l.b16 %v1341
  %v1879 = vunpack.c.h.b16 %v1341
  %v1880 = vunpack.c.l.b16 %v1342
  %v1881 = vunpack.c.h.b16 %v1342
  %v1882 = vunpack.c.l.b16 %v1343
  %v1883 = vunpack.c.h.b16 %v1343
  %v1884 = vunpack.c.l.b16 %v1344
  %v1885 = vunpack.c.h.b16 %v1344
  %v1886 = vunpack.c.l.b16 %v1345
  %v1887 = vunpack.c.h.b16 %v1345
  %v1888 = vunpack.c.l.b16 %v1346
  %v1889 = vunpack.c.h.b16 %v1346
  %v1890 = vunpack.c.l.b16 %v1347
  %v1891 = vunpack.c.h.b16 %v1347
  %v1892 = vunpack.c.l.b16 %v1348
  %v1893 = vunpack.c.h.b16 %v1348
  %v1894 = vunpack.c.l.b16 %v1349
  %v1895 = vunpack.c.h.b16 %v1349
  %v1896 = vunpack.c.l.b16 %v1350
  %v1897 = vunpack.c.h.b16 %v1350
  %v1898 = vunpack.c.l.b16 %v1351
  %v1899 = vunpack.c.h.b16 %v1351
  %v1900 = vunpack.c.l.b16 %v1352
  %v1901 = vunpack.c.h.b16 %v1352
  %v1902 = vunpack.c.l.b16 %v1353
  %v1903 = vunpack.c.h.b16 %v1353
  %v1904 = vunpack.c.l.b16 %v1354
  %v1905 = vunpack.c.h.b16 %v1354
  %v1906 = vunpack.c.l.b16 %v1355
  %v1907 = vunpack.c.h.b16 %v1355
  %v1908 = vunpack.c.l.b16 %v1356
  %v1909 = vunpack.c.h.b16 %v1356
  %v1910 = vunpack.c.l.b16 %v1357
  %v1911 = vunpack.c.h.b16 %v1357
  %v1912 = vunpack.c.l.b16 %v1358
  %v1913 = vunpack.c.h.b16 %v1358
  %v1914 = vunpack.c.l.b16 %v1359
  %v1915 = vunpack.c.h.b16 %v1359
  %v1916 = vunpack.c.l.b16 %v1360
  %v1917 = vunpack.c.h.b16 %v1360
  %v1918 = vunpack.c.l.b16 %v1361
  %v1919 = vunpack.c.h.b16 %v1361
  %v1920 = vunpack.c.l.b16 %v1362
  %v1921 = vunpack.c.h.b16 %v1362
  %v1922 = vunpack.c.l.b16 %v1363
  %v1923 = vunpack.c.h.b16 %v1363
  %v1924 = vunpack.c.l.b16 %v1364
  %v1925 = vunpack.c.h.b16 %v1364
  %v1926 = vunpack.c.l.b16 %v1365
  %v1927 = vunpack.c.h.b16 %v1365
  %v1928 = vunpack.c.l.b16 %v1366
  %v1929 = vunpack.c.h.b16 %v1366
  %v1930 = vunpack.c.l.b16 %v1367
  %v1931 = vunpack.c.h.b16 %v1367
  %v1932 = vunpack.c.l.b16 %v1368
  %v1933 = vunpack.c.h.b16 %v1368
  %v1934 = vunpack.c.l.b16 %v1369
  %v1935 = vunpack.c.h.b16 %v1369
  %v1936 = vunpack.c.l.b16 %v1370
  %v1937 = vunpack.c.h.b16 %v1370
  %v1938 = vunpack.c.l.b16 %v1371
  %v1939 = vunpack.c.h.b16 %v1371
  %v1940 = vunpack.c.l.b16 %v1372
  %v1941 = vunpack.c.h.b16 %v1372
  %v1942 = vunpack.c.l.b16 %v1373
  %v1943 = vunpack.c.h.b16 %v1373
  %v1944 = vunpack.c.l.b16 %v1374
  %v1945 = vunpack.c.h.b16 %v1374
  %v1946 = vunpack.c.l.b16 %v1375
  %v1947 = vunpack.c.h.b16 %v1375
  %v1948 = vunpack.c.l.b16 %v1376
  %v1949 = vunpack.c.h.b16 %v1376
  %v1950 = vunpack.c.l.b16 %v1377
  %v1951 = vunpack.c.h.b16 %v1377
  %v1952 = vunpack.c.l.b16 %v1378
  %v1953 = vunpack.c.h.b16 %v1378
  %v1954 = vunpack.c.l.b16 %v1379
  %v1955 = vunpack.c.h.b16 %v1379
  %v1956 = vunpack.c.l.b16 %v1380
  %v1957 = vunpack.c.h.b16 %v1380
  %v1958 = vunpack.c.l.b16 %v1381
  %v1959 = vunpack.c.h.b16 %v1381
  %v1960 = vunpack.c.l.b16 %v1382
  %v1961 = vunpack.c.h.b16 %v1382
  %v1962 = vunpack.c.l.b16 %v1383
  %v1963 = vunpack.c.h.b16 %v1383
  %v1964 = vunpack.c.l.b16 %v1384
  %v1965 = vunpack.c.h.b16 %v1384
  %v1966 = vunpack.c.l.b16 %v1385
  %v1967 = vunpack.c.h.b16 %v1385
  %v1968 = vunpack.c.l.b16 %v1386
  %v1969 = vunpack.c.h.b16 %v1386
  %v1970 = vunpack.c.l.b16 %v1387
  %v1971 = vunpack.c.h.b16 %v1387
  %v1972 = vunpack.c.l.b16 %v1388
  %v1973 = vunpack.c.h.b16 %v1388
  %v1974 = vunpack.c.l.b16 %v1389
  %v1975 = vunpack.c.h.b16 %v1389
  %v1976 = vunpack.c.l.b16 %v1390
  %v1977 = vunpack.c.h.b16 %v1390
  %v1978 = vunpack.c.l.b16 %v1391
  %v1979 = vunpack.c.h.b16 %v1391
  %v1980 = vunpack.c.l.b16 %v1392
  %v1981 = vunpack.c.h.b16 %v1392
  %v1982 = vunpack.c.l.b16 %v1393
  %v1983 = vunpack.c.h.b16 %v1393
  %v1984 = vunpack.c.l.b16 %v1394
  %v1985 = vunpack.c.h.b16 %v1394
  %v1986 = vunpack.c.l.b16 %v1395
  %v1987 = vunpack.c.h.b16 %v1395
  %v1988 = vunpack.c.l.b16 %v1396
  %v1989 = vunpack.c.h.b16 %v1396
  %v1990 = vunpack.c.l.b16 %v1397
  %v1991 = vunpack.c.h.b16 %v1397
  %v1992 = vunpack.c.l.b16 %v1398
  %v1993 = vunpack.c.h.b16 %v1398
  %v1994 = vunpack.c.l.b16 %v1399
  %v1995 = vunpack.c.h.b16 %v1399
  %v1996 = vunpack.c.l.b16 %v1400
  %v1997 = vunpack.c.h.b16 %v1400
  %v1998 = vunpack.c.l.b16 %v1401
  %v1999 = vunpack.c.h.b16 %v1401
  %v2000 = vunpack.c.l.b16 %v1402
  %v2001 = vunpack.c.h.b16 %v1402
  %v2002 = vunpack.c.l.b16 %v1403
  %v2003 = vunpack.c.h.b16 %v1403
  %v2004 = vunpack.c.l.b16 %v1404
  %v2005 = vunpack.c.h.b16 %v1404
  %v2006 = vunpack.c.l.b16 %v1405
  %v2007 = vunpack.c.h.b16 %v1405
  %v2008 = vunpack.c.l.b16 %v1406
  %v2009 = vunpack.c.h.b16 %v1406
  %v2010 = vunpack.c.l.b16 %v1407
  %v2011 = vunpack.c.h.b16 %v1407
  %v2012 = vunpack.c.l.b16 %v1408
  %v2013 = vunpack.c.h.b16 %v1408
  %v2014 = vunpack.c.l.b16 %v1409
  %v2015 = vunpack.c.h.b16 %v1409
  %v2016 = vunpack.c.l.b16 %v1410
  %v2017 = vunpack.c.h.b16 %v1410
  %v2018 = vunpack.c.l.b16 %v1411
  %v2019 = vunpack.c.h.b16 %v1411
  %v2020 = vunpack.c.l.b16 %v1412
  %v2021 = vunpack.c.h.b16 %v1412
  %v2022 = vunpack.c.l.b16 %v1413
  %v2023 = vunpack.c.h.b16 %v1413
  %v2024 = vunpack.c.l.b16 %v1414
  %v2025 = vunpack.c.h.b16 %v1414
  %v2026 = vunpack.c.l.b16 %v1415
  %v2027 = vunpack.c.h.b16 %v1415
  %v2028 = vunpack.c.l.b16 %v1416
  %v2029 = vunpack.c.h.b16 %v1416
  %v2030 = vunpack.c.l.b16 %v1417
  %v2031 = vunpack.c.h.b16 %v1417
  %v2032 = vunpack.c.l.b16 %v1418
  %v2033 = vunpack.c.h.b16 %v1418
  %v2034 = vunpack.c.l.b16 %v1419
  %v2035 = vunpack.c.h.b16 %v1419
  %v2036 = vunpack.c.l.b16 %v1420
  %v2037 = vunpack.c.h.b16 %v1420
  %v2038 = vunpack.c.l.b16 %v1421
  %v2039 = vunpack.c.h.b16 %v1421
  %v2040 = vunpack.c.l.b16 %v1422
  %v2041 = vunpack.c.h.b16 %v1422
  %v2042 = vunpack.c.l.b16 %v1423
  %v2043 = vunpack.c.h.b16 %v1423
  %v2044 = vunpack.c.l.b16 %v1424
  %v2045 = vunpack.c.h.b16 %v1424
  %v2046 = vunpack.c.l.b16 %v1425
  %v2047 = vunpack.c.h.b16 %v1425
  %v2048 = vunpack.c.l.b16 %v1426
  %v2049 = vunpack.c.h.b16 %v1426
  %v2050 = vunpack.c.l.b16 %v1427
  %v2051 = vunpack.c.h.b16 %v1427
  %v2052 = vunpack.c.l.b16 %v1428
  %v2053 = vunpack.c.h.b16 %v1428
  %v2054 = vunpack.c.l.b16 %v1429
  %v2055 = vunpack.c.h.b16 %v1429
  %v2056 = vunpack.c.l.b16 %v1430
  %v2057 = vunpack.c.h.b16 %v1430
  %v2058 = vunpack.c.l.b16 %v1431
  %v2059 = vunpack.c.h.b16 %v1431
  %v2060 = vunpack.c.l.b16 %v1432
  %v2061 = vunpack.c.h.b16 %v1432
  %v2062 = vunpack.c.l.b16 %v1433
  %v2063 = vunpack.c.h.b16 %v1433
  %v2064 = vunpack.c.l.b16 %v1434
  %v2065 = vunpack.c.h.b16 %v1434
  %v2066 = vunpack.c.l.b16 %v1435
  %v2067 = vunpack.c.h.b16 %v1435
  %v2068 = vunpack.c.l.b16 %v1436
  %v2069 = vunpack.c.h.b16 %v1436
  %v2070 = vunpack.c.l.b16 %v1437
  %v2071 = vunpack.c.h.b16 %v1437
  %v2072 = vunpack.c.l.b16 %v1438
  %v2073 = vunpack.c.h.b16 %v1438
  %v2074 = vunpack.c.l.b16 %v1439
  %v2075 = vunpack.c.h.b16 %v1439
  %v2076 = vunpack.c.l.b16 %v1440
  %v2077 = vunpack.c.h.b16 %v1440
  %v2078 = vunpack.c.l.b16 %v1441
  %v2079 = vunpack.c.h.b16 %v1441
  %v2080 = vunpack.c.l.b16 %v1442
  %v2081 = vunpack.c.h.b16 %v1442
  %v2082 = vunpack.c.l.b16 %v1443
  %v2083 = vunpack.c.h.b16 %v1443
  %v2084 = vunpack.c.l.b16 %v1444
  %v2085 = vunpack.c.h.b16 %v1444
  %v2086 = vunpack.c.l.b16 %v1445
  %v2087 = vunpack.c.h.b16 %v1445
  %v2088 = vunpack.c.l.b16 %v1446
  %v2089 = vunpack.c.h.b16 %v1446
  %v2090 = vunpack.c.l.b16 %v1447
  %v2091 = vunpack.c.h.b16 %v1447
  %v2092 = vunpack.c.l.b16 %v1448
  %v2093 = vunpack.c.h.b16 %v1448
  %v2094 = vunpack.c.l.b16 %v1449
  %v2095 = vunpack.c.h.b16 %v1449
  %v2096 = vunpack.c.l.b16 %v1450
  %v2097 = vunpack.c.h.b16 %v1450
  %v2098 = vunpack.c.l.b16 %v1451
  %v2099 = vunpack.c.h.b16 %v1451
  %v2100 = vunpack.c.l.b16 %v1452
  %v2101 = vunpack.c.h.b16 %v1452
  %v2102 = vunpack.c.l.b16 %v1453
  %v2103 = vunpack.c.h.b16 %v1453
  %v2104 = vunpack.c.l.b16 %v1454
  %v2105 = vunpack.c.h.b16 %v1454
  %v2106 = vunpack.c.l.b16 %v1455
  %v2107 = vunpack.c.h.b16 %v1455
  %v2108 = vunpack.c.l.b16 %v1456
  %v2109 = vunpack.c.h.b16 %v1456
  %v2110 = vunpack.c.l.b16 %v1457
  %v2111 = vunpack.c.h.b16 %v1457
  %v2112 = vunpack.c.l.b16 %v1458
  %v2113 = vunpack.c.h.b16 %v1458
  %v2114 = vunpack.c.l.b16 %v1459
  %v2115 = vunpack.c.h.b16 %v1459
  %v2116 = vunpack.c.l.b16 %v1460
  %v2117 = vunpack.c.h.b16 %v1460
  %v2118 = vunpack.c.l.b16 %v1461
  %v2119 = vunpack.c.h.b16 %v1461
  %v2120 = vunpack.c.l.b16 %v1462
  %v2121 = vunpack.c.h.b16 %v1462
  %v2122 = vunpack.c.l.b16 %v1463
  %v2123 = vunpack.c.h.b16 %v1463
  %v2124 = vunpack.c.l.b16 %v1464
  %v2125 = vunpack.c.h.b16 %v1464
  %v2126 = vunpack.c.l.b16 %v1465
  %v2127 = vunpack.c.h.b16 %v1465
  %v2128 = vunpack.c.l.b16 %v1466
  %v2129 = vunpack.c.h.b16 %v1466
  %v2130 = vunpack.c.l.b16 %v1467
  %v2131 = vunpack.c.h.b16 %v1467
  %v2132 = vunpack.c.l.b16 %v1468
  %v2133 = vunpack.c.h.b16 %v1468
  %v2134 = vunpack.c.l.b16 %v1469
  %v2135 = vunpack.c.h.b16 %v1469
  %v2136 = vunpack.c.l.b16 %v1470
  %v2137 = vunpack.c.h.b16 %v1470
  %v2138 = vunpack.c.l.b16 %v1471
  %v2139 = vunpack.c.h.b16 %v1471
  %v2140 = vunpack.c.l.b16 %v1472
  %v2141 = vunpack.c.h.b16 %v1472
  %v2142 = vunpack.c.l.b16 %v1473
  %v2143 = vunpack.c.h.b16 %v1473
  %v2144 = vunpack.c.l.b16 %v1474
  %v2145 = vunpack.c.h.b16 %v1474
  %v2146 = vunpack.c.l.b16 %v1475
  %v2147 = vunpack.c.h.b16 %v1475
  %v2148 = vpack.c.b16 %v1702, %v1700
  %v2149 = vpack.c.b16 %v1703, %v1701
  %v2150 = vpack.c.b16 %v1706, %v1704
  %v2151 = vpack.c.b16 %v1707, %v1705
  %v2152 = vpack.c.b16 %v1710, %v1708
  %v2153 = vpack.c.b16 %v1711, %v1709
  %v2154 = vpack.c.b16 %v1714, %v1712
  %v2155 = vpack.c.b16 %v1715, %v1713
  %v2156 = vpack.c.b16 %v1718, %v1716
  %v2157 = vpack.c.b16 %v1719, %v1717
  %v2158 = vpack.c.b16 %v1722, %v1720
  %v2159 = vpack.c.b16 %v1723, %v1721
  %v2160 = vpack.c.b16 %v1726, %v1724
  %v2161 = vpack.c.b16 %v1727, %v1725
  %v2162 = vpack.c.b16 %v1730, %v1728
  %v2163 = vpack.c.b16 %v1731, %v1729
  %v2164 = vpack.c.b16 %v1734, %v1732
  %v2165 = vpack.c.b16 %v1735, %v1733
  %v2166 = vpack.c.b16 %v1738, %v1736
  %v2167 = vpack.c.b16 %v1739, %v1737
  %v2168 = vpack.c.b16 %v1742, %v1740
  %v2169 = vpack.c.b16 %v1743, %v1741
  %v2170 = vpack.c.b16 %v1746, %v1744
  %v2171 = vpack.c.b16 %v1747, %v1745
  %v2172 = vpack.c.b16 %v1750, %v1748
  %v2173 = vpack.c.b16 %v1751, %v1749
  %v2174 = vpack.c.b16 %v1754, %v1752
  %v2175 = vpack.c.b16 %v1755, %v1753
  %v2176 = vpack.c.b16 %v1758, %v1756
  %v2177 = vpack.c.b16 %v1759, %v1757
  %v2178 = vpack.c.b16 %v1762, %v1760
  %v2179 = vpack.c.b16 %v1763, %v1761
  %v2180 = vpack.c.b16 %v1766, %v1764
  %v2181 = vpack.c.b16 %v1767, %v1765
  %v2182 = vpack.c.b16 %v1770, %v1768
  %v2183 = vpack.c.b16 %v1771, %v1769
  %v2184 = vpack.c.b16 %v1774, %v1772
  %v2185 = vpack.c.b16 %v1775, %v1773
  %v2186 = vpack.c.b16 %v1778, %v1776
  %v2187 = vpack.c.b16 %v1779, %v1777
  %v2188 = vpack.c.b16 %v1782, %v1780
  %v2189 = vpack.c.b16 %v1783, %v1781
  %v2190 = vpack.c.b16 %v1786, %v1784
  %v2191 = vpack.c.b16 %v1787, %v1785
  %v2192 = vpack.c.b16 %v1790, %v1788
  %v2193 = vpack.c.b16 %v1791, %v1789
  %v2194 = vpack.c.b16 %v1794, %v1792
  %v2195 = vpack.c.b16 %v1795, %v1793
  %v2196 = vpack.c.b16 %v1798, %v1796
  %v2197 = vpack.c.b16 %v1799, %v1797
  %v2198 = vpack.c.b16 %v1802, %v1800
  %v2199 = vpack.c.b16 %v1803, %v1801
  %v2200 = vpack.c.b16 %v1806, %v1804
  %v2201 = vpack.c.b16 %v1807, %v1805
  %v2202 = vpack.c.b16 %v1810, %v1808
  %v2203 = vpack.c.b16 %v1811, %v1809
  %v2204 = vpack.c.b16 %v1814, %v1812
  %v2205 = vpack.c.b16 %v1815, %v1813
  %v2206 = vpack.c.b16 %v1818, %v1816
  %v2207 = vpack.c.b16 %v1819, %v1817
  %v2208 = vpack.c.b16 %v1822, %v1820
  %v2209 = vpack.c.b16 %v1823, %v1821
  %v2210 = vpack.c.b16 %v1826, %v1824
  %v2211 = vpack.c.b16 %v1827, %v1825
  %v2212 = vpack.c.b16 %v1830, %v1828
  %v2213 = vpack.c.b16 %v1831, %v1829
  %v2214 = vpack.c.b16 %v1834, %v1832
  %v2215 = vpack.c.b16 %v1835, %v1833
  %v2216 = vpack.c.b16 %v1838, %v1836
  %v2217 = vpack.c.b16 %v1839, %v1837
  %v2218 = vpack.c.b16 %v1842, %v1840
  %v2219 = vpack.c.b16 %v1843, %v1841
  %v2220 = vpack.c.b16 %v1846, %v1844
  %v2221 = vpack.c.b16 %v1847, %v1845
  %v2222 = vpack.c.b16 %v1850, %v1848
  %v2223 = vpack.c.b16 %v1851, %v1849
  %v2224 = vpack.c.b16 %v1854, %v1852
  %v2225 = vpack.c.b16 %v1855, %v1853
  %v2226 = vpack.c.b16 %v1858, %v1856
  %v2227 = vpack.c.b16 %v1859, %v1857
  %v2228 = vpack.c.b16 %v1862, %v1860
  %v2229 = vpack.c.b16 %v1863, %v1861
  %v2230 = vpack.c.b16 %v1866, %v1864
  %v2231 = vpack.c.b16 %v1867, %v1865
  %v2232 = vpack.c.b16 %v1870, %v1868
  %v2233 = vpack.c.b16 %v1871, %v1869
  %v2234 = vpack.c.b16 %v1874, %v1872
  %v2235 = vpack.c.b16 %v1875, %v1873
  %v2236 = vpack.c.b16 %v1878, %v1876
  %v2237 = vpack.c.b16 %v1879, %v1877
  %v2238 = vpack.c.b16 %v1882, %v1880
  %v2239 = vpack.c.b16 %v1883, %v1881
  %v2240 = vpack.c.b16 %v1886, %v1884
  %v2241 = vpack.c.b16 %v1887, %v1885
  %v2242 = vpack.c.b16 %v1890, %v1888
  %v2243 = vpack.c.b16 %v1891, %v1889
  %v2244 = vpack.c.b16 %v1894, %v1892
  %v2245 = vpack.c.b16 %v1895, %v1893
  %v2246 = vpack.c.b16 %v1898, %v1896
  %v2247 = vpack.c.b16 %v1899, %v1897
  %v2248 = vpack.c.b16 %v1902, %v1900
  %v2249 = vpack.c.b16 %v1903, %v1901
  %v2250 = vpack.c.b16 %v1906, %v1904
  %v2251 = vpack.c.b16 %v1907, %v1905
  %v2252 = vpack.c.b16 %v1910, %v1908
  %v2253 = vpack.c.b16 %v1911, %v1909
  %v2254 = vpack.c.b16 %v1914, %v1912
  %v2255 = vpack.c.b16 %v1915, %v1913
  %v2256 = vpack.c.b16 %v1918, %v1916
  %v2257 = vpack.c.b16 %v1919, %v1917
  %v2258 = vpack.c.b16 %v1922, %v1920
  %v2259 = vpack.c.b16 %v1923, %v1921
  %v2260 = vpack.c.b16 %v1926, %v1924
  %v2261 = vpack.c.b16 %v1927, %v1925
  %v2262 = vpack.c.b16 %v1930, %v1928
  %v2263 = vpack.c.b16 %v1931, %v1929
  %v2264 = vpack.c.b16 %v1934, %v1932
  %v2265 = vpack.c.b16 %v1935, %v1933
  %v2266 = vpack.c.b16 %v1938, %v1936
  %v2267 = vpack.c.b16 %v1939, %v1937
  %v2268 = vpack.c.b16 %v1942, %v1940
  %v2269 = vpack.c.b16 %v1943, %v1941
  %v2270 = vpack.c.b16 %v1946, %v1944
  %v2271 = vpack.c.b16 %v1947, %v1945
  %v2272 = vpack.c.b16 %v1950, %v1948
  %v2273 = vpack.c.b16 %v1951, %v1949
  %v2274 = vpack.c.b16 %v1954, %v1952
  %v2275 = vpack.c.b16 %v1955, %v1953
  %v2276 = vpack.c.b16 %v1958, %v1956
  %v2277 = vpack.c.b16 %v1959, %v1957
  %v2278 = vpack.c.b16 %v1962, %v1960
  %v2279 = vpack.c.b16 %v1963, %v1961
  %v2280 = vpack.c.b16 %v1966, %v1964
  %v2281 = vpack.c.b16 %v1967, %v1965
  %v2282 = vpack.c.b16 %v1970, %v1968
  %v2283 = vpack.c.b16 %v1971, %v1969
  %v2284 = vpack.c.b16 %v1974, %v1972
  %v2285 = vpack.c.b16 %v1975, %v1973
  %v2286 = vpack.c.b16 %v1978, %v1976
  %v2287 = vpack.c.b16 %v1979, %v1977
  %v2288 = vpack.c.b16 %v1982, %v1980
  %v2289 = vpack.c.b16 %v1983, %v1981
  %v2290 = vpack.c.b16 %v1986, %v1984
  %v2291 = vpack.c.b16 %v1987, %v1985
  %v2292 = vpack.c.b16 %v1990, %v1988
  %v2293 = vpack.c.b16 %v1991, %v1989
  %v2294 = vpack.c.b16 %v1994, %v1992
  %v2295 = vpack.c.b16 %v1995, %v1993
  %v2296 = vpack.c.b16 %v1998, %v1996
  %v2297 = vpack.c.b16 %v1999, %v1997
  %v2298 = vpack.c.b16 %v2002, %v2000
  %v2299 = vpack.c.b16 %v2003, %v2001
  %v2300 = vpack.c.b16 %v2006, %v2004
  %v2301 = vpack.c.b16 %v2007, %v2005
  %v2302 = vpack.c.b16 %v2010, %v2008
  %v2303 = vpack.c.b16 %v2011, %v2009
  %v2304 = vpack.c.b16 %v2014, %v2012
  %v2305 = vpack.c.b16 %v2015, %v2013
  %v2306 = vpack.c.b16 %v2018, %v2016
  %v2307 = vpack.c.b16 %v2019, %v2017
  %v2308 = vpack.c.b16 %v2022, %v2020
  %v2309 = vpack.c.b16 %v2023, %v2021
  %v2310 = vpack.c.b16 %v2026, %v2024
  %v2311 = vpack.c.b16 %v2027, %v2025
  %v2312 = vpack.c.b16 %v2030, %v2028
  %v2313 = vpack.c.b16 %v2031, %v2029
  %v2314 = vpack.c.b16 %v2034, %v2032
  %v2315 = vpack.c.b16 %v2035, %v2033
  %v2316 = vpack.c.b16 %v2038, %v2036
  %v2317 = vpack.c.b16 %v2039, %v2037
  %v2318 = vpack.c.b16 %v2042, %v2040
  %v2319 = vpack.c.b16 %v2043, %v2041
  %v2320 = vpack.c.b16 %v2046, %v2044
  %v2321 = vpack.c.b16 %v2047, %v2045
  %v2322 = vpack.c.b16 %v2050, %v2048
  %v2323 = vpack.c.b16 %v2051, %v2049
  %v2324 = vpack.c.b16 %v2054, %v2052
  %v2325 = vpack.c.b16 %v2055, %v2053
  %v2326 = vpack.c.b16 %v2058, %v2056
  %v2327 = vpack.c.b16 %v2059, %v2057
  %v2328 = vpack.c.b16 %v2062, %v2060
  %v2329 = vpack.c.b16 %v2063, %v2061
  %v2330 = vpack.c.b16 %v2066, %v2064
  %v2331 = vpack.c.b16 %v2067, %v2065
  %v2332 = vpack.c.b16 %v2070, %v2068
  %v2333 = vpack.c.b16 %v2071, %v2069
  %v2334 = vpack.c.b16 %v2074, %v2072
  %v2335 = vpack.c.b16 %v2075, %v2073
  %v2336 = vpack.c.b16 %v2078, %v2076
  %v2337 = vpack.c.b16 %v2079, %v2077
  %v2338 = vpack.c.b16 %v2082, %v2080
  %v2339 = vpack.c.b16 %v2083, %v2081
  %v2340 = vpack.c.b16 %v2086, %v2084
  %v2341 = vpack.c.b16 %v2087, %v2085
  %v2342 = vpack.c.b16 %v2090, %v2088
  %v2343 = vpack.c.b16 %v2091, %v2089
  %v2344 = vpack.c.b16 %v2094, %v2092
  %v2345 = vpack.c.b16 %v2095, %v2093
  %v2346 = vpack.c.b16 %v2098, %v2096
  %v2347 = vpack.c.b16 %v2099, %v2097
  %v2348 = vpack.c.b16 %v2102, %v2100
  %v2349 = vpack.c.b16 %v2103, %v2101
  %v2350 = vpack.c.b16 %v2106, %v2104
  %v2351 = vpack.c.b16 %v2107, %v2105
  %v2352 = vpack.c.b16 %v2110, %v2108
  %v2353 = vpack.c.b16 %v2111, %v2109
  %v2354 = vpack.c.b16 %v2114, %v2112
  %v2355 = vpack.c.b16 %v2115, %v2113
  %v2356 = vpack.c.b16 %v2118, %v2116
  %v2357 = vpack.c.b16 %v2119, %v2117
  %v2358 = vpack.c.b16 %v2122, %v2120
  %v2359 = vpack.c.b16 %v2123, %v2121
  %v2360 = vpack.c.b16 %v2126, %v2124
  %v2361 = vpack.c.b16 %v2127, %v2125
  %v2362 = vpack.c.b16 %v2130, %v2128
  %v2363 = vpack.c.b16 %v2131, %v2129
  %v2364 = vpack.c.b16 %v2134, %v2132
  %v2365 = vpack.c.b16 %v2135, %v2133
  %v2366 = vpack.c.b16 %v2138, %v2136
  %v2367 = vpack.c.b16 %v2139, %v2137
  %v2368 = vpack.c.b16 %v2142, %v2140
  %v2369 = vpack.c.b16 %v2143, %v2141
  %v2370 = vpack.c.b16 %v2146, %v2144
  %v2371 = vpack.c.b16 %v2147, %v2145
  %2596 = vmatprep.subr.bf16.mxu0 %v2149
  %2597 = vmatpush1.bf16.msra.mxu0 %v2148
  %2598 = vmatprep.subr.bf16.mxu0 %v2151
  %2599 = vmatpush1.bf16.msra.mxu0 %v2150
  %2600 = vmatprep.subr.bf16.mxu0 %v2153
  %2601 = vmatpush1.bf16.msra.mxu0 %v2152
  %2602 = vmatprep.subr.bf16.mxu0 %v2155
  %2603 = vmatpush1.bf16.msra.mxu0 %v2154
  %2604 = vmatprep.subr.bf16.mxu0 %v2157
  %2605 = vmatpush1.bf16.msra.mxu0 %v2156
  %2606 = vmatprep.subr.bf16.mxu0 %v2159
  %2607 = vmatpush1.bf16.msra.mxu0 %v2158
  %2608 = vmatprep.subr.bf16.mxu0 %v2161
  %2609 = vmatpush1.bf16.msra.mxu0 %v2160
  %2610 = vmatprep.subr.bf16.mxu0 %v2163
  %2611 = vmatpush1.bf16.msra.mxu0 %v2162
  %2612 = vmatprep.subr.bf16.mxu0 %v2165
  %2613 = vmatpush1.bf16.msra.mxu0 %v2164
  %2614 = vmatprep.subr.bf16.mxu0 %v2167
  %2615 = vmatpush1.bf16.msra.mxu0 %v2166
  %2616 = vmatprep.subr.bf16.mxu0 %v2169
  %2617 = vmatpush1.bf16.msra.mxu0 %v2168
  %2618 = vmatprep.subr.bf16.mxu0 %v2171
  %2619 = vmatpush1.bf16.msra.mxu0 %v2170
  %2620 = vmatprep.subr.bf16.mxu0 %v2173
  %2621 = vmatpush1.bf16.msra.mxu0 %v2172
  %2622 = vmatprep.subr.bf16.mxu0 %v2175
  %2623 = vmatpush1.bf16.msra.mxu0 %v2174
  %2624 = vmatprep.subr.bf16.mxu0 %v2177
  %2625 = vmatpush1.bf16.msra.mxu0 %v2176
  %2626 = vmatprep.subr.bf16.mxu0 %v2179
  %2627 = vmatpush1.bf16.msra.mxu0 %v2178
  %2628 = vmatprep.mubr.bf16.mxu0 %v1239
  %2629 = vmatmul.mubr.bf16.gmra.mrb[0].mxu0 %v1238
  %v2630 = vpop.f32.mrb[0].mxu0
  %v2631 = vadd.f32 0.0, %v2630
  %v2632 = vpop.f32.mrb[0].mxu0
  %v2633 = vadd.f32 0.0, %v2632
  %v2634 = vpop.f32.mrb[0].mxu0
  %v2635 = vadd.f32 0.0, %v2634
  %v2636 = vpop.f32.mrb[0].mxu0
  %v2637 = vadd.f32 0.0, %v2636
  %2638 = vdwg.mxu0
  %2639 = vmatprep.subr.bf16.mxu0 %v2181
  %2640 = vmatpush1.bf16.msra.mxu0 %v2180
  %2641 = vmatprep.subr.bf16.mxu0 %v2183
  %2642 = vmatpush1.bf16.msra.mxu0 %v2182
  %2643 = vmatprep.subr.bf16.mxu0 %v2185
  %2644 = vmatpush1.bf16.msra.mxu0 %v2184
  %2645 = vmatprep.subr.bf16.mxu0 %v2187
  %2646 = vmatpush1.bf16.msra.mxu0 %v2186
  %2647 = vmatprep.subr.bf16.mxu0 %v2189
  %2648 = vmatpush1.bf16.msra.mxu0 %v2188
  %2649 = vmatprep.subr.bf16.mxu0 %v2191
  %2650 = vmatpush1.bf16.msra.mxu0 %v2190
  %2651 = vmatprep.subr.bf16.mxu0 %v2193
  %2652 = vmatpush1.bf16.msra.mxu0 %v2192
  %2653 = vmatprep.subr.bf16.mxu0 %v2195
  %2654 = vmatpush1.bf16.msra.mxu0 %v2194
  %2655 = vmatprep.subr.bf16.mxu0 %v2197
  %2656 = vmatpush1.bf16.msra.mxu0 %v2196
  %2657 = vmatprep.subr.bf16.mxu0 %v2199
  %2658 = vmatpush1.bf16.msra.mxu0 %v2198
  %2659 = vmatprep.subr.bf16.mxu0 %v2201
  %2660 = vmatpush1.bf16.msra.mxu0 %v2200
  %2661 = vmatprep.subr.bf16.mxu0 %v2203
  %2662 = vmatpush1.bf16.msra.mxu0 %v2202
  %2663 = vmatprep.subr.bf16.mxu0 %v2205
  %2664 = vmatpush1.bf16.msra.mxu0 %v2204
  %2665 = vmatprep.subr.bf16.mxu0 %v2207
  %2666 = vmatpush1.bf16.msra.mxu0 %v2206
  %2667 = vmatprep.subr.bf16.mxu0 %v2209
  %2668 = vmatpush1.bf16.msra.mxu0 %v2208
  %2669 = vmatprep.subr.bf16.mxu0 %v2211
  %2670 = vmatpush1.bf16.msra.mxu0 %v2210
  %2671 = vmatprep.mubr.bf16.mxu0 %v1241
  %2672 = vmatmul.mubr.bf16.gmra.mrb[0].mxu0 %v1240
  %v2673 = vpop.f32.mrb[0].mxu0
  %v2674 = vadd.f32 %v2631, %v2673
  %v2675 = vpop.f32.mrb[0].mxu0
  %v2676 = vadd.f32 %v2633, %v2675
  %v2677 = vpop.f32.mrb[0].mxu0
  %v2678 = vadd.f32 %v2635, %v2677
  %v2679 = vpop.f32.mrb[0].mxu0
  %v2680 = vadd.f32 %v2637, %v2679
  %2681 = vdwg.mxu0
  %2682 = vmatprep.subr.bf16.mxu0 %v2213
  %2683 = vmatpush1.bf16.msra.mxu0 %v2212
  %2684 = vmatprep.subr.bf16.mxu0 %v2215
  %2685 = vmatpush1.bf16.msra.mxu0 %v2214
  %2686 = vmatprep.subr.bf16.mxu0 %v2217
  %2687 = vmatpush1.bf16.msra.mxu0 %v2216
  %2688 = vmatprep.subr.bf16.mxu0 %v2219
  %2689 = vmatpush1.bf16.msra.mxu0 %v2218
  %2690 = vmatprep.subr.bf16.mxu0 %v2221
  %2691 = vmatpush1.bf16.msra.mxu0 %v2220
  %2692 = vmatprep.subr.bf16.mxu0 %v2223
  %2693 = vmatpush1.bf16.msra.mxu0 %v2222
  %2694 = vmatprep.subr.bf16.mxu0 %v2225
  %2695 = vmatpush1.bf16.msra.mxu0 %v2224
  %2696 = vmatprep.subr.bf16.mxu0 %v2227
  %2697 = vmatpush1.bf16.msra.mxu0 %v2226
  %2698 = vmatprep.subr.bf16.mxu0 %v2229
  %2699 = vmatpush1.bf16.msra.mxu0 %v2228
  %2700 = vmatprep.subr.bf16.mxu0 %v2231
  %2701 = vmatpush1.bf16.msra.mxu0 %v2230
  %2702 = vmatprep.subr.bf16.mxu0 %v2233
  %2703 = vmatpush1.bf16.msra.mxu0 %v2232
  %2704 = vmatprep.subr.bf16.mxu0 %v2235
  %2705 = vmatpush1.bf16.msra.mxu0 %v2234
  %2706 = vmatprep.subr.bf16.mxu0 %v2237
  %2707 = vmatpush1.bf16.msra.mxu0 %v2236
  %2708 = vmatprep.subr.bf16.mxu0 %v2239
  %2709 = vmatpush1.bf16.msra.mxu0 %v2238
  %2710 = vmatprep.subr.bf16.mxu0 %v2241
  %2711 = vmatpush1.bf16.msra.mxu0 %v2240
  %2712 = vmatprep.subr.bf16.mxu0 %v2243
  %2713 = vmatpush1.bf16.msra.mxu0 %v2242
  %2714 = vmatprep.mubr.bf16.mxu0 %v1243
  %2715 = vmatmul.mubr.bf16.gmra.mrb[0].mxu0 %v1242
  %v2716 = vpop.f32.mrb[0].mxu0
  %v2717 = vadd.f32 %v2674, %v2716
  %v2718 = vpop.f32.mrb[0].mxu0
  %v2719 = vadd.f32 %v2676, %v2718
  %v2720 = vpop.f32.mrb[0].mxu0
  %v2721 = vadd.f32 %v2678, %v2720
  %v2722 = vpop.f32.mrb[0].mxu0
  %v2723 = vadd.f32 %v2680, %v2722
  %2724 = vdwg.mxu0
  %2725 = vmatprep.subr.bf16.mxu0 %v2245
  %2726 = vmatpush1.bf16.msra.mxu0 %v2244
  %2727 = vmatprep.subr.bf16.mxu0 %v2247
  %2728 = vmatpush1.bf16.msra.mxu0 %v2246
  %2729 = vmatprep.subr.bf16.mxu0 %v2249
  %2730 = vmatpush1.bf16.msra.mxu0 %v2248
  %2731 = vmatprep.subr.bf16.mxu0 %v2251
  %2732 = vmatpush1.bf16.msra.mxu0 %v2250
  %2733 = vmatprep.subr.bf16.mxu0 %v2253
  %2734 = vmatpush1.bf16.msra.mxu0 %v2252
  %2735 = vmatprep.subr.bf16.mxu0 %v2255
  %2736 = vmatpush1.bf16.msra.mxu0 %v2254
  %2737 = vmatprep.subr.bf16.mxu0 %v2257
  %2738 = vmatpush1.bf16.msra.mxu0 %v2256
  %2739 = vmatprep.subr.bf16.mxu0 %v2259
  %2740 = vmatpush1.bf16.msra.mxu0 %v2258
  %2741 = vmatprep.subr.bf16.mxu0 %v2261
  %2742 = vmatpush1.bf16.msra.mxu0 %v2260
  %2743 = vmatprep.subr.bf16.mxu0 %v2263
  %2744 = vmatpush1.bf16.msra.mxu0 %v2262
  %2745 = vmatprep.subr.bf16.mxu0 %v2265
  %2746 = vmatpush1.bf16.msra.mxu0 %v2264
  %2747 = vmatprep.subr.bf16.mxu0 %v2267
  %2748 = vmatpush1.bf16.msra.mxu0 %v2266
  %2749 = vmatprep.subr.bf16.mxu0 %v2269
  %2750 = vmatpush1.bf16.msra.mxu0 %v2268
  %2751 = vmatprep.subr.bf16.mxu0 %v2271
  %2752 = vmatpush1.bf16.msra.mxu0 %v2270
  %2753 = vmatprep.subr.bf16.mxu0 %v2273
  %2754 = vmatpush1.bf16.msra.mxu0 %v2272
  %2755 = vmatprep.subr.bf16.mxu0 %v2275
  %2756 = vmatpush1.bf16.msra.mxu0 %v2274
  %2757 = vmatprep.mubr.bf16.mxu0 %v1245
  %2758 = vmatmul.mubr.bf16.gmra.mrb[0].mxu0 %v1244
  %v2759 = vpop.f32.mrb[0].mxu0
  %v2760 = vadd.f32 %v2717, %v2759
  %v2761 = vpop.f32.mrb[0].mxu0
  %v2762 = vadd.f32 %v2719, %v2761
  %v2763 = vpop.f32.mrb[0].mxu0
  %v2764 = vadd.f32 %v2721, %v2763
  %v2765 = vpop.f32.mrb[0].mxu0
  %v2766 = vadd.f32 %v2723, %v2765
  %2767 = vdwg.mxu0
  %2768 = vmatprep.subr.bf16.mxu0 %v2277
  %2769 = vmatpush1.bf16.msra.mxu0 %v2276
  %2770 = vmatprep.subr.bf16.mxu0 %v2279
  %2771 = vmatpush1.bf16.msra.mxu0 %v2278
  %2772 = vmatprep.subr.bf16.mxu0 %v2281
  %2773 = vmatpush1.bf16.msra.mxu0 %v2280
  %2774 = vmatprep.subr.bf16.mxu0 %v2283
  %2775 = vmatpush1.bf16.msra.mxu0 %v2282
  %2776 = vmatprep.subr.bf16.mxu0 %v2285
  %2777 = vmatpush1.bf16.msra.mxu0 %v2284
  %2778 = vmatprep.subr.bf16.mxu0 %v2287
  %2779 = vmatpush1.bf16.msra.mxu0 %v2286
  %2780 = vmatprep.subr.bf16.mxu0 %v2289
  %2781 = vmatpush1.bf16.msra.mxu0 %v2288
  %2782 = vmatprep.subr.bf16.mxu0 %v2291
  %2783 = vmatpush1.bf16.msra.mxu0 %v2290
  %2784 = vmatprep.subr.bf16.mxu0 %v2293
  %2785 = vmatpush1.bf16.msra.mxu0 %v2292
  %2786 = vmatprep.subr.bf16.mxu0 %v2295
  %2787 = vmatpush1.bf16.msra.mxu0 %v2294
  %2788 = vmatprep.subr.bf16.mxu0 %v2297
  %2789 = vmatpush1.bf16.msra.mxu0 %v2296
  %2790 = vmatprep.subr.bf16.mxu0 %v2299
  %2791 = vmatpush1.bf16.msra.mxu0 %v2298
  %2792 = vmatprep.subr.bf16.mxu0 %v2301
  %2793 = vmatpush1.bf16.msra.mxu0 %v2300
  %2794 = vmatprep.subr.bf16.mxu0 %v2303
  %2795 = vmatpush1.bf16.msra.mxu0 %v2302
  %2796 = vmatprep.subr.bf16.mxu0 %v2305
  %2797 = vmatpush1.bf16.msra.mxu0 %v2304
  %2798 = vmatprep.subr.bf16.mxu0 %v2307
  %2799 = vmatpush1.bf16.msra.mxu0 %v2306
  %2800 = vmatprep.mubr.bf16.mxu0 %v1247
  %2801 = vmatmul.mubr.bf16.gmra.mrb[0].mxu0 %v1246
  %v2802 = vpop.f32.mrb[0].mxu0
  %v2803 = vadd.f32 %v2760, %v2802
  %v2804 = vpop.f32.mrb[0].mxu0
  %v2805 = vadd.f32 %v2762, %v2804
  %v2806 = vpop.f32.mrb[0].mxu0
  %v2807 = vadd.f32 %v2764, %v2806
  %v2808 = vpop.f32.mrb[0].mxu0
  %v2809 = vadd.f32 %v2766, %v2808
  %2810 = vdwg.mxu0
  %2811 = vmatprep.subr.bf16.mxu0 %v2309
  %2812 = vmatpush1.bf16.msra.mxu0 %v2308
  %2813 = vmatprep.subr.bf16.mxu0 %v2311
  %2814 = vmatpush1.bf16.msra.mxu0 %v2310
  %2815 = vmatprep.subr.bf16.mxu0 %v2313
  %2816 = vmatpush1.bf16.msra.mxu0 %v2312
  %2817 = vmatprep.subr.bf16.mxu0 %v2315
  %2818 = vmatpush1.bf16.msra.mxu0 %v2314
  %2819 = vmatprep.subr.bf16.mxu0 %v2317
  %2820 = vmatpush1.bf16.msra.mxu0 %v2316
  %2821 = vmatprep.subr.bf16.mxu0 %v2319
  %2822 = vmatpush1.bf16.msra.mxu0 %v2318
  %2823 = vmatprep.subr.bf16.mxu0 %v2321
  %2824 = vmatpush1.bf16.msra.mxu0 %v2320
  %2825 = vmatprep.subr.bf16.mxu0 %v2323
  %2826 = vmatpush1.bf16.msra.mxu0 %v2322
  %2827 = vmatprep.subr.bf16.mxu0 %v2325
  %2828 = vmatpush1.bf16.msra.mxu0 %v2324
  %2829 = vmatprep.subr.bf16.mxu0 %v2327
  %2830 = vmatpush1.bf16.msra.mxu0 %v2326
  %2831 = vmatprep.subr.bf16.mxu0 %v2329
  %2832 = vmatpush1.bf16.msra.mxu0 %v2328
  %2833 = vmatprep.subr.bf16.mxu0 %v2331
  %2834 = vmatpush1.bf16.msra.mxu0 %v2330
  %2835 = vmatprep.subr.bf16.mxu0 %v2333
  %2836 = vmatpush1.bf16.msra.mxu0 %v2332
  %2837 = vmatprep.subr.bf16.mxu0 %v2335
  %2838 = vmatpush1.bf16.msra.mxu0 %v2334
  %2839 = vmatprep.subr.bf16.mxu0 %v2337
  %2840 = vmatpush1.bf16.msra.mxu0 %v2336
  %2841 = vmatprep.subr.bf16.mxu0 %v2339
  %2842 = vmatpush1.bf16.msra.mxu0 %v2338
  %2843 = vmatprep.mubr.bf16.mxu0 %v1249
  %2844 = vmatmul.mubr.bf16.gmra.mrb[0].mxu0 %v1248
  %v2845 = vpop.f32.mrb[0].mxu0
  %v2846 = vadd.f32 %v2803, %v2845
  %v2847 = vpop.f32.mrb[0].mxu0
  %v2848 = vadd.f32 %v2805, %v2847
  %v2849 = vpop.f32.mrb[0].mxu0
  %v2850 = vadd.f32 %v2807, %v2849
  %v2851 = vpop.f32.mrb[0].mxu0
  %v2852 = vadd.f32 %v2809, %v2851
  %2853 = vdwg.mxu0
  %2854 = vmatprep.subr.bf16.mxu0 %v2341
  %2855 = vmatpush1.bf16.msra.mxu0 %v2340
  %2856 = vmatprep.subr.bf16.mxu0 %v2343
  %2857 = vmatpush1.bf16.msra.mxu0 %v2342
  %2858 = vmatprep.subr.bf16.mxu0 %v2345
  %2859 = vmatpush1.bf16.msra.mxu0 %v2344
  %2860 = vmatprep.subr.bf16.mxu0 %v2347
  %2861 = vmatpush1.bf16.msra.mxu0 %v2346
  %2862 = vmatprep.subr.bf16.mxu0 %v2349
  %2863 = vmatpush1.bf16.msra.mxu0 %v2348
  %2864 = vmatprep.subr.bf16.mxu0 %v2351
  %2865 = vmatpush1.bf16.msra.mxu0 %v2350
  %2866 = vmatprep.subr.bf16.mxu0 %v2353
  %2867 = vmatpush1.bf16.msra.mxu0 %v2352
  %2868 = vmatprep.subr.bf16.mxu0 %v2355
  %2869 = vmatpush1.bf16.msra.mxu0 %v2354
  %2870 = vmatprep.subr.bf16.mxu0 %v2357
  %2871 = vmatpush1.bf16.msra.mxu0 %v2356
  %2872 = vmatprep.subr.bf16.mxu0 %v2359
  %2873 = vmatpush1.bf16.msra.mxu0 %v2358
  %2874 = vmatprep.subr.bf16.mxu0 %v2361
  %2875 = vmatpush1.bf16.msra.mxu0 %v2360
  %2876 = vmatprep.subr.bf16.mxu0 %v2363
  %2877 = vmatpush1.bf16.msra.mxu0 %v2362
  %2878 = vmatprep.subr.bf16.mxu0 %v2365
  %2879 = vmatpush1.bf16.msra.mxu0 %v2364
  %2880 = vmatprep.subr.bf16.mxu0 %v2367
  %2881 = vmatpush1.bf16.msra.mxu0 %v2366
  %2882 = vmatprep.subr.bf16.mxu0 %v2369
  %2883 = vmatpush1.bf16.msra.mxu0 %v2368
  %2884 = vmatprep.subr.bf16.mxu0 %v2371
  %2885 = vmatpush1.bf16.msra.mxu0 %v2370
  %2886 = vmatprep.mubr.bf16.mxu0 %v1251
  %2887 = vmatmul.mubr.bf16.gmra.mrb[0].mxu0 %v1250
  %v2888 = vpop.f32.mrb[0].mxu0
  %v2889 = vadd.f32 %v2846, %v2888
  %v2890 = vpop.f32.mrb[0].mxu0
  %v2891 = vadd.f32 %v2848, %v2890
  %v2892 = vpop.f32.mrb[0].mxu0
  %v2893 = vadd.f32 %v2850, %v2892
  %v2894 = vpop.f32.mrb[0].mxu0
  %v2895 = vadd.f32 %v2852, %v2894
  %2896 = vdwg.mxu0
  %v2897 = vpack.c.bf16 %v2893, %v2889
  %v2898 = vpack.c.bf16 %v2895, %v2891
  %v2899 = vld [vmem:[%s4] sm:$0x11]
  %v2901 = vunpack.c.l.b16 %v2899
  %v2902 = vunpack.c.h.b16 %v2899
  %v2903 = vpack.c.b16 %v2901, %v2901
  %v2904 = vpack.c.b16 %v2902, %v2902
  %v2906 = vpack.i.b16 %v2903, %v2903
  %v2908 = vlaneseq
  %v2909 = vshrl.u32 %v2908, 7
  %v2910 = vsub.s32 0, %v2909
  %v2911 = vrot.slane %v2906, %v2910
  %v2913 = vpack.i.b16 %v2904, %v2904
  %v2915 = vlaneseq
  %v2916 = vshrl.u32 %v2915, 7
  %v2917 = vsub.s32 0, %v2916
  %v2918 = vrot.slane %v2913, %v2917
  %v2919 = vadd.bf16 %v2897, %v2911
  %v2920 = vadd.bf16 %v2898, %v2918
  %vm2921 = vcmp.gt.bf16.partialorder %v2919, 0
  %vm2922 = vcmp.gt.bf16.partialorder %v2920, 0
  %v2923 = vmul.bf16 %v2919, 1009007652
  %v2924 = vmul.bf16 %v2920, 1009007652
  %v2925 = vsel %vm2921, %v2919, %v2923
  %v2926 = vsel %vm2922, %v2920, %v2924
  %v2927 = vld [vmem:[%s5] sm:$0xff]
  %v2928 = vld [vmem:[%s5 + $0x8] sm:$0xff]
  %v2929 = vld [vmem:[%s5 + $0x10] sm:$0xff]
  %v2930 = vld [vmem:[%s5 + $0x18] sm:$0xff]
  %v2931 = vld [vmem:[%s5 + $0x20] sm:$0xff]
  %v2932 = vld [vmem:[%s5 + $0x28] sm:$0xff]
  %v2933 = vld [vmem:[%s5 + $0x30] sm:$0xff]
  %v2934 = vld [vmem:[%s5 + $0x38] sm:$0xff]
  %v2935 = vld [vmem:[%s5 + $0x40] sm:$0xff]
  %v2936 = vld [vmem:[%s5 + $0x48] sm:$0xff]
  %v2937 = vld [vmem:[%s5 + $0x50] sm:$0xff]
  %v2938 = vld [vmem:[%s5 + $0x58] sm:$0xff]
  %v2939 = vld [vmem:[%s5 + $0x60] sm:$0xff]
  %v2940 = vld [vmem:[%s5 + $0x68] sm:$0xff]
  %v2941 = vld [vmem:[%s5 + $0x70] sm:$0xff]
  %v2942 = vld [vmem:[%s5 + $0x78] sm:$0xff]
  %v2943 = vld [vmem:[%s5 + $0x80] sm:$0xff]
  %v2944 = vld [vmem:[%s5 + $0x88] sm:$0xff]
  %v2945 = vld [vmem:[%s5 + $0x90] sm:$0xff]
  %v2946 = vld [vmem:[%s5 + $0x98] sm:$0xff]
  %v2947 = vld [vmem:[%s5 + $0xa0] sm:$0xff]
  %v2948 = vld [vmem:[%s5 + $0xa8] sm:$0xff]
  %v2949 = vld [vmem:[%s5 + $0xb0] sm:$0xff]
  %v2950 = vld [vmem:[%s5 + $0xb8] sm:$0xff]
  %v2951 = vld [vmem:[%s5 + $0xc0] sm:$0xff]
  %v2952 = vld [vmem:[%s5 + $0xc8] sm:$0xff]
  %v2953 = vld [vmem:[%s5 + $0xd0] sm:$0xff]
  %v2954 = vld [vmem:[%s5 + $0xd8] sm:$0xff]
  %v2955 = vld [vmem:[%s5 + $0xe0] sm:$0xff]
  %v2956 = vld [vmem:[%s5 + $0xe8] sm:$0xff]
  %v2957 = vld [vmem:[%s5 + $0xf0] sm:$0xff]
  %v2958 = vld [vmem:[%s5 + $0xf8] sm:$0xff]
  %v2991 = vunpack.c.l.b16 %v2927
  %v2992 = vunpack.c.h.b16 %v2927
  %v2993 = vunpack.c.l.b16 %v2928
  %v2994 = vunpack.c.h.b16 %v2928
  %v2995 = vunpack.c.l.b16 %v2929
  %v2996 = vunpack.c.h.b16 %v2929
  %v2997 = vunpack.c.l.b16 %v2930
  %v2998 = vunpack.c.h.b16 %v2930
  %v2999 = vunpack.c.l.b16 %v2931
  %v3000 = vunpack.c.h.b16 %v2931
  %v3001 = vunpack.c.l.b16 %v2932
  %v3002 = vunpack.c.h.b16 %v2932
  %v3003 = vunpack.c.l.b16 %v2933
  %v3004 = vunpack.c.h.b16 %v2933
  %v3005 = vunpack.c.l.b16 %v2934
  %v3006 = vunpack.c.h.b16 %v2934
  %v3007 = vunpack.c.l.b16 %v2935
  %v3008 = vunpack.c.h.b16 %v2935
  %v3009 = vunpack.c.l.b16 %v2936
  %v3010 = vunpack.c.h.b16 %v2936
  %v3011 = vunpack.c.l.b16 %v2937
  %v3012 = vunpack.c.h.b16 %v2937
  %v3013 = vunpack.c.l.b16 %v2938
  %v3014 = vunpack.c.h.b16 %v2938
  %v3015 = vunpack.c.l.b16 %v2939
  %v3016 = vunpack.c.h.b16 %v2939
  %v3017 = vunpack.c.l.b16 %v2940
  %v3018 = vunpack.c.h.b16 %v2940
  %v3019 = vunpack.c.l.b16 %v2941
  %v3020 = vunpack.c.h.b16 %v2941
  %v3021 = vunpack.c.l.b16 %v2942
  %v3022 = vunpack.c.h.b16 %v2942
  %v3023 = vunpack.c.l.b16 %v2943
  %v3024 = vunpack.c.h.b16 %v2943
  %v3025 = vunpack.c.l.b16 %v2944
  %v3026 = vunpack.c.h.b16 %v2944
  %v3027 = vunpack.c.l.b16 %v2945
  %v3028 = vunpack.c.h.b16 %v2945
  %v3029 = vunpack.c.l.b16 %v2946
  %v3030 = vunpack.c.h.b16 %v2946
  %v3031 = vunpack.c.l.b16 %v2947
  %v3032 = vunpack.c.h.b16 %v2947
  %v3033 = vunpack.c.l.b16 %v2948
  %v3034 = vunpack.c.h.b16 %v2948
  %v3035 = vunpack.c.l.b16 %v2949
  %v3036 = vunpack.c.h.b16 %v2949
  %v3037 = vunpack.c.l.b16 %v2950
  %v3038 = vunpack.c.h.b16 %v2950
  %v3039 = vunpack.c.l.b16 %v2951
  %v3040 = vunpack.c.h.b16 %v2951
  %v3041 = vunpack.c.l.b16 %v2952
  %v3042 = vunpack.c.h.b16 %v2952
  %v3043 = vunpack.c.l.b16 %v2953
  %v3044 = vunpack.c.h.b16 %v2953
  %v3045 = vunpack.c.l.b16 %v2954
  %v3046 = vunpack.c.h.b16 %v2954
  %v3047 = vunpack.c.l.b16 %v2955
  %v3048 = vunpack.c.h.b16 %v2955
  %v3049 = vunpack.c.l.b16 %v2956
  %v3050 = vunpack.c.h.b16 %v2956
  %v3051 = vunpack.c.l.b16 %v2957
  %v3052 = vunpack.c.h.b16 %v2957
  %v3053 = vunpack.c.l.b16 %v2958
  %v3054 = vunpack.c.h.b16 %v2958
  %v3055 = vpack.c.b16 %v2993, %v2991
  %v3056 = vpack.c.b16 %v2994, %v2992
  %v3057 = vpack.c.b16 %v2997, %v2995
  %v3058 = vpack.c.b16 %v2998, %v2996
  %v3059 = vpack.c.b16 %v3001, %v2999
  %v3060 = vpack.c.b16 %v3002, %v3000
  %v3061 = vpack.c.b16 %v3005, %v3003
  %v3062 = vpack.c.b16 %v3006, %v3004
  %v3063 = vpack.c.b16 %v3009, %v3007
  %v3064 = vpack.c.b16 %v3010, %v3008
  %v3065 = vpack.c.b16 %v3013, %v3011
  %v3066 = vpack.c.b16 %v3014, %v3012
  %v3067 = vpack.c.b16 %v3017, %v3015
  %v3068 = vpack.c.b16 %v3018, %v3016
  %v3069 = vpack.c.b16 %v3021, %v3019
  %v3070 = vpack.c.b16 %v3022, %v3020
  %v3071 = vpack.c.b16 %v3025, %v3023
  %v3072 = vpack.c.b16 %v3026, %v3024
  %v3073 = vpack.c.b16 %v3029, %v3027
  %v3074 = vpack.c.b16 %v3030, %v3028
  %v3075 = vpack.c.b16 %v3033, %v3031
  %v3076 = vpack.c.b16 %v3034, %v3032
  %v3077 = vpack.c.b16 %v3037, %v3035
  %v3078 = vpack.c.b16 %v3038, %v3036
  %v3079 = vpack.c.b16 %v3041, %v3039
  %v3080 = vpack.c.b16 %v3042, %v3040
  %v3081 = vpack.c.b16 %v3045, %v3043
  %v3082 = vpack.c.b16 %v3046, %v3044
  %v3083 = vpack.c.b16 %v3049, %v3047
  %v3084 = vpack.c.b16 %v3050, %v3048
  %v3085 = vpack.c.b16 %v3053, %v3051
  %v3086 = vpack.c.b16 %v3054, %v3052
  %3119 = vmatprep.subr.bf16.mxu0 %v3056
  %3120 = vmatpush1.bf16.msra.mxu0 %v3055
  %3121 = vmatprep.subr.bf16.mxu0 %v3058
  %3122 = vmatpush1.bf16.msra.mxu0 %v3057
  %3123 = vmatprep.subr.bf16.mxu0 %v3060
  %3124 = vmatpush1.bf16.msra.mxu0 %v3059
  %3125 = vmatprep.subr.bf16.mxu0 %v3062
  %3126 = vmatpush1.bf16.msra.mxu0 %v3061
  %3127 = vmatprep.subr.bf16.mxu0 %v3064
  %3128 = vmatpush1.bf16.msra.mxu0 %v3063
  %3129 = vmatprep.subr.bf16.mxu0 %v3066
  %3130 = vmatpush1.bf16.msra.mxu0 %v3065
  %3131 = vmatprep.subr.bf16.mxu0 %v3068
  %3132 = vmatpush1.bf16.msra.mxu0 %v3067
  %3133 = vmatprep.subr.bf16.mxu0 %v3070
  %3134 = vmatpush1.bf16.msra.mxu0 %v3069
  %3135 = vmatprep.subr.bf16.mxu0 %v3072
  %3136 = vmatpush1.bf16.msra.mxu0 %v3071
  %3137 = vmatprep.subr.bf16.mxu0 %v3074
  %3138 = vmatpush1.bf16.msra.mxu0 %v3073
  %3139 = vmatprep.subr.bf16.mxu0 %v3076
  %3140 = vmatpush1.bf16.msra.mxu0 %v3075
  %3141 = vmatprep.subr.bf16.mxu0 %v3078
  %3142 = vmatpush1.bf16.msra.mxu0 %v3077
  %3143 = vmatprep.subr.bf16.mxu0 %v3080
  %3144 = vmatpush1.bf16.msra.mxu0 %v3079
  %3145 = vmatprep.subr.bf16.mxu0 %v3082
  %3146 = vmatpush1.bf16.msra.mxu0 %v3081
  %3147 = vmatprep.subr.bf16.mxu0 %v3084
  %3148 = vmatpush1.bf16.msra.mxu0 %v3083
  %3149 = vmatprep.subr.bf16.mxu0 %v3086
  %3150 = vmatpush1.bf16.msra.mxu0 %v3085
  %3151 = vmatprep.mubr.bf16.mxu0 %v2926
  %3152 = vmatmul.mubr.bf16.gmra.mrb[0].mxu0 %v2925
  %v3153 = vpop.f32.mrb[0].mxu0
  %v3154 = vadd.f32 0.0, %v3153
  %v3155 = vpop.f32.mrb[0].mxu0
  %v3156 = vadd.f32 0.0, %v3155
  %v3157 = vpop.f32.mrb[0].mxu0
  %v3158 = vadd.f32 0.0, %v3157
  %v3159 = vpop.f32.mrb[0].mxu0
  %v3160 = vadd.f32 0.0, %v3159
  %3161 = vdwg.mxu0
  %v3162 = vpack.c.bf16 %v3158, %v3154
  %v3163 = vpack.c.bf16 %v3160, %v3156
  %v3164 = vshrl.u32 %v2903, 16
  %v3165 = vpack.i.b16 %v3164, %v3164
  %v3167 = vlaneseq
  %v3168 = vshrl.u32 %v3167, 7
  %v3169 = vsub.s32 0, %v3168
  %v3170 = vrot.slane %v3165, %v3169
  %v3171 = vshrl.u32 %v2904, 16
  %v3172 = vpack.i.b16 %v3171, %v3171
  %v3174 = vlaneseq
  %v3175 = vshrl.u32 %v3174, 7
  %v3176 = vsub.s32 0, %v3175
  %v3177 = vrot.slane %v3172, %v3176
  %v3178 = vadd.bf16 %v3162, %v3170
  %v3179 = vadd.bf16 %v3163, %v3177
  %vm3180 = vcmp.gt.bf16.partialorder %v3178, 0
  %vm3181 = vcmp.gt.bf16.partialorder %v3179, 0
  %v3182 = vmul.bf16 %v3178, 1009007652
  %v3183 = vmul.bf16 %v3179, 1009007652
  %v3184 = vsel %vm3180, %v3178, %v3182
  %v3185 = vsel %vm3181, %v3179, %v3183
  %s3186 = scalar_lea.vmem %s5, 256
  %v3187 = vld [vmem:[%s3186] sm:$0xff]
  %v3188 = vld [vmem:[%s3186 + $0x8] sm:$0xff]
  %v3189 = vld [vmem:[%s3186 + $0x10] sm:$0xff]
  %v3190 = vld [vmem:[%s3186 + $0x18] sm:$0xff]
  %v3191 = vld [vmem:[%s3186 + $0x20] sm:$0xff]
  %v3192 = vld [vmem:[%s3186 + $0x28] sm:$0xff]
  %v3193 = vld [vmem:[%s3186 + $0x30] sm:$0xff]
  %v3194 = vld [vmem:[%s3186 + $0x38] sm:$0xff]
  %v3195 = vld [vmem:[%s3186 + $0x40] sm:$0xff]
  %v3196 = vld [vmem:[%s3186 + $0x48] sm:$0xff]
  %v3197 = vld [vmem:[%s3186 + $0x50] sm:$0xff]
  %v3198 = vld [vmem:[%s3186 + $0x58] sm:$0xff]
  %v3199 = vld [vmem:[%s3186 + $0x60] sm:$0xff]
  %v3200 = vld [vmem:[%s3186 + $0x68] sm:$0xff]
  %v3201 = vld [vmem:[%s3186 + $0x70] sm:$0xff]
  %v3202 = vld [vmem:[%s3186 + $0x78] sm:$0xff]
  %v3203 = vld [vmem:[%s3186 + $0x80] sm:$0xff]
  %v3204 = vld [vmem:[%s3186 + $0x88] sm:$0xff]
  %v3205 = vld [vmem:[%s3186 + $0x90] sm:$0xff]
  %v3206 = vld [vmem:[%s3186 + $0x98] sm:$0xff]
  %v3207 = vld [vmem:[%s3186 + $0xa0] sm:$0xff]
  %v3208 = vld [vmem:[%s3186 + $0xa8] sm:$0xff]
  %v3209 = vld [vmem:[%s3186 + $0xb0] sm:$0xff]
  %v3210 = vld [vmem:[%s3186 + $0xb8] sm:$0xff]
  %v3211 = vld [vmem:[%s3186 + $0xc0] sm:$0xff]
  %v3212 = vld [vmem:[%s3186 + $0xc8] sm:$0xff]
  %v3213 = vld [vmem:[%s3186 + $0xd0] sm:$0xff]
  %v3214 = vld [vmem:[%s3186 + $0xd8] sm:$0xff]
  %v3215 = vld [vmem:[%s3186 + $0xe0] sm:$0xff]
  %v3216 = vld [vmem:[%s3186 + $0xe8] sm:$0xff]
  %v3217 = vld [vmem:[%s3186 + $0xf0] sm:$0xff]
  %v3218 = vld [vmem:[%s3186 + $0xf8] sm:$0xff]
  %v3251 = vunpack.c.l.b16 %v3187
  %v3252 = vunpack.c.h.b16 %v3187
  %v3253 = vunpack.c.l.b16 %v3188
  %v3254 = vunpack.c.h.b16 %v3188
  %v3255 = vunpack.c.l.b16 %v3189
  %v3256 = vunpack.c.h.b16 %v3189
  %v3257 = vunpack.c.l.b16 %v3190
  %v3258 = vunpack.c.h.b16 %v3190
  %v3259 = vunpack.c.l.b16 %v3191
  %v3260 = vunpack.c.h.b16 %v3191
  %v3261 = vunpack.c.l.b16 %v3192
  %v3262 = vunpack.c.h.b16 %v3192
  %v3263 = vunpack.c.l.b16 %v3193
  %v3264 = vunpack.c.h.b16 %v3193
  %v3265 = vunpack.c.l.b16 %v3194
  %v3266 = vunpack.c.h.b16 %v3194
  %v3267 = vunpack.c.l.b16 %v3195
  %v3268 = vunpack.c.h.b16 %v3195
  %v3269 = vunpack.c.l.b16 %v3196
  %v3270 = vunpack.c.h.b16 %v3196
  %v3271 = vunpack.c.l.b16 %v3197
  %v3272 = vunpack.c.h.b16 %v3197
  %v3273 = vunpack.c.l.b16 %v3198
  %v3274 = vunpack.c.h.b16 %v3198
  %v3275 = vunpack.c.l.b16 %v3199
  %v3276 = vunpack.c.h.b16 %v3199
  %v3277 = vunpack.c.l.b16 %v3200
  %v3278 = vunpack.c.h.b16 %v3200
  %v3279 = vunpack.c.l.b16 %v3201
  %v3280 = vunpack.c.h.b16 %v3201
  %v3281 = vunpack.c.l.b16 %v3202
  %v3282 = vunpack.c.h.b16 %v3202
  %v3283 = vunpack.c.l.b16 %v3203
  %v3284 = vunpack.c.h.b16 %v3203
  %v3285 = vunpack.c.l.b16 %v3204
  %v3286 = vunpack.c.h.b16 %v3204
  %v3287 = vunpack.c.l.b16 %v3205
  %v3288 = vunpack.c.h.b16 %v3205
  %v3289 = vunpack.c.l.b16 %v3206
  %v3290 = vunpack.c.h.b16 %v3206
  %v3291 = vunpack.c.l.b16 %v3207
  %v3292 = vunpack.c.h.b16 %v3207
  %v3293 = vunpack.c.l.b16 %v3208
  %v3294 = vunpack.c.h.b16 %v3208
  %v3295 = vunpack.c.l.b16 %v3209
  %v3296 = vunpack.c.h.b16 %v3209
  %v3297 = vunpack.c.l.b16 %v3210
  %v3298 = vunpack.c.h.b16 %v3210
  %v3299 = vunpack.c.l.b16 %v3211
  %v3300 = vunpack.c.h.b16 %v3211
  %v3301 = vunpack.c.l.b16 %v3212
  %v3302 = vunpack.c.h.b16 %v3212
  %v3303 = vunpack.c.l.b16 %v3213
  %v3304 = vunpack.c.h.b16 %v3213
  %v3305 = vunpack.c.l.b16 %v3214
  %v3306 = vunpack.c.h.b16 %v3214
  %v3307 = vunpack.c.l.b16 %v3215
  %v3308 = vunpack.c.h.b16 %v3215
  %v3309 = vunpack.c.l.b16 %v3216
  %v3310 = vunpack.c.h.b16 %v3216
  %v3311 = vunpack.c.l.b16 %v3217
  %v3312 = vunpack.c.h.b16 %v3217
  %v3313 = vunpack.c.l.b16 %v3218
  %v3314 = vunpack.c.h.b16 %v3218
  %v3315 = vpack.c.b16 %v3253, %v3251
  %v3316 = vpack.c.b16 %v3254, %v3252
  %v3317 = vpack.c.b16 %v3257, %v3255
  %v3318 = vpack.c.b16 %v3258, %v3256
  %v3319 = vpack.c.b16 %v3261, %v3259
  %v3320 = vpack.c.b16 %v3262, %v3260
  %v3321 = vpack.c.b16 %v3265, %v3263
  %v3322 = vpack.c.b16 %v3266, %v3264
  %v3323 = vpack.c.b16 %v3269, %v3267
  %v3324 = vpack.c.b16 %v3270, %v3268
  %v3325 = vpack.c.b16 %v3273, %v3271
  %v3326 = vpack.c.b16 %v3274, %v3272
  %v3327 = vpack.c.b16 %v3277, %v3275
  %v3328 = vpack.c.b16 %v3278, %v3276
  %v3329 = vpack.c.b16 %v3281, %v3279
  %v3330 = vpack.c.b16 %v3282, %v3280
  %v3331 = vpack.c.b16 %v3285, %v3283
  %v3332 = vpack.c.b16 %v3286, %v3284
  %v3333 = vpack.c.b16 %v3289, %v3287
  %v3334 = vpack.c.b16 %v3290, %v3288
  %v3335 = vpack.c.b16 %v3293, %v3291
  %v3336 = vpack.c.b16 %v3294, %v3292
  %v3337 = vpack.c.b16 %v3297, %v3295
  %v3338 = vpack.c.b16 %v3298, %v3296
  %v3339 = vpack.c.b16 %v3301, %v3299
  %v3340 = vpack.c.b16 %v3302, %v3300
  %v3341 = vpack.c.b16 %v3305, %v3303
  %v3342 = vpack.c.b16 %v3306, %v3304
  %v3343 = vpack.c.b16 %v3309, %v3307
  %v3344 = vpack.c.b16 %v3310, %v3308
  %v3345 = vpack.c.b16 %v3313, %v3311
  %v3346 = vpack.c.b16 %v3314, %v3312
  %3379 = vmatprep.subr.bf16.mxu0 %v3316
  %3380 = vmatpush1.bf16.msra.mxu0 %v3315
  %3381 = vmatprep.subr.bf16.mxu0 %v3318
  %3382 = vmatpush1.bf16.msra.mxu0 %v3317
  %3383 = vmatprep.subr.bf16.mxu0 %v3320
  %3384 = vmatpush1.bf16.msra.mxu0 %v3319
  %3385 = vmatprep.subr.bf16.mxu0 %v3322
  %3386 = vmatpush1.bf16.msra.mxu0 %v3321
  %3387 = vmatprep.subr.bf16.mxu0 %v3324
  %3388 = vmatpush1.bf16.msra.mxu0 %v3323
  %3389 = vmatprep.subr.bf16.mxu0 %v3326
  %3390 = vmatpush1.bf16.msra.mxu0 %v3325
  %3391 = vmatprep.subr.bf16.mxu0 %v3328
  %3392 = vmatpush1.bf16.msra.mxu0 %v3327
  %3393 = vmatprep.subr.bf16.mxu0 %v3330
  %3394 = vmatpush1.bf16.msra.mxu0 %v3329
  %3395 = vmatprep.subr.bf16.mxu0 %v3332
  %3396 = vmatpush1.bf16.msra.mxu0 %v3331
  %3397 = vmatprep.subr.bf16.mxu0 %v3334
  %3398 = vmatpush1.bf16.msra.mxu0 %v3333
  %3399 = vmatprep.subr.bf16.mxu0 %v3336
  %3400 = vmatpush1.bf16.msra.mxu0 %v3335
  %3401 = vmatprep.subr.bf16.mxu0 %v3338
  %3402 = vmatpush1.bf16.msra.mxu0 %v3337
  %3403 = vmatprep.subr.bf16.mxu0 %v3340
  %3404 = vmatpush1.bf16.msra.mxu0 %v3339
  %3405 = vmatprep.subr.bf16.mxu0 %v3342
  %3406 = vmatpush1.bf16.msra.mxu0 %v3341
  %3407 = vmatprep.subr.bf16.mxu0 %v3344
  %3408 = vmatpush1.bf16.msra.mxu0 %v3343
  %3409 = vmatprep.subr.bf16.mxu0 %v3346
  %3410 = vmatpush1.bf16.msra.mxu0 %v3345
  %3411 = vmatprep.mubr.bf16.mxu0 %v3185
  %3412 = vmatmul.mubr.bf16.gmra.mrb[0].mxu0 %v3184
  %v3413 = vpop.f32.mrb[0].mxu0
  %v3414 = vadd.f32 0.0, %v3413
  %v3415 = vpop.f32.mrb[0].mxu0
  %v3416 = vadd.f32 0.0, %v3415
  %v3417 = vpop.f32.mrb[0].mxu0
  %v3418 = vadd.f32 0.0, %v3417
  %v3419 = vpop.f32.mrb[0].mxu0
  %v3420 = vadd.f32 0.0, %v3419
  %3421 = vdwg.mxu0
  %v3422 = vpack.c.bf16 %v3418, %v3414
  %v3423 = vpack.c.bf16 %v3420, %v3416
  %v3424 = vld [vmem:[%s4] sm:$0x22]
  %v3426 = vunpack.c.l.b16 %v3424
  %v3427 = vunpack.c.h.b16 %v3424
  %v3428 = vpack.c.b16 %v3426, %v3426
  %v3429 = vpack.c.b16 %v3427, %v3427
  %v3431 = vpack.i.b16 %v3428, %v3428
  %v3433 = vlaneseq
  %v3434 = vshrl.u32 %v3433, 7
  %v3435 = vsub.s32 1, %v3434
  %v3436 = vrot.slane %v3431, %v3435
  %v3438 = vpack.i.b16 %v3429, %v3429
  %v3440 = vlaneseq
  %v3441 = vshrl.u32 %v3440, 7
  %v3442 = vsub.s32 1, %v3441
  %v3443 = vrot.slane %v3438, %v3442
  %v3444 = vadd.bf16 %v3422, %v3436
  %v3445 = vadd.bf16 %v3423, %v3443
  %vm3446 = vcmp.gt.bf16.partialorder %v3444, 0
  %vm3447 = vcmp.gt.bf16.partialorder %v3445, 0
  %v3448 = vmul.bf16 %v3444, 1009007652
  %v3449 = vmul.bf16 %v3445, 1009007652
  %v3450 = vsel %vm3446, %v3444, %v3448
  %v3451 = vsel %vm3447, %v3445, %v3449
  %s3452 = scalar_lea.vmem %s5, 512
  %v3453 = vld [vmem:[%s3452] sm:$0xff]
  %v3454 = vld [vmem:[%s3452 + $0x8] sm:$0xff]
  %v3455 = vld [vmem:[%s3452 + $0x10] sm:$0xff]
  %v3456 = vld [vmem:[%s3452 + $0x18] sm:$0xff]
  %v3457 = vld [vmem:[%s3452 + $0x20] sm:$0xff]
  %v3458 = vld [vmem:[%s3452 + $0x28] sm:$0xff]
  %v3459 = vld [vmem:[%s3452 + $0x30] sm:$0xff]
  %v3460 = vld [vmem:[%s3452 + $0x38] sm:$0xff]
  %v3461 = vld [vmem:[%s3452 + $0x40] sm:$0xff]
  %v3462 = vld [vmem:[%s3452 + $0x48] sm:$0xff]
  %v3463 = vld [vmem:[%s3452 + $0x50] sm:$0xff]
  %v3464 = vld [vmem:[%s3452 + $0x58] sm:$0xff]
  %v3465 = vld [vmem:[%s3452 + $0x60] sm:$0xff]
  %v3466 = vld [vmem:[%s3452 + $0x68] sm:$0xff]
  %v3467 = vld [vmem:[%s3452 + $0x70] sm:$0xff]
  %v3468 = vld [vmem:[%s3452 + $0x78] sm:$0xff]
  %v3469 = vld [vmem:[%s3452 + $0x80] sm:$0xff]
  %v3470 = vld [vmem:[%s3452 + $0x88] sm:$0xff]
  %v3471 = vld [vmem:[%s3452 + $0x90] sm:$0xff]
  %v3472 = vld [vmem:[%s3452 + $0x98] sm:$0xff]
  %v3473 = vld [vmem:[%s3452 + $0xa0] sm:$0xff]
  %v3474 = vld [vmem:[%s3452 + $0xa8] sm:$0xff]
  %v3475 = vld [vmem:[%s3452 + $0xb0] sm:$0xff]
  %v3476 = vld [vmem:[%s3452 + $0xb8] sm:$0xff]
  %v3477 = vld [vmem:[%s3452 + $0xc0] sm:$0xff]
  %v3478 = vld [vmem:[%s3452 + $0xc8] sm:$0xff]
  %v3479 = vld [vmem:[%s3452 + $0xd0] sm:$0xff]
  %v3480 = vld [vmem:[%s3452 + $0xd8] sm:$0xff]
  %v3481 = vld [vmem:[%s3452 + $0xe0] sm:$0xff]
  %v3482 = vld [vmem:[%s3452 + $0xe8] sm:$0xff]
  %v3483 = vld [vmem:[%s3452 + $0xf0] sm:$0xff]
  %v3484 = vld [vmem:[%s3452 + $0xf8] sm:$0xff]
  %v3517 = vunpack.c.l.b16 %v3453
  %v3518 = vunpack.c.h.b16 %v3453
  %v3519 = vunpack.c.l.b16 %v3454
  %v3520 = vunpack.c.h.b16 %v3454
  %v3521 = vunpack.c.l.b16 %v3455
  %v3522 = vunpack.c.h.b16 %v3455
  %v3523 = vunpack.c.l.b16 %v3456
  %v3524 = vunpack.c.h.b16 %v3456
  %v3525 = vunpack.c.l.b16 %v3457
  %v3526 = vunpack.c.h.b16 %v3457
  %v3527 = vunpack.c.l.b16 %v3458
  %v3528 = vunpack.c.h.b16 %v3458
  %v3529 = vunpack.c.l.b16 %v3459
  %v3530 = vunpack.c.h.b16 %v3459
  %v3531 = vunpack.c.l.b16 %v3460
  %v3532 = vunpack.c.h.b16 %v3460
  %v3533 = vunpack.c.l.b16 %v3461
  %v3534 = vunpack.c.h.b16 %v3461
  %v3535 = vunpack.c.l.b16 %v3462
  %v3536 = vunpack.c.h.b16 %v3462
  %v3537 = vunpack.c.l.b16 %v3463
  %v3538 = vunpack.c.h.b16 %v3463
  %v3539 = vunpack.c.l.b16 %v3464
  %v3540 = vunpack.c.h.b16 %v3464
  %v3541 = vunpack.c.l.b16 %v3465
  %v3542 = vunpack.c.h.b16 %v3465
  %v3543 = vunpack.c.l.b16 %v3466
  %v3544 = vunpack.c.h.b16 %v3466
  %v3545 = vunpack.c.l.b16 %v3467
  %v3546 = vunpack.c.h.b16 %v3467
  %v3547 = vunpack.c.l.b16 %v3468
  %v3548 = vunpack.c.h.b16 %v3468
  %v3549 = vunpack.c.l.b16 %v3469
  %v3550 = vunpack.c.h.b16 %v3469
  %v3551 = vunpack.c.l.b16 %v3470
  %v3552 = vunpack.c.h.b16 %v3470
  %v3553 = vunpack.c.l.b16 %v3471
  %v3554 = vunpack.c.h.b16 %v3471
  %v3555 = vunpack.c.l.b16 %v3472
  %v3556 = vunpack.c.h.b16 %v3472
  %v3557 = vunpack.c.l.b16 %v3473
  %v3558 = vunpack.c.h.b16 %v3473
  %v3559 = vunpack.c.l.b16 %v3474
  %v3560 = vunpack.c.h.b16 %v3474
  %v3561 = vunpack.c.l.b16 %v3475
  %v3562 = vunpack.c.h.b16 %v3475
  %v3563 = vunpack.c.l.b16 %v3476
  %v3564 = vunpack.c.h.b16 %v3476
  %v3565 = vunpack.c.l.b16 %v3477
  %v3566 = vunpack.c.h.b16 %v3477
  %v3567 = vunpack.c.l.b16 %v3478
  %v3568 = vunpack.c.h.b16 %v3478
  %v3569 = vunpack.c.l.b16 %v3479
  %v3570 = vunpack.c.h.b16 %v3479
  %v3571 = vunpack.c.l.b16 %v3480
  %v3572 = vunpack.c.h.b16 %v3480
  %v3573 = vunpack.c.l.b16 %v3481
  %v3574 = vunpack.c.h.b16 %v3481
  %v3575 = vunpack.c.l.b16 %v3482
  %v3576 = vunpack.c.h.b16 %v3482
  %v3577 = vunpack.c.l.b16 %v3483
  %v3578 = vunpack.c.h.b16 %v3483
  %v3579 = vunpack.c.l.b16 %v3484
  %v3580 = vunpack.c.h.b16 %v3484
  %v3581 = vpack.c.b16 %v3519, %v3517
  %v3582 = vpack.c.b16 %v3520, %v3518
  %v3583 = vpack.c.b16 %v3523, %v3521
  %v3584 = vpack.c.b16 %v3524, %v3522
  %v3585 = vpack.c.b16 %v3527, %v3525
  %v3586 = vpack.c.b16 %v3528, %v3526
  %v3587 = vpack.c.b16 %v3531, %v3529
  %v3588 = vpack.c.b16 %v3532, %v3530
  %v3589 = vpack.c.b16 %v3535, %v3533
  %v3590 = vpack.c.b16 %v3536, %v3534
  %v3591 = vpack.c.b16 %v3539, %v3537
  %v3592 = vpack.c.b16 %v3540, %v3538
  %v3593 = vpack.c.b16 %v3543, %v3541
  %v3594 = vpack.c.b16 %v3544, %v3542
  %v3595 = vpack.c.b16 %v3547, %v3545
  %v3596 = vpack.c.b16 %v3548, %v3546
  %v3597 = vpack.c.b16 %v3551, %v3549
  %v3598 = vpack.c.b16 %v3552, %v3550
  %v3599 = vpack.c.b16 %v3555, %v3553
  %v3600 = vpack.c.b16 %v3556, %v3554
  %v3601 = vpack.c.b16 %v3559, %v3557
  %v3602 = vpack.c.b16 %v3560, %v3558
  %v3603 = vpack.c.b16 %v3563, %v3561
  %v3604 = vpack.c.b16 %v3564, %v3562
  %v3605 = vpack.c.b16 %v3567, %v3565
  %v3606 = vpack.c.b16 %v3568, %v3566
  %v3607 = vpack.c.b16 %v3571, %v3569
  %v3608 = vpack.c.b16 %v3572, %v3570
  %v3609 = vpack.c.b16 %v3575, %v3573
  %v3610 = vpack.c.b16 %v3576, %v3574
  %v3611 = vpack.c.b16 %v3579, %v3577
  %v3612 = vpack.c.b16 %v3580, %v3578
  %3645 = vmatprep.subr.bf16.mxu0 %v3582
  %3646 = vmatpush1.bf16.msra.mxu0 %v3581
  %3647 = vmatprep.subr.bf16.mxu0 %v3584
  %3648 = vmatpush1.bf16.msra.mxu0 %v3583
  %3649 = vmatprep.subr.bf16.mxu0 %v3586
  %3650 = vmatpush1.bf16.msra.mxu0 %v3585
  %3651 = vmatprep.subr.bf16.mxu0 %v3588
  %3652 = vmatpush1.bf16.msra.mxu0 %v3587
  %3653 = vmatprep.subr.bf16.mxu0 %v3590
  %3654 = vmatpush1.bf16.msra.mxu0 %v3589
  %3655 = vmatprep.subr.bf16.mxu0 %v3592
  %3656 = vmatpush1.bf16.msra.mxu0 %v3591
  %3657 = vmatprep.subr.bf16.mxu0 %v3594
  %3658 = vmatpush1.bf16.msra.mxu0 %v3593
  %3659 = vmatprep.subr.bf16.mxu0 %v3596
  %3660 = vmatpush1.bf16.msra.mxu0 %v3595
  %3661 = vmatprep.subr.bf16.mxu0 %v3598
  %3662 = vmatpush1.bf16.msra.mxu0 %v3597
  %3663 = vmatprep.subr.bf16.mxu0 %v3600
  %3664 = vmatpush1.bf16.msra.mxu0 %v3599
  %3665 = vmatprep.subr.bf16.mxu0 %v3602
  %3666 = vmatpush1.bf16.msra.mxu0 %v3601
  %3667 = vmatprep.subr.bf16.mxu0 %v3604
  %3668 = vmatpush1.bf16.msra.mxu0 %v3603
  %3669 = vmatprep.subr.bf16.mxu0 %v3606
  %3670 = vmatpush1.bf16.msra.mxu0 %v3605
  %3671 = vmatprep.subr.bf16.mxu0 %v3608
  %3672 = vmatpush1.bf16.msra.mxu0 %v3607
  %3673 = vmatprep.subr.bf16.mxu0 %v3610
  %3674 = vmatpush1.bf16.msra.mxu0 %v3609
  %3675 = vmatprep.subr.bf16.mxu0 %v3612
  %3676 = vmatpush1.bf16.msra.mxu0 %v3611
  %3677 = vmatprep.mubr.bf16.mxu0 %v3451
  %3678 = vmatmul.mubr.bf16.gmra.mrb[0].mxu0 %v3450
  %v3679 = vpop.f32.mrb[0].mxu0
  %v3680 = vadd.f32 0.0, %v3679
  %v3681 = vpop.f32.mrb[0].mxu0
  %v3682 = vadd.f32 0.0, %v3681
  %v3683 = vpop.f32.mrb[0].mxu0
  %v3684 = vadd.f32 0.0, %v3683
  %v3685 = vpop.f32.mrb[0].mxu0
  %v3686 = vadd.f32 0.0, %v3685
  %3687 = vdwg.mxu0
  %v3688 = vpack.c.bf16 %v3684, %v3680
  %v3689 = vpack.c.bf16 %v3686, %v3682
  %v3690 = vshrl.u32 %v3428, 16
  %v3691 = vpack.i.b16 %v3690, %v3690
  %v3693 = vlaneseq
  %v3694 = vshrl.u32 %v3693, 7
  %v3695 = vsub.s32 1, %v3694
  %v3696 = vrot.slane %v3691, %v3695
  %v3697 = vshrl.u32 %v3429, 16
  %v3698 = vpack.i.b16 %v3697, %v3697
  %v3700 = vlaneseq
  %v3701 = vshrl.u32 %v3700, 7
  %v3702 = vsub.s32 1, %v3701
  %v3703 = vrot.slane %v3698, %v3702
  %v3704 = vadd.bf16 %v3688, %v3696
  %v3705 = vadd.bf16 %v3689, %v3703
  %vm3706 = vcmp.gt.bf16.partialorder %v3704, 0
  %vm3707 = vcmp.gt.bf16.partialorder %v3705, 0
  %v3708 = vmul.bf16 %v3704, 1009007652
  %v3709 = vmul.bf16 %v3705, 1009007652
  %v3710 = vsel %vm3706, %v3704, %v3708
  %v3711 = vsel %vm3707, %v3705, %v3709
  %s3712 = scalar_lea.vmem %s5, 768
  %v3713 = vld [vmem:[%s3712] sm:$0xff]
  %v3714 = vld [vmem:[%s3712 + $0x8] sm:$0xff]
  %v3715 = vld [vmem:[%s3712 + $0x10] sm:$0xff]
  %v3716 = vld [vmem:[%s3712 + $0x18] sm:$0xff]
  %v3717 = vld [vmem:[%s3712 + $0x20] sm:$0xff]
  %v3718 = vld [vmem:[%s3712 + $0x28] sm:$0xff]
  %v3719 = vld [vmem:[%s3712 + $0x30] sm:$0xff]
  %v3720 = vld [vmem:[%s3712 + $0x38] sm:$0xff]
  %v3721 = vld [vmem:[%s3712 + $0x40] sm:$0xff]
  %v3722 = vld [vmem:[%s3712 + $0x48] sm:$0xff]
  %v3723 = vld [vmem:[%s3712 + $0x50] sm:$0xff]
  %v3724 = vld [vmem:[%s3712 + $0x58] sm:$0xff]
  %v3725 = vld [vmem:[%s3712 + $0x60] sm:$0xff]
  %v3726 = vld [vmem:[%s3712 + $0x68] sm:$0xff]
  %v3727 = vld [vmem:[%s3712 + $0x70] sm:$0xff]
  %v3728 = vld [vmem:[%s3712 + $0x78] sm:$0xff]
  %v3729 = vld [vmem:[%s3712 + $0x80] sm:$0xff]
  %v3730 = vld [vmem:[%s3712 + $0x88] sm:$0xff]
  %v3731 = vld [vmem:[%s3712 + $0x90] sm:$0xff]
  %v3732 = vld [vmem:[%s3712 + $0x98] sm:$0xff]
  %v3733 = vld [vmem:[%s3712 + $0xa0] sm:$0xff]
  %v3734 = vld [vmem:[%s3712 + $0xa8] sm:$0xff]
  %v3735 = vld [vmem:[%s3712 + $0xb0] sm:$0xff]
  %v3736 = vld [vmem:[%s3712 + $0xb8] sm:$0xff]
  %v3737 = vld [vmem:[%s3712 + $0xc0] sm:$0xff]
  %v3738 = vld [vmem:[%s3712 + $0xc8] sm:$0xff]
  %v3739 = vld [vmem:[%s3712 + $0xd0] sm:$0xff]
  %v3740 = vld [vmem:[%s3712 + $0xd8] sm:$0xff]
  %v3741 = vld [vmem:[%s3712 + $0xe0] sm:$0xff]
  %v3742 = vld [vmem:[%s3712 + $0xe8] sm:$0xff]
  %v3743 = vld [vmem:[%s3712 + $0xf0] sm:$0xff]
  %v3744 = vld [vmem:[%s3712 + $0xf8] sm:$0xff]
  %v3777 = vunpack.c.l.b16 %v3713
  %v3778 = vunpack.c.h.b16 %v3713
  %v3779 = vunpack.c.l.b16 %v3714
  %v3780 = vunpack.c.h.b16 %v3714
  %v3781 = vunpack.c.l.b16 %v3715
  %v3782 = vunpack.c.h.b16 %v3715
  %v3783 = vunpack.c.l.b16 %v3716
  %v3784 = vunpack.c.h.b16 %v3716
  %v3785 = vunpack.c.l.b16 %v3717
  %v3786 = vunpack.c.h.b16 %v3717
  %v3787 = vunpack.c.l.b16 %v3718
  %v3788 = vunpack.c.h.b16 %v3718
  %v3789 = vunpack.c.l.b16 %v3719
  %v3790 = vunpack.c.h.b16 %v3719
  %v3791 = vunpack.c.l.b16 %v3720
  %v3792 = vunpack.c.h.b16 %v3720
  %v3793 = vunpack.c.l.b16 %v3721
  %v3794 = vunpack.c.h.b16 %v3721
  %v3795 = vunpack.c.l.b16 %v3722
  %v3796 = vunpack.c.h.b16 %v3722
  %v3797 = vunpack.c.l.b16 %v3723
  %v3798 = vunpack.c.h.b16 %v3723
  %v3799 = vunpack.c.l.b16 %v3724
  %v3800 = vunpack.c.h.b16 %v3724
  %v3801 = vunpack.c.l.b16 %v3725
  %v3802 = vunpack.c.h.b16 %v3725
  %v3803 = vunpack.c.l.b16 %v3726
  %v3804 = vunpack.c.h.b16 %v3726
  %v3805 = vunpack.c.l.b16 %v3727
  %v3806 = vunpack.c.h.b16 %v3727
  %v3807 = vunpack.c.l.b16 %v3728
  %v3808 = vunpack.c.h.b16 %v3728
  %v3809 = vunpack.c.l.b16 %v3729
  %v3810 = vunpack.c.h.b16 %v3729
  %v3811 = vunpack.c.l.b16 %v3730
  %v3812 = vunpack.c.h.b16 %v3730
  %v3813 = vunpack.c.l.b16 %v3731
  %v3814 = vunpack.c.h.b16 %v3731
  %v3815 = vunpack.c.l.b16 %v3732
  %v3816 = vunpack.c.h.b16 %v3732
  %v3817 = vunpack.c.l.b16 %v3733
  %v3818 = vunpack.c.h.b16 %v3733
  %v3819 = vunpack.c.l.b16 %v3734
  %v3820 = vunpack.c.h.b16 %v3734
  %v3821 = vunpack.c.l.b16 %v3735
  %v3822 = vunpack.c.h.b16 %v3735
  %v3823 = vunpack.c.l.b16 %v3736
  %v3824 = vunpack.c.h.b16 %v3736
  %v3825 = vunpack.c.l.b16 %v3737
  %v3826 = vunpack.c.h.b16 %v3737
  %v3827 = vunpack.c.l.b16 %v3738
  %v3828 = vunpack.c.h.b16 %v3738
  %v3829 = vunpack.c.l.b16 %v3739
  %v3830 = vunpack.c.h.b16 %v3739
  %v3831 = vunpack.c.l.b16 %v3740
  %v3832 = vunpack.c.h.b16 %v3740
  %v3833 = vunpack.c.l.b16 %v3741
  %v3834 = vunpack.c.h.b16 %v3741
  %v3835 = vunpack.c.l.b16 %v3742
  %v3836 = vunpack.c.h.b16 %v3742
  %v3837 = vunpack.c.l.b16 %v3743
  %v3838 = vunpack.c.h.b16 %v3743
  %v3839 = vunpack.c.l.b16 %v3744
  %v3840 = vunpack.c.h.b16 %v3744
  %v3841 = vpack.c.b16 %v3779, %v3777
  %v3842 = vpack.c.b16 %v3780, %v3778
  %v3843 = vpack.c.b16 %v3783, %v3781
  %v3844 = vpack.c.b16 %v3784, %v3782
  %v3845 = vpack.c.b16 %v3787, %v3785
  %v3846 = vpack.c.b16 %v3788, %v3786
  %v3847 = vpack.c.b16 %v3791, %v3789
  %v3848 = vpack.c.b16 %v3792, %v3790
  %v3849 = vpack.c.b16 %v3795, %v3793
  %v3850 = vpack.c.b16 %v3796, %v3794
  %v3851 = vpack.c.b16 %v3799, %v3797
  %v3852 = vpack.c.b16 %v3800, %v3798
  %v3853 = vpack.c.b16 %v3803, %v3801
  %v3854 = vpack.c.b16 %v3804, %v3802
  %v3855 = vpack.c.b16 %v3807, %v3805
  %v3856 = vpack.c.b16 %v3808, %v3806
  %v3857 = vpack.c.b16 %v3811, %v3809
  %v3858 = vpack.c.b16 %v3812, %v3810
  %v3859 = vpack.c.b16 %v3815, %v3813
  %v3860 = vpack.c.b16 %v3816, %v3814
  %v3861 = vpack.c.b16 %v3819, %v3817
  %v3862 = vpack.c.b16 %v3820, %v3818
  %v3863 = vpack.c.b16 %v3823, %v3821
  %v3864 = vpack.c.b16 %v3824, %v3822
  %v3865 = vpack.c.b16 %v3827, %v3825
  %v3866 = vpack.c.b16 %v3828, %v3826
  %v3867 = vpack.c.b16 %v3831, %v3829
  %v3868 = vpack.c.b16 %v3832, %v3830
  %v3869 = vpack.c.b16 %v3835, %v3833
  %v3870 = vpack.c.b16 %v3836, %v3834
  %v3871 = vpack.c.b16 %v3839, %v3837
  %v3872 = vpack.c.b16 %v3840, %v3838
  %3905 = vmatprep.subr.bf16.mxu0 %v3842
  %3906 = vmatpush1.bf16.msra.mxu0 %v3841
  %3907 = vmatprep.subr.bf16.mxu0 %v3844
  %3908 = vmatpush1.bf16.msra.mxu0 %v3843
  %3909 = vmatprep.subr.bf16.mxu0 %v3846
  %3910 = vmatpush1.bf16.msra.mxu0 %v3845
  %3911 = vmatprep.subr.bf16.mxu0 %v3848
  %3912 = vmatpush1.bf16.msra.mxu0 %v3847
  %3913 = vmatprep.subr.bf16.mxu0 %v3850
  %3914 = vmatpush1.bf16.msra.mxu0 %v3849
  %3915 = vmatprep.subr.bf16.mxu0 %v3852
  %3916 = vmatpush1.bf16.msra.mxu0 %v3851
  %3917 = vmatprep.subr.bf16.mxu0 %v3854
  %3918 = vmatpush1.bf16.msra.mxu0 %v3853
  %3919 = vmatprep.subr.bf16.mxu0 %v3856
  %3920 = vmatpush1.bf16.msra.mxu0 %v3855
  %3921 = vmatprep.subr.bf16.mxu0 %v3858
  %3922 = vmatpush1.bf16.msra.mxu0 %v3857
  %3923 = vmatprep.subr.bf16.mxu0 %v3860
  %3924 = vmatpush1.bf16.msra.mxu0 %v3859
  %3925 = vmatprep.subr.bf16.mxu0 %v3862
  %3926 = vmatpush1.bf16.msra.mxu0 %v3861
  %3927 = vmatprep.subr.bf16.mxu0 %v3864
  %3928 = vmatpush1.bf16.msra.mxu0 %v3863
  %3929 = vmatprep.subr.bf16.mxu0 %v3866
  %3930 = vmatpush1.bf16.msra.mxu0 %v3865
  %3931 = vmatprep.subr.bf16.mxu0 %v3868
  %3932 = vmatpush1.bf16.msra.mxu0 %v3867
  %3933 = vmatprep.subr.bf16.mxu0 %v3870
  %3934 = vmatpush1.bf16.msra.mxu0 %v3869
  %3935 = vmatprep.subr.bf16.mxu0 %v3872
  %3936 = vmatpush1.bf16.msra.mxu0 %v3871
  %3937 = vmatprep.mubr.bf16.mxu0 %v3711
  %3938 = vmatmul.mubr.bf16.gmra.mrb[0].mxu0 %v3710
  %v3939 = vpop.f32.mrb[0].mxu0
  %v3940 = vadd.f32 0.0, %v3939
  %v3941 = vpop.f32.mrb[0].mxu0
  %v3942 = vadd.f32 0.0, %v3941
  %v3943 = vpop.f32.mrb[0].mxu0
  %v3944 = vadd.f32 0.0, %v3943
  %v3945 = vpop.f32.mrb[0].mxu0
  %v3946 = vadd.f32 0.0, %v3945
  %3947 = vdwg.mxu0
  %v3948 = vpack.c.bf16 %v3944, %v3940
  %v3949 = vpack.c.bf16 %v3946, %v3942
  %v3950 = vld [vmem:[%s4] sm:$0x44]
  %v3952 = vunpack.c.l.b16 %v3950
  %v3953 = vunpack.c.h.b16 %v3950
  %v3954 = vpack.c.b16 %v3952, %v3952
  %v3955 = vpack.c.b16 %v3953, %v3953
  %v3957 = vpack.i.b16 %v3954, %v3954
  %v3959 = vlaneseq
  %v3960 = vshrl.u32 %v3959, 7
  %v3961 = vsub.s32 2, %v3960
  %v3962 = vrot.slane %v3957, %v3961
  %v3964 = vpack.i.b16 %v3955, %v3955
  %v3966 = vlaneseq
  %v3967 = vshrl.u32 %v3966, 7
  %v3968 = vsub.s32 2, %v3967
  %v3969 = vrot.slane %v3964, %v3968
  %v3970 = vadd.bf16 %v3948, %v3962
  %v3971 = vadd.bf16 %v3949, %v3969
  %vm3972 = vcmp.gt.bf16.partialorder %v3970, 0
  %vm3973 = vcmp.gt.bf16.partialorder %v3971, 0
  %v3974 = vmul.bf16 %v3970, 1009007652
  %v3975 = vmul.bf16 %v3971, 1009007652
  %v3976 = vsel %vm3972, %v3970, %v3974
  %v3977 = vsel %vm3973, %v3971, %v3975
  %v3978 = vld [vmem:[%s6] sm:$0xf]
  %v3979 = vld [vmem:[%s6 + $0x4] sm:$0xf]
  %v3980 = vld [vmem:[%s6 + $0x8] sm:$0xf]
  %v3981 = vld [vmem:[%s6 + $0xc] sm:$0xf]
  %v3982 = vld [vmem:[%s6 + $0x10] sm:$0xf]
  %v3983 = vld [vmem:[%s6 + $0x14] sm:$0xf]
  %v3984 = vld [vmem:[%s6 + $0x18] sm:$0xf]
  %v3985 = vld [vmem:[%s6 + $0x1c] sm:$0xf]
  %v3986 = vld [vmem:[%s6 + $0x20] sm:$0xf]
  %v3987 = vld [vmem:[%s6 + $0x24] sm:$0xf]
  %v3988 = vld [vmem:[%s6 + $0x28] sm:$0xf]
  %v3989 = vld [vmem:[%s6 + $0x2c] sm:$0xf]
  %v3990 = vld [vmem:[%s6 + $0x30] sm:$0xf]
  %v3991 = vld [vmem:[%s6 + $0x34] sm:$0xf]
  %v3992 = vld [vmem:[%s6 + $0x38] sm:$0xf]
  %v3993 = vld [vmem:[%s6 + $0x3c] sm:$0xf]
  %v3994 = vld [vmem:[%s6 + $0x40] sm:$0xf]
  %v3995 = vld [vmem:[%s6 + $0x44] sm:$0xf]
  %v3996 = vld [vmem:[%s6 + $0x48] sm:$0xf]
  %v3997 = vld [vmem:[%s6 + $0x4c] sm:$0xf]
  %v3998 = vld [vmem:[%s6 + $0x50] sm:$0xf]
  %v3999 = vld [vmem:[%s6 + $0x54] sm:$0xf]
  %v4000 = vld [vmem:[%s6 + $0x58] sm:$0xf]
  %v4001 = vld [vmem:[%s6 + $0x5c] sm:$0xf]
  %v4002 = vld [vmem:[%s6 + $0x60] sm:$0xf]
  %v4003 = vld [vmem:[%s6 + $0x64] sm:$0xf]
  %v4004 = vld [vmem:[%s6 + $0x68] sm:$0xf]
  %v4005 = vld [vmem:[%s6 + $0x6c] sm:$0xf]
  %v4006 = vld [vmem:[%s6 + $0x70] sm:$0xf]
  %v4007 = vld [vmem:[%s6 + $0x74] sm:$0xf]
  %v4008 = vld [vmem:[%s6 + $0x78] sm:$0xf]
  %v4009 = vld [vmem:[%s6 + $0x7c] sm:$0xf]
  %v4010 = vld [vmem:[%s7] sm:$0x1]
  %v4012 = vlaneseq
  %v4013 = vshrl.u32 %v4012, 7
  %v4014 = vsub.s32 0, %v4013
  %v4015 = vrot.slane %v4010, %v4014
  %v4049 = vunpack.c.l.b16 %v3978
  %v4050 = vunpack.c.l.b16 %v3979
  %v4051 = vunpack.c.l.b16 %v3980
  %v4052 = vunpack.c.l.b16 %v3981
  %v4053 = vunpack.c.l.b16 %v3982
  %v4054 = vunpack.c.l.b16 %v3983
  %v4055 = vunpack.c.l.b16 %v3984
  %v4056 = vunpack.c.l.b16 %v3985
  %v4057 = vunpack.c.l.b16 %v3986
  %v4058 = vunpack.c.l.b16 %v3987
  %v4059 = vunpack.c.l.b16 %v3988
  %v4060 = vunpack.c.l.b16 %v3989
  %v4061 = vunpack.c.l.b16 %v3990
  %v4062 = vunpack.c.l.b16 %v3991
  %v4063 = vunpack.c.l.b16 %v3992
  %v4064 = vunpack.c.l.b16 %v3993
  %v4065 = vunpack.c.l.b16 %v3994
  %v4066 = vunpack.c.l.b16 %v3995
  %v4067 = vunpack.c.l.b16 %v3996
  %v4068 = vunpack.c.l.b16 %v3997
  %v4069 = vunpack.c.l.b16 %v3998
  %v4070 = vunpack.c.l.b16 %v3999
  %v4071 = vunpack.c.l.b16 %v4000
  %v4072 = vunpack.c.l.b16 %v4001
  %v4073 = vunpack.c.l.b16 %v4002
  %v4074 = vunpack.c.l.b16 %v4003
  %v4075 = vunpack.c.l.b16 %v4004
  %v4076 = vunpack.c.l.b16 %v4005
  %v4077 = vunpack.c.l.b16 %v4006
  %v4078 = vunpack.c.l.b16 %v4007
  %v4079 = vunpack.c.l.b16 %v4008
  %v4080 = vunpack.c.l.b16 %v4009
  %v4081 = vpack.c.b16 %v4050, %v4049
  %v4082 = vpack.c.b16 %v4052, %v4051
  %v4083 = vpack.c.b16 %v4054, %v4053
  %v4084 = vpack.c.b16 %v4056, %v4055
  %v4085 = vpack.c.b16 %v4058, %v4057
  %v4086 = vpack.c.b16 %v4060, %v4059
  %v4087 = vpack.c.b16 %v4062, %v4061
  %v4088 = vpack.c.b16 %v4064, %v4063
  %v4089 = vpack.c.b16 %v4066, %v4065
  %v4090 = vpack.c.b16 %v4068, %v4067
  %v4091 = vpack.c.b16 %v4070, %v4069
  %v4092 = vpack.c.b16 %v4072, %v4071
  %v4093 = vpack.c.b16 %v4074, %v4073
  %v4094 = vpack.c.b16 %v4076, %v4075
  %v4095 = vpack.c.b16 %v4078, %v4077
  %v4096 = vpack.c.b16 %v4080, %v4079
  %4113 = vmatprep.subr.bf16.mxu0 0
  %4114 = vmatpush1.bf16.msra.mxu0 %v4081
  %4115 = vmatprep.subr.bf16.mxu0 0
  %4116 = vmatpush1.bf16.msra.mxu0 %v4082
  %4117 = vmatprep.subr.bf16.mxu0 0
  %4118 = vmatpush1.bf16.msra.mxu0 %v4083
  %4119 = vmatprep.subr.bf16.mxu0 0
  %4120 = vmatpush1.bf16.msra.mxu0 %v4084
  %4121 = vmatprep.subr.bf16.mxu0 0
  %4122 = vmatpush1.bf16.msra.mxu0 %v4085
  %4123 = vmatprep.subr.bf16.mxu0 0
  %4124 = vmatpush1.bf16.msra.mxu0 %v4086
  %4125 = vmatprep.subr.bf16.mxu0 0
  %4126 = vmatpush1.bf16.msra.mxu0 %v4087
  %4127 = vmatprep.subr.bf16.mxu0 0
  %4128 = vmatpush1.bf16.msra.mxu0 %v4088
  %4129 = vmatprep.subr.bf16.mxu0 0
  %4130 = vmatpush1.bf16.msra.mxu0 %v4089
  %4131 = vmatprep.subr.bf16.mxu0 0
  %4132 = vmatpush1.bf16.msra.mxu0 %v4090
  %4133 = vmatprep.subr.bf16.mxu0 0
  %4134 = vmatpush1.bf16.msra.mxu0 %v4091
  %4135 = vmatprep.subr.bf16.mxu0 0
  %4136 = vmatpush1.bf16.msra.mxu0 %v4092
  %4137 = vmatprep.subr.bf16.mxu0 0
  %4138 = vmatpush1.bf16.msra.mxu0 %v4093
  %4139 = vmatprep.subr.bf16.mxu0 0
  %4140 = vmatpush1.bf16.msra.mxu0 %v4094
  %4141 = vmatprep.subr.bf16.mxu0 0
  %4142 = vmatpush1.bf16.msra.mxu0 %v4095
  %4143 = vmatprep.subr.bf16.mxu0 0
  %4144 = vmatpush1.bf16.msra.mxu0 %v4096
  %4145 = vmatprep.mubr.bf16.mxu0 %v3977
  %4146 = vmatmul.mubr.bf16.gmra.mrb[0].mxu0 %v3976
  %v4147 = vpop.f32.mrb[0].mxu0
  %v4148 = vadd.f32 %v4015, %v4147
  %v4149 = vpop.f32.mrb[0].mxu0
  %v4150 = vpop.f32.mrb[0].mxu0
  %v4151 = vadd.f32 %v4015, %v4150
  %v4152 = vpop.f32.mrb[0].mxu0
  %4153 = vdwg.mxu0
  %v4154 = vtanh.pop %v4148
  %v4155 = vtanh.pop %v4151
  %v4156 = vmul.f32 %v4154, 0.2
  %v4157 = vmul.f32 %v4155, 0.2
  %v4158 = vpack.c.bf16 %v4157, %v4156
  %v4160 = vunpack.c.l.b16 %v4158
  %v4161 = vunpack.c.h.b16 %v4158
  %v4162 = vpack.c.b16 %v4160, %v4160
  %v4163 = vpack.c.b16 %v4161, %v4161
  %4166 = vst [vmem:[%s8] sm:$0xf] %v4162
  %4167 = vst [vmem:[%s8 + $0x4] sm:$0xf] %v4163
  // Predicated region
  $region34: #{bl_generator_attention_forward.1} parent=0 // pred_check
    _
  $region35: #{bl_generator_attention_forward.1} parent=0 // pred_check_branch
    %4169 = sbr.rel (0) target = $region37
  $region36: #{bl_generator_attention_forward.1} parent=0 // pred_region
    _
  $region37: #{bl_generator_attention_forward.1} parent=0 // pred_fallthru
    _
  // Predicated region
  $region38: #{bl_generator_attention_forward.1} parent=0 // pred_check
    _
  $region39: #{bl_generator_attention_forward.1} parent=0 // pred_check_branch
    %4171 = sbr.rel (0) target = $region41
  $region40: #{bl_generator_attention_forward.1} parent=0 // pred_region
    _
  $region41: #{bl_generator_attention_forward.1} parent=0 // pred_fallthru
    _

</llo_original>
